<compile_context>
chip_gen: v5e
topology: v5e:2x2
jax: 0.10.0
libtpu: 0.0.40
codegen_flags: <defaults>
</compile_context>

<pallas_src>
import functools

import jax
import jax.numpy as jnp
import numpy as np
from jax.experimental import pallas as pl
from jax.experimental.pallas import tpu as pltpu

INPUT_DIM = 30
HIDDEN_LSTM = 128
NUM_LAYERS = 2
HIDDEN_LINEAR = 84
OUTPUT_DIM = 63
OUTPUT_PAD = 128  # lane-dense padded output width (multiple of 128)


# ------------------------------ Fused kernel ----------------------------------
def _fused_kernel(x_ref,
                  wih0_ref, whh0_ref, b0_ref,
                  wih1_ref, whh1_ref, b1_ref,
                  w1_ref, bl1_ref, w2_ref, bl2_ref,
                  o_ref,
                  hseq_scr,
                  *, batch, seq_len):
    """Fused 2-layer LSTM + Linear(128,84) + Linear(84,63->padded 128).

    x_ref    : (T*B, D)         time-major flattened input (row = t*B + b)
    o_ref    : (T*B, OUTPUT_PAD) lane-dense padded output
    hseq_scr : (T*B, H)         hidden sequence, reused between layers (VMEM)
    """
    H = HIDDEN_LSTM
    B = batch
    T = seq_len

    def run_lstm_layer(x_flat, wih_t, whh_t, bias):
        # Hoisted input projection: one batched matmul outside the recurrence.
        gates_x = jnp.dot(x_flat, wih_t,
                          preferred_element_type=jnp.float32) + bias  # (T*B, 4H)
        h = jnp.zeros((B, H), jnp.float32)
        c = jnp.zeros((B, H), jnp.float32)
        # T is small & static: fully unrolled time loop, h/c carried as values.
        for t in range(T):
            g = gates_x[t * B:(t + 1) * B, :] + jnp.dot(
                h, whh_t, preferred_element_type=jnp.float32)  # (B, 4H)
            # PyTorch gate order: i, f, g, o
            i = jax.nn.sigmoid(g[:, 0 * H:1 * H])
            f = jax.nn.sigmoid(g[:, 1 * H:2 * H])
            gg = jnp.tanh(g[:, 2 * H:3 * H])
            o = jax.nn.sigmoid(g[:, 3 * H:4 * H])
            c = f * c + i * gg
            h = o * jnp.tanh(c)
            hseq_scr[t * B:(t + 1) * B, :] = h

    # Layer 0: consumes the raw input block.
    run_lstm_layer(x_ref[...], wih0_ref[...], whh0_ref[...], b0_ref[...])
    # Layer 1: consumes layer-0's hidden sequence straight from VMEM scratch.
    # (Full read happens before the loop overwrites the scratch in place.)
    run_lstm_layer(hseq_scr[...], wih1_ref[...], whh1_ref[...], b1_ref[...])
    # TODO(synk): nn.LSTM inter-layer dropout (p=0.2) is train-mode only;
    # inference semantics (no dropout) are implemented here.

    # Fused MLP head on the full (T*B, H) hidden sequence.
    hidden = jnp.dot(hseq_scr[...], w1_ref[...],
                     preferred_element_type=jnp.float32) + bl1_ref[...]
    o_ref[...] = jnp.dot(hidden, w2_ref[...],
                         preferred_element_type=jnp.float32) + bl2_ref[...]


# ------------------------- One-time parameter preprocessing -------------------
def prepare_params(params):
    """Transpose weights, fuse biases, and zero-pad the output head to 128 lanes.

    Done once, outside the per-call path (no per-call XLA transposes/reshapes).
    """
    l0, l1 = params["lstm"]
    w2p = jnp.zeros((HIDDEN_LINEAR, OUTPUT_PAD), jnp.float32)
    w2p = w2p.at[:, :OUTPUT_DIM].set(params["w2"].T)
    b2p = jnp.zeros((1, OUTPUT_PAD), jnp.float32)
    b2p = b2p.at[:, :OUTPUT_DIM].set(params["b2"])
    return {
        "wih0": l0["w_ih"].T,                                      # (D, 4H)
        "whh0": l0["w_hh"].T,                                      # (H, 4H)
        "b0": (l0["b_ih"] + l0["b_hh"]).reshape(1, 4 * HIDDEN_LSTM),
        "wih1": l1["w_ih"].T,                                      # (H, 4H)
        "whh1": l1["w_hh"].T,                                      # (H, 4H)
        "b1": (l1["b_ih"] + l1["b_hh"]).reshape(1, 4 * HIDDEN_LSTM),
        "w1": params["w1"].T,                                      # (H, 84)
        "bl1": params["b1"].reshape(1, HIDDEN_LINEAR),
        "w2": w2p,                                                 # (84, 128)
        "bl2": b2p,                                                # (1, 128)
    }


# -------------------------------- Full forward --------------------------------
@jax.jit
def hand_lstm_forward(x, prepped):
    """x: (B, T, INPUT_DIM) batch_first.  Returns (B, T, OUTPUT_DIM)."""
    B, T, D = x.shape
    # Flatten time-major once (tiny; fused by XLA around the single kernel).
    x_tm = jnp.transpose(x, (1, 0, 2)).reshape(T * B, D)

    kernel = functools.partial(_fused_kernel, batch=B, seq_len=T)
    out = pl.pallas_call(
        kernel,
        out_shape=jax.ShapeDtypeStruct((T * B, OUTPUT_PAD), jnp.float32),
        scratch_shapes=[
            pltpu.VMEM((T * B, HIDDEN_LSTM), jnp.float32),  # hidden sequence
        ],
    )(x_tm,
      prepped["wih0"], prepped["whh0"], prepped["b0"],
      prepped["wih1"], prepped["whh1"], prepped["b1"],
      prepped["w1"], prepped["bl1"], prepped["w2"], prepped["bl2"])

    out = out.reshape(T, B, OUTPUT_PAD).transpose(1, 0, 2)
    return out[:, :, :OUTPUT_DIM]


# -------------------------- Deterministic parameter init ----------------------
def init_params(key):
    params = {"lstm": []}
    k_lstm = 1.0 / np.sqrt(HIDDEN_LSTM)
    for layer in range(NUM_LAYERS):
        d_in = INPUT_DIM if layer == 0 else HIDDEN_LSTM
        key, k1, k2, k3, k4 = jax.random.split(key, 5)
        params["lstm"].append({
            "w_ih": jax.random.uniform(k1, (4 * HIDDEN_LSTM, d_in),
                                       jnp.float32, -k_lstm, k_lstm),
            "w_hh": jax.random.uniform(k2, (4 * HIDDEN_LSTM, HIDDEN_LSTM),
                                       jnp.float32, -k_lstm, k_lstm),
            "b_ih": jax.random.uniform(k3, (4 * HIDDEN_LSTM,),
                                       jnp.float32, -k_lstm, k_lstm),
            "b_hh": jax.random.uniform(k4, (4 * HIDDEN_LSTM,),
                                       jnp.float32, -k_lstm, k_lstm),
        })
    k1 = 1.0 / np.sqrt(HIDDEN_LSTM)
    k2 = 1.0 / np.sqrt(HIDDEN_LINEAR)
    key, a, b, c, d = jax.random.split(key, 5)
    params["w1"] = jax.random.uniform(a, (HIDDEN_LINEAR, HIDDEN_LSTM),
                                      jnp.float32, -k1, k1)
    params["b1"] = jax.random.uniform(b, (HIDDEN_LINEAR,), jnp.float32, -k1, k1)
    params["w2"] = jax.random.uniform(c, (OUTPUT_DIM, HIDDEN_LINEAR),
                                      jnp.float32, -k2, k2)
    params["b2"] = jax.random.uniform(d, (OUTPUT_DIM,), jnp.float32, -k2, k2)
    return params


# ------------------------------ Pure-JAX reference -----------------------------
def hand_lstm_reference(x, params):
    B, T, _ = x.shape
    h_seq = x
    for layer in range(NUM_LAYERS):
        p = params["lstm"][layer]
        h = jnp.zeros((B, HIDDEN_LSTM), jnp.float32)
        c = jnp.zeros((B, HIDDEN_LSTM), jnp.float32)
        outs = []
        for t in range(T):
            gates = (h_seq[:, t] @ p["w_ih"].T + h @ p["w_hh"].T
                     + p["b_ih"] + p["b_hh"])
            i, f, g, o = jnp.split(gates, 4, axis=-1)
            c = jax.nn.sigmoid(f) * c + jax.nn.sigmoid(i) * jnp.tanh(g)
            h = jax.nn.sigmoid(o) * jnp.tanh(c)
            outs.append(h)
        h_seq = jnp.stack(outs, axis=1)
    y = h_seq @ params["w1"].T + params["b1"]
    return y @ params["w2"].T + params["b2"]


if __name__ == "__main__":
    key = jax.random.PRNGKey(0)
    key, pkey, xkey = jax.random.split(key, 3)
    params = init_params(pkey)
    prepped = prepare_params(params)

    B, T = 2, 8
    x = jax.random.normal(xkey, (B, T, INPUT_DIM), jnp.float32)

    out = hand_lstm_forward(x, prepped)
    out = jax.block_until_ready(out)

    ref = hand_lstm_reference(x, params)
    np.testing.assert_allclose(np.asarray(out), np.asarray(ref),
                               rtol=1e-4, atol=1e-4)
    assert out.shape == (B, T, OUTPUT_DIM)
    print("KERNEL_OK")
</pallas_src>

<mosaic_0001>
module attributes {stable_mosaic.version = 11 : i64} {
  func.func @_fused_kernel(%arg0: memref<16x30xf32, #tpu.memory_space<vmem>>, %arg1: memref<30x512xf32, #tpu.memory_space<vmem>>, %arg2: memref<128x512xf32, #tpu.memory_space<vmem>>, %arg3: memref<1x512xf32, #tpu.memory_space<vmem>>, %arg4: memref<128x512xf32, #tpu.memory_space<vmem>>, %arg5: memref<128x512xf32, #tpu.memory_space<vmem>>, %arg6: memref<1x512xf32, #tpu.memory_space<vmem>>, %arg7: memref<128x84xf32, #tpu.memory_space<vmem>>, %arg8: memref<1x84xf32, #tpu.memory_space<vmem>>, %arg9: memref<84x128xf32, #tpu.memory_space<vmem>>, %arg10: memref<1x128xf32, #tpu.memory_space<vmem>>, %arg11: memref<16x128xf32, #tpu.memory_space<vmem>>, %arg12: memref<16x128xf32, #tpu.memory_space<vmem>>) attributes {dimension_semantics = [], scalar_prefetch = 0 : i64, scratch_operands = 1 : i64, tpu.core_type = #tpu.core_type<tc>} {
    %c0 = arith.constant 0 : index
    %c0_0 = arith.constant 0 : index
    %0 = vector.load %arg0[%c0, %c0_0] : memref<16x30xf32, #tpu.memory_space<vmem>>, vector<16x30xf32>
    %c0_1 = arith.constant 0 : index
    %c0_2 = arith.constant 0 : index
    %1 = vector.load %arg1[%c0_1, %c0_2] : memref<30x512xf32, #tpu.memory_space<vmem>>, vector<30x512xf32>
    %c0_3 = arith.constant 0 : index
    %c0_4 = arith.constant 0 : index
    %2 = vector.load %arg2[%c0_3, %c0_4] : memref<128x512xf32, #tpu.memory_space<vmem>>, vector<128x512xf32>
    %c0_5 = arith.constant 0 : index
    %c0_6 = arith.constant 0 : index
    %3 = vector.load %arg3[%c0_5, %c0_6] : memref<1x512xf32, #tpu.memory_space<vmem>>, vector<1x512xf32>
    %cst = arith.constant dense<0.000000e+00> : vector<16x512xf32>
    %4 = tpu.matmul %0, %1, %cst {dimension_numbers = #tpu.dot_dimension_numbers<[1], [0], [0], [1], [0, 0, 1, 1], [], []>} : vector<16x30xf32>, vector<30x512xf32>, vector<16x512xf32> -> vector<16x512xf32>
    %5 = vector.broadcast %3 : vector<1x512xf32> to vector<16x512xf32>
    %6 = arith.addf %4, %5 : vector<16x512xf32>
    %cst_7 = arith.constant 0.000000e+00 : f32
    %7 = vector.broadcast %cst_7 : f32 to vector<2x128xf32>
    %cst_8 = arith.constant 0.000000e+00 : f32
    %8 = vector.broadcast %cst_8 : f32 to vector<2x128xf32>
    %9 = vector.extract_strided_slice %6 {offsets = [0, 0], sizes = [2, 512], strides = [1, 1]} : vector<16x512xf32> to vector<2x512xf32>
    %cst_9 = arith.constant dense<0.000000e+00> : vector<2x512xf32>
    %10 = tpu.matmul %7, %2, %cst_9 {dimension_numbers = #tpu.dot_dimension_numbers<[1], [0], [0], [1], [0, 0, 1, 1], [], []>} : vector<2x128xf32>, vector<128x512xf32>, vector<2x512xf32> -> vector<2x512xf32>
    %11 = arith.addf %9, %10 : vector<2x512xf32>
    %12 = vector.extract_strided_slice %11 {offsets = [0, 0], sizes = [2, 128], strides = [1, 1]} : vector<2x512xf32> to vector<2x128xf32>
    %13 = arith.negf %12 : vector<2x128xf32>
    %14 = math.exp %13 : vector<2x128xf32>
    %cst_10 = arith.constant 1.000000e+00 : f32
    %15 = vector.broadcast %cst_10 : f32 to vector<2x128xf32>
    %16 = arith.addf %15, %14 : vector<2x128xf32>
    %17 = arith.divf %15, %16 : vector<2x128xf32>
    %18 = vector.extract_strided_slice %11 {offsets = [0, 128], sizes = [2, 128], strides = [1, 1]} : vector<2x512xf32> to vector<2x128xf32>
    %19 = arith.negf %18 : vector<2x128xf32>
    %20 = math.exp %19 : vector<2x128xf32>
    %cst_11 = arith.constant 1.000000e+00 : f32
    %21 = vector.broadcast %cst_11 : f32 to vector<2x128xf32>
    %22 = arith.addf %21, %20 : vector<2x128xf32>
    %23 = arith.divf %21, %22 : vector<2x128xf32>
    %24 = vector.extract_strided_slice %11 {offsets = [0, 256], sizes = [2, 128], strides = [1, 1]} : vector<2x512xf32> to vector<2x128xf32>
    %25 = math.tanh %24 : vector<2x128xf32>
    %26 = vector.extract_strided_slice %11 {offsets = [0, 384], sizes = [2, 128], strides = [1, 1]} : vector<2x512xf32> to vector<2x128xf32>
    %27 = arith.negf %26 : vector<2x128xf32>
    %28 = math.exp %27 : vector<2x128xf32>
    %cst_12 = arith.constant 1.000000e+00 : f32
    %29 = vector.broadcast %cst_12 : f32 to vector<2x128xf32>
    %30 = arith.addf %29, %28 : vector<2x128xf32>
    %31 = arith.divf %29, %30 : vector<2x128xf32>
    %32 = arith.mulf %23, %8 : vector<2x128xf32>
    %33 = arith.mulf %17, %25 : vector<2x128xf32>
    %34 = arith.addf %32, %33 : vector<2x128xf32>
    %35 = math.tanh %34 : vector<2x128xf32>
    %36 = arith.mulf %31, %35 : vector<2x128xf32>
    %c0_13 = arith.constant 0 : index
    %c0_14 = arith.constant 0 : index
    %37 = vector.load %arg12[%c0_13, %c0_14] : memref<16x128xf32, #tpu.memory_space<vmem>>, vector<2x128xf32>
    tpu.vector_store %arg12[%c0_13, %c0_14], %36 {strides = array<i32>} : memref<16x128xf32, #tpu.memory_space<vmem>>, vector<2x128xf32>,
    %38 = vector.extract_strided_slice %6 {offsets = [2, 0], sizes = [2, 512], strides = [1, 1]} : vector<16x512xf32> to vector<2x512xf32>
    %cst_15 = arith.constant dense<0.000000e+00> : vector<2x512xf32>
    %39 = tpu.matmul %36, %2, %cst_15 {dimension_numbers = #tpu.dot_dimension_numbers<[1], [0], [0], [1], [0, 0, 1, 1], [], []>} : vector<2x128xf32>, vector<128x512xf32>, vector<2x512xf32> -> vector<2x512xf32>
    %40 = arith.addf %38, %39 : vector<2x512xf32>
    %41 = vector.extract_strided_slice %40 {offsets = [0, 0], sizes = [2, 128], strides = [1, 1]} : vector<2x512xf32> to vector<2x128xf32>
    %42 = arith.negf %41 : vector<2x128xf32>
    %43 = math.exp %42 : vector<2x128xf32>
    %cst_16 = arith.constant 1.000000e+00 : f32
    %44 = vector.broadcast %cst_16 : f32 to vector<2x128xf32>
    %45 = arith.addf %44, %43 : vector<2x128xf32>
    %46 = arith.divf %44, %45 : vector<2x128xf32>
    %47 = vector.extract_strided_slice %40 {offsets = [0, 128], sizes = [2, 128], strides = [1, 1]} : vector<2x512xf32> to vector<2x128xf32>
    %48 = arith.negf %47 : vector<2x128xf32>
    %49 = math.exp %48 : vector<2x128xf32>
    %cst_17 = arith.constant 1.000000e+00 : f32
    %50 = vector.broadcast %cst_17 : f32 to vector<2x128xf32>
    %51 = arith.addf %50, %49 : vector<2x128xf32>
    %52 = arith.divf %50, %51 : vector<2x128xf32>
    %53 = vector.extract_strided_slice %40 {offsets = [0, 256], sizes = [2, 128], strides = [1, 1]} : vector<2x512xf32> to vector<2x128xf32>
    %54 = math.tanh %53 : vector<2x128xf32>
    %55 = vector.extract_strided_slice %40 {offsets = [0, 384], sizes = [2, 128], strides = [1, 1]} : vector<2x512xf32> to vector<2x128xf32>
    %56 = arith.negf %55 : vector<2x128xf32>
    %57 = math.exp %56 : vector<2x128xf32>
    %cst_18 = arith.constant 1.000000e+00 : f32
    %58 = vector.broadcast %cst_18 : f32 to vector<2x128xf32>
    %59 = arith.addf %58, %57 : vector<2x128xf32>
    %60 = arith.divf %58, %59 : vector<2x128xf32>
    %61 = arith.mulf %52, %34 : vector<2x128xf32>
    %62 = arith.mulf %46, %54 : vector<2x128xf32>
    %63 = arith.addf %61, %62 : vector<2x128xf32>
    %64 = math.tanh %63 : vector<2x128xf32>
    %65 = arith.mulf %60, %64 : vector<2x128xf32>
    %c2 = arith.constant 2 : index
    %c0_19 = arith.constant 0 : index
    %66 = vector.load %arg12[%c2, %c0_19] : memref<16x128xf32, #tpu.memory_space<vmem>>, vector<2x128xf32>
    tpu.vector_store %arg12[%c2, %c0_19], %65 {strides = array<i32>} : memref<16x128xf32, #tpu.memory_space<vmem>>, vector<2x128xf32>,
    %67 = vector.extract_strided_slice %6 {offsets = [4, 0], sizes = [2, 512], strides = [1, 1]} : vector<16x512xf32> to vector<2x512xf32>
    %cst_20 = arith.constant dense<0.000000e+00> : vector<2x512xf32>
    %68 = tpu.matmul %65, %2, %cst_20 {dimension_numbers = #tpu.dot_dimension_numbers<[1], [0], [0], [1], [0, 0, 1, 1], [], []>} : vector<2x128xf32>, vector<128x512xf32>, vector<2x512xf32> -> vector<2x512xf32>
    %69 = arith.addf %67, %68 : vector<2x512xf32>
    %70 = vector.extract_strided_slice %69 {offsets = [0, 0], sizes = [2, 128], strides = [1, 1]} : vector<2x512xf32> to vector<2x128xf32>
    %71 = arith.negf %70 : vector<2x128xf32>
    %72 = math.exp %71 : vector<2x128xf32>
    %cst_21 = arith.constant 1.000000e+00 : f32
    %73 = vector.broadcast %cst_21 : f32 to vector<2x128xf32>
    %74 = arith.addf %73, %72 : vector<2x128xf32>
    %75 = arith.divf %73, %74 : vector<2x128xf32>
    %76 = vector.extract_strided_slice %69 {offsets = [0, 128], sizes = [2, 128], strides = [1, 1]} : vector<2x512xf32> to vector<2x128xf32>
    %77 = arith.negf %76 : vector<2x128xf32>
    %78 = math.exp %77 : vector<2x128xf32>
    %cst_22 = arith.constant 1.000000e+00 : f32
    %79 = vector.broadcast %cst_22 : f32 to vector<2x128xf32>
    %80 = arith.addf %79, %78 : vector<2x128xf32>
    %81 = arith.divf %79, %80 : vector<2x128xf32>
    %82 = vector.extract_strided_slice %69 {offsets = [0, 256], sizes = [2, 128], strides = [1, 1]} : vector<2x512xf32> to vector<2x128xf32>
    %83 = math.tanh %82 : vector<2x128xf32>
    %84 = vector.extract_strided_slice %69 {offsets = [0, 384], sizes = [2, 128], strides = [1, 1]} : vector<2x512xf32> to vector<2x128xf32>
    %85 = arith.negf %84 : vector<2x128xf32>
    %86 = math.exp %85 : vector<2x128xf32>
    %cst_23 = arith.constant 1.000000e+00 : f32
    %87 = vector.broadcast %cst_23 : f32 to vector<2x128xf32>
    %88 = arith.addf %87, %86 : vector<2x128xf32>
    %89 = arith.divf %87, %88 : vector<2x128xf32>
    %90 = arith.mulf %81, %63 : vector<2x128xf32>
    %91 = arith.mulf %75, %83 : vector<2x128xf32>
    %92 = arith.addf %90, %91 : vector<2x128xf32>
    %93 = math.tanh %92 : vector<2x128xf32>
    %94 = arith.mulf %89, %93 : vector<2x128xf32>
    %c4 = arith.constant 4 : index
    %c0_24 = arith.constant 0 : index
    %95 = vector.load %arg12[%c4, %c0_24] : memref<16x128xf32, #tpu.memory_space<vmem>>, vector<2x128xf32>
    tpu.vector_store %arg12[%c4, %c0_24], %94 {strides = array<i32>} : memref<16x128xf32, #tpu.memory_space<vmem>>, vector<2x128xf32>,
    %96 = vector.extract_strided_slice %6 {offsets = [6, 0], sizes = [2, 512], strides = [1, 1]} : vector<16x512xf32> to vector<2x512xf32>
    %cst_25 = arith.constant dense<0.000000e+00> : vector<2x512xf32>
    %97 = tpu.matmul %94, %2, %cst_25 {dimension_numbers = #tpu.dot_dimension_numbers<[1], [0], [0], [1], [0, 0, 1, 1], [], []>} : vector<2x128xf32>, vector<128x512xf32>, vector<2x512xf32> -> vector<2x512xf32>
    %98 = arith.addf %96, %97 : vector<2x512xf32>
    %99 = vector.extract_strided_slice %98 {offsets = [0, 0], sizes = [2, 128], strides = [1, 1]} : vector<2x512xf32> to vector<2x128xf32>
    %100 = arith.negf %99 : vector<2x128xf32>
    %101 = math.exp %100 : vector<2x128xf32>
    %cst_26 = arith.constant 1.000000e+00 : f32
    %102 = vector.broadcast %cst_26 : f32 to vector<2x128xf32>
    %103 = arith.addf %102, %101 : vector<2x128xf32>
    %104 = arith.divf %102, %103 : vector<2x128xf32>
    %105 = vector.extract_strided_slice %98 {offsets = [0, 128], sizes = [2, 128], strides = [1, 1]} : vector<2x512xf32> to vector<2x128xf32>
    %106 = arith.negf %105 : vector<2x128xf32>
    %107 = math.exp %106 : vector<2x128xf32>
    %cst_27 = arith.constant 1.000000e+00 : f32
    %108 = vector.broadcast %cst_27 : f32 to vector<2x128xf32>
    %109 = arith.addf %108, %107 : vector<2x128xf32>
    %110 = arith.divf %108, %109 : vector<2x128xf32>
    %111 = vector.extract_strided_slice %98 {offsets = [0, 256], sizes = [2, 128], strides = [1, 1]} : vector<2x512xf32> to vector<2x128xf32>
    %112 = math.tanh %111 : vector<2x128xf32>
    %113 = vector.extract_strided_slice %98 {offsets = [0, 384], sizes = [2, 128], strides = [1, 1]} : vector<2x512xf32> to vector<2x128xf32>
    %114 = arith.negf %113 : vector<2x128xf32>
    %115 = math.exp %114 : vector<2x128xf32>
    %cst_28 = arith.constant 1.000000e+00 : f32
    %116 = vector.broadcast %cst_28 : f32 to vector<2x128xf32>
    %117 = arith.addf %116, %115 : vector<2x128xf32>
    %118 = arith.divf %116, %117 : vector<2x128xf32>
    %119 = arith.mulf %110, %92 : vector<2x128xf32>
    %120 = arith.mulf %104, %112 : vector<2x128xf32>
    %121 = arith.addf %119, %120 : vector<2x128xf32>
    %122 = math.tanh %121 : vector<2x128xf32>
    %123 = arith.mulf %118, %122 : vector<2x128xf32>
    %c6 = arith.constant 6 : index
    %c0_29 = arith.constant 0 : index
    %124 = vector.load %arg12[%c6, %c0_29] : memref<16x128xf32, #tpu.memory_space<vmem>>, vector<2x128xf32>
    tpu.vector_store %arg12[%c6, %c0_29], %123 {strides = array<i32>} : memref<16x128xf32, #tpu.memory_space<vmem>>, vector<2x128xf32>,
    %125 = vector.extract_strided_slice %6 {offsets = [8, 0], sizes = [2, 512], strides = [1, 1]} : vector<16x512xf32> to vector<2x512xf32>
    %cst_30 = arith.constant dense<0.000000e+00> : vector<2x512xf32>
    %126 = tpu.matmul %123, %2, %cst_30 {dimension_numbers = #tpu.dot_dimension_numbers<[1], [0], [0], [1], [0, 0, 1, 1], [], []>} : vector<2x128xf32>, vector<128x512xf32>, vector<2x512xf32> -> vector<2x512xf32>
    %127 = arith.addf %125, %126 : vector<2x512xf32>
    %128 = vector.extract_strided_slice %127 {offsets = [0, 0], sizes = [2, 128], strides = [1, 1]} : vector<2x512xf32> to vector<2x128xf32>
    %129 = arith.negf %128 : vector<2x128xf32>
    %130 = math.exp %129 : vector<2x128xf32>
    %cst_31 = arith.constant 1.000000e+00 : f32
    %131 = vector.broadcast %cst_31 : f32 to vector<2x128xf32>
    %132 = arith.addf %131, %130 : vector<2x128xf32>
    %133 = arith.divf %131, %132 : vector<2x128xf32>
    %134 = vector.extract_strided_slice %127 {offsets = [0, 128], sizes = [2, 128], strides = [1, 1]} : vector<2x512xf32> to vector<2x128xf32>
    %135 = arith.negf %134 : vector<2x128xf32>
    %136 = math.exp %135 : vector<2x128xf32>
    %cst_32 = arith.constant 1.000000e+00 : f32
    %137 = vector.broadcast %cst_32 : f32 to vector<2x128xf32>
    %138 = arith.addf %137, %136 : vector<2x128xf32>
    %139 = arith.divf %137, %138 : vector<2x128xf32>
    %140 = vector.extract_strided_slice %127 {offsets = [0, 256], sizes = [2, 128], strides = [1, 1]} : vector<2x512xf32> to vector<2x128xf32>
    %141 = math.tanh %140 : vector<2x128xf32>
    %142 = vector.extract_strided_slice %127 {offsets = [0, 384], sizes = [2, 128], strides = [1, 1]} : vector<2x512xf32> to vector<2x128xf32>
    %143 = arith.negf %142 : vector<2x128xf32>
    %144 = math.exp %143 : vector<2x128xf32>
    %cst_33 = arith.constant 1.000000e+00 : f32
    %145 = vector.broadcast %cst_33 : f32 to vector<2x128xf32>
    %146 = arith.addf %145, %144 : vector<2x128xf32>
    %147 = arith.divf %145, %146 : vector<2x128xf32>
    %148 = arith.mulf %139, %121 : vector<2x128xf32>
    %149 = arith.mulf %133, %141 : vector<2x128xf32>
    %150 = arith.addf %148, %149 : vector<2x128xf32>
    %151 = math.tanh %150 : vector<2x128xf32>
    %152 = arith.mulf %147, %151 : vector<2x128xf32>
    %c8 = arith.constant 8 : index
    %c0_34 = arith.constant 0 : index
    %153 = vector.load %arg12[%c8, %c0_34] : memref<16x128xf32, #tpu.memory_space<vmem>>, vector<2x128xf32>
    tpu.vector_store %arg12[%c8, %c0_34], %152 {strides = array<i32>} : memref<16x128xf32, #tpu.memory_space<vmem>>, vector<2x128xf32>,
    %154 = vector.extract_strided_slice %6 {offsets = [10, 0], sizes = [2, 512], strides = [1, 1]} : vector<16x512xf32> to vector<2x512xf32>
    %cst_35 = arith.constant dense<0.000000e+00> : vector<2x512xf32>
    %155 = tpu.matmul %152, %2, %cst_35 {dimension_numbers = #tpu.dot_dimension_numbers<[1], [0], [0], [1], [0, 0, 1, 1], [], []>} : vector<2x128xf32>, vector<128x512xf32>, vector<2x512xf32> -> vector<2x512xf32>
    %156 = arith.addf %154, %155 : vector<2x512xf32>
    %157 = vector.extract_strided_slice %156 {offsets = [0, 0], sizes = [2, 128], strides = [1, 1]} : vector<2x512xf32> to vector<2x128xf32>
    %158 = arith.negf %157 : vector<2x128xf32>
    %159 = math.exp %158 : vector<2x128xf32>
    %cst_36 = arith.constant 1.000000e+00 : f32
    %160 = vector.broadcast %cst_36 : f32 to vector<2x128xf32>
    %161 = arith.addf %160, %159 : vector<2x128xf32>
    %162 = arith.divf %160, %161 : vector<2x128xf32>
    %163 = vector.extract_strided_slice %156 {offsets = [0, 128], sizes = [2, 128], strides = [1, 1]} : vector<2x512xf32> to vector<2x128xf32>
    %164 = arith.negf %163 : vector<2x128xf32>
    %165 = math.exp %164 : vector<2x128xf32>
    %cst_37 = arith.constant 1.000000e+00 : f32
    %166 = vector.broadcast %cst_37 : f32 to vector<2x128xf32>
    %167 = arith.addf %166, %165 : vector<2x128xf32>
    %168 = arith.divf %166, %167 : vector<2x128xf32>
    %169 = vector.extract_strided_slice %156 {offsets = [0, 256], sizes = [2, 128], strides = [1, 1]} : vector<2x512xf32> to vector<2x128xf32>
    %170 = math.tanh %169 : vector<2x128xf32>
    %171 = vector.extract_strided_slice %156 {offsets = [0, 384], sizes = [2, 128], strides = [1, 1]} : vector<2x512xf32> to vector<2x128xf32>
    %172 = arith.negf %171 : vector<2x128xf32>
    %173 = math.exp %172 : vector<2x128xf32>
    %cst_38 = arith.constant 1.000000e+00 : f32
    %174 = vector.broadcast %cst_38 : f32 to vector<2x128xf32>
    %175 = arith.addf %174, %173 : vector<2x128xf32>
    %176 = arith.divf %174, %175 : vector<2x128xf32>
    %177 = arith.mulf %168, %150 : vector<2x128xf32>
    %178 = arith.mulf %162, %170 : vector<2x128xf32>
    %179 = arith.addf %177, %178 : vector<2x128xf32>
    %180 = math.tanh %179 : vector<2x128xf32>
    %181 = arith.mulf %176, %180 : vector<2x128xf32>
    %c10 = arith.constant 10 : index
    %c0_39 = arith.constant 0 : index
    %182 = vector.load %arg12[%c10, %c0_39] : memref<16x128xf32, #tpu.memory_space<vmem>>, vector<2x128xf32>
    tpu.vector_store %arg12[%c10, %c0_39], %181 {strides = array<i32>} : memref<16x128xf32, #tpu.memory_space<vmem>>, vector<2x128xf32>,
    %183 = vector.extract_strided_slice %6 {offsets = [12, 0], sizes = [2, 512], strides = [1, 1]} : vector<16x512xf32> to vector<2x512xf32>
    %cst_40 = arith.constant dense<0.000000e+00> : vector<2x512xf32>
    %184 = tpu.matmul %181, %2, %cst_40 {dimension_numbers = #tpu.dot_dimension_numbers<[1], [0], [0], [1], [0, 0, 1, 1], [], []>} : vector<2x128xf32>, vector<128x512xf32>, vector<2x512xf32> -> vector<2x512xf32>
    %185 = arith.addf %183, %184 : vector<2x512xf32>
    %186 = vector.extract_strided_slice %185 {offsets = [0, 0], sizes = [2, 128], strides = [1, 1]} : vector<2x512xf32> to vector<2x128xf32>
    %187 = arith.negf %186 : vector<2x128xf32>
    %188 = math.exp %187 : vector<2x128xf32>
    %cst_41 = arith.constant 1.000000e+00 : f32
    %189 = vector.broadcast %cst_41 : f32 to vector<2x128xf32>
    %190 = arith.addf %189, %188 : vector<2x128xf32>
    %191 = arith.divf %189, %190 : vector<2x128xf32>
    %192 = vector.extract_strided_slice %185 {offsets = [0, 128], sizes = [2, 128], strides = [1, 1]} : vector<2x512xf32> to vector<2x128xf32>
    %193 = arith.negf %192 : vector<2x128xf32>
    %194 = math.exp %193 : vector<2x128xf32>
    %cst_42 = arith.constant 1.000000e+00 : f32
    %195 = vector.broadcast %cst_42 : f32 to vector<2x128xf32>
    %196 = arith.addf %195, %194 : vector<2x128xf32>
    %197 = arith.divf %195, %196 : vector<2x128xf32>
    %198 = vector.extract_strided_slice %185 {offsets = [0, 256], sizes = [2, 128], strides = [1, 1]} : vector<2x512xf32> to vector<2x128xf32>
    %199 = math.tanh %198 : vector<2x128xf32>
    %200 = vector.extract_strided_slice %185 {offsets = [0, 384], sizes = [2, 128], strides = [1, 1]} : vector<2x512xf32> to vector<2x128xf32>
    %201 = arith.negf %200 : vector<2x128xf32>
    %202 = math.exp %201 : vector<2x128xf32>
    %cst_43 = arith.constant 1.000000e+00 : f32
    %203 = vector.broadcast %cst_43 : f32 to vector<2x128xf32>
    %204 = arith.addf %203, %202 : vector<2x128xf32>
    %205 = arith.divf %203, %204 : vector<2x128xf32>
    %206 = arith.mulf %197, %179 : vector<2x128xf32>
    %207 = arith.mulf %191, %199 : vector<2x128xf32>
    %208 = arith.addf %206, %207 : vector<2x128xf32>
    %209 = math.tanh %208 : vector<2x128xf32>
    %210 = arith.mulf %205, %209 : vector<2x128xf32>
    %c12 = arith.constant 12 : index
    %c0_44 = arith.constant 0 : index
    %211 = vector.load %arg12[%c12, %c0_44] : memref<16x128xf32, #tpu.memory_space<vmem>>, vector<2x128xf32>
    tpu.vector_store %arg12[%c12, %c0_44], %210 {strides = array<i32>} : memref<16x128xf32, #tpu.memory_space<vmem>>, vector<2x128xf32>,
    %212 = vector.extract_strided_slice %6 {offsets = [14, 0], sizes = [2, 512], strides = [1, 1]} : vector<16x512xf32> to vector<2x512xf32>
    %cst_45 = arith.constant dense<0.000000e+00> : vector<2x512xf32>
    %213 = tpu.matmul %210, %2, %cst_45 {dimension_numbers = #tpu.dot_dimension_numbers<[1], [0], [0], [1], [0, 0, 1, 1], [], []>} : vector<2x128xf32>, vector<128x512xf32>, vector<2x512xf32> -> vector<2x512xf32>
    %214 = arith.addf %212, %213 : vector<2x512xf32>
    %215 = vector.extract_strided_slice %214 {offsets = [0, 0], sizes = [2, 128], strides = [1, 1]} : vector<2x512xf32> to vector<2x128xf32>
    %216 = arith.negf %215 : vector<2x128xf32>
    %217 = math.exp %216 : vector<2x128xf32>
    %cst_46 = arith.constant 1.000000e+00 : f32
    %218 = vector.broadcast %cst_46 : f32 to vector<2x128xf32>
    %219 = arith.addf %218, %217 : vector<2x128xf32>
    %220 = arith.divf %218, %219 : vector<2x128xf32>
    %221 = vector.extract_strided_slice %214 {offsets = [0, 128], sizes = [2, 128], strides = [1, 1]} : vector<2x512xf32> to vector<2x128xf32>
    %222 = arith.negf %221 : vector<2x128xf32>
    %223 = math.exp %222 : vector<2x128xf32>
    %cst_47 = arith.constant 1.000000e+00 : f32
    %224 = vector.broadcast %cst_47 : f32 to vector<2x128xf32>
    %225 = arith.addf %224, %223 : vector<2x128xf32>
    %226 = arith.divf %224, %225 : vector<2x128xf32>
    %227 = vector.extract_strided_slice %214 {offsets = [0, 256], sizes = [2, 128], strides = [1, 1]} : vector<2x512xf32> to vector<2x128xf32>
    %228 = math.tanh %227 : vector<2x128xf32>
    %229 = vector.extract_strided_slice %214 {offsets = [0, 384], sizes = [2, 128], strides = [1, 1]} : vector<2x512xf32> to vector<2x128xf32>
    %230 = arith.negf %229 : vector<2x128xf32>
    %231 = math.exp %230 : vector<2x128xf32>
    %cst_48 = arith.constant 1.000000e+00 : f32
    %232 = vector.broadcast %cst_48 : f32 to vector<2x128xf32>
    %233 = arith.addf %232, %231 : vector<2x128xf32>
    %234 = arith.divf %232, %233 : vector<2x128xf32>
    %235 = arith.mulf %226, %208 : vector<2x128xf32>
    %236 = arith.mulf %220, %228 : vector<2x128xf32>
    %237 = arith.addf %235, %236 : vector<2x128xf32>
    %238 = math.tanh %237 : vector<2x128xf32>
    %239 = arith.mulf %234, %238 : vector<2x128xf32>
    %c14 = arith.constant 14 : index
    %c0_49 = arith.constant 0 : index
    %240 = vector.load %arg12[%c14, %c0_49] : memref<16x128xf32, #tpu.memory_space<vmem>>, vector<2x128xf32>
    tpu.vector_store %arg12[%c14, %c0_49], %239 {strides = array<i32>} : memref<16x128xf32, #tpu.memory_space<vmem>>, vector<2x128xf32>,
    %c0_50 = arith.constant 0 : index
    %c0_51 = arith.constant 0 : index
    %241 = vector.load %arg12[%c0_50, %c0_51] : memref<16x128xf32, #tpu.memory_space<vmem>>, vector<16x128xf32>
    %c0_52 = arith.constant 0 : index
    %c0_53 = arith.constant 0 : index
    %242 = vector.load %arg4[%c0_52, %c0_53] : memref<128x512xf32, #tpu.memory_space<vmem>>, vector<128x512xf32>
    %c0_54 = arith.constant 0 : index
    %c0_55 = arith.constant 0 : index
    %243 = vector.load %arg5[%c0_54, %c0_55] : memref<128x512xf32, #tpu.memory_space<vmem>>, vector<128x512xf32>
    %c0_56 = arith.constant 0 : index
    %c0_57 = arith.constant 0 : index
    %244 = vector.load %arg6[%c0_56, %c0_57] : memref<1x512xf32, #tpu.memory_space<vmem>>, vector<1x512xf32>
    %cst_58 = arith.constant dense<0.000000e+00> : vector<16x512xf32>
    %245 = tpu.matmul %241, %242, %cst_58 {dimension_numbers = #tpu.dot_dimension_numbers<[1], [0], [0], [1], [0, 0, 1, 1], [], []>} : vector<16x128xf32>, vector<128x512xf32>, vector<16x512xf32> -> vector<16x512xf32>
    %246 = vector.broadcast %244 : vector<1x512xf32> to vector<16x512xf32>
    %247 = arith.addf %245, %246 : vector<16x512xf32>
    %cst_59 = arith.constant 0.000000e+00 : f32
    %248 = vector.broadcast %cst_59 : f32 to vector<2x128xf32>
    %cst_60 = arith.constant 0.000000e+00 : f32
    %249 = vector.broadcast %cst_60 : f32 to vector<2x128xf32>
    %250 = vector.extract_strided_slice %247 {offsets = [0, 0], sizes = [2, 512], strides = [1, 1]} : vector<16x512xf32> to vector<2x512xf32>
    %cst_61 = arith.constant dense<0.000000e+00> : vector<2x512xf32>
    %251 = tpu.matmul %248, %243, %cst_61 {dimension_numbers = #tpu.dot_dimension_numbers<[1], [0], [0], [1], [0, 0, 1, 1], [], []>} : vector<2x128xf32>, vector<128x512xf32>, vector<2x512xf32> -> vector<2x512xf32>
    %252 = arith.addf %250, %251 : vector<2x512xf32>
    %253 = vector.extract_strided_slice %252 {offsets = [0, 0], sizes = [2, 128], strides = [1, 1]} : vector<2x512xf32> to vector<2x128xf32>
    %254 = arith.negf %253 : vector<2x128xf32>
    %255 = math.exp %254 : vector<2x128xf32>
    %cst_62 = arith.constant 1.000000e+00 : f32
    %256 = vector.broadcast %cst_62 : f32 to vector<2x128xf32>
    %257 = arith.addf %256, %255 : vector<2x128xf32>
    %258 = arith.divf %256, %257 : vector<2x128xf32>
    %259 = vector.extract_strided_slice %252 {offsets = [0, 128], sizes = [2, 128], strides = [1, 1]} : vector<2x512xf32> to vector<2x128xf32>
    %260 = arith.negf %259 : vector<2x128xf32>
    %261 = math.exp %260 : vector<2x128xf32>
    %cst_63 = arith.constant 1.000000e+00 : f32
    %262 = vector.broadcast %cst_63 : f32 to vector<2x128xf32>
    %263 = arith.addf %262, %261 : vector<2x128xf32>
    %264 = arith.divf %262, %263 : vector<2x128xf32>
    %265 = vector.extract_strided_slice %252 {offsets = [0, 256], sizes = [2, 128], strides = [1, 1]} : vector<2x512xf32> to vector<2x128xf32>
    %266 = math.tanh %265 : vector<2x128xf32>
    %267 = vector.extract_strided_slice %252 {offsets = [0, 384], sizes = [2, 128], strides = [1, 1]} : vector<2x512xf32> to vector<2x128xf32>
    %268 = arith.negf %267 : vector<2x128xf32>
    %269 = math.exp %268 : vector<2x128xf32>
    %cst_64 = arith.constant 1.000000e+00 : f32
    %270 = vector.broadcast %cst_64 : f32 to vector<2x128xf32>
    %271 = arith.addf %270, %269 : vector<2x128xf32>
    %272 = arith.divf %270, %271 : vector<2x128xf32>
    %273 = arith.mulf %264, %249 : vector<2x128xf32>
    %274 = arith.mulf %258, %266 : vector<2x128xf32>
    %275 = arith.addf %273, %274 : vector<2x128xf32>
    %276 = math.tanh %275 : vector<2x128xf32>
    %277 = arith.mulf %272, %276 : vector<2x128xf32>
    %c0_65 = arith.constant 0 : index
    %c0_66 = arith.constant 0 : index
    %278 = vector.load %arg12[%c0_65, %c0_66] : memref<16x128xf32, #tpu.memory_space<vmem>>, vector<2x128xf32>
    tpu.vector_store %arg12[%c0_65, %c0_66], %277 {strides = array<i32>} : memref<16x128xf32, #tpu.memory_space<vmem>>, vector<2x128xf32>,
    %279 = vector.extract_strided_slice %247 {offsets = [2, 0], sizes = [2, 512], strides = [1, 1]} : vector<16x512xf32> to vector<2x512xf32>
    %cst_67 = arith.constant dense<0.000000e+00> : vector<2x512xf32>
    %280 = tpu.matmul %277, %243, %cst_67 {dimension_numbers = #tpu.dot_dimension_numbers<[1], [0], [0], [1], [0, 0, 1, 1], [], []>} : vector<2x128xf32>, vector<128x512xf32>, vector<2x512xf32> -> vector<2x512xf32>
    %281 = arith.addf %279, %280 : vector<2x512xf32>
    %282 = vector.extract_strided_slice %281 {offsets = [0, 0], sizes = [2, 128], strides = [1, 1]} : vector<2x512xf32> to vector<2x128xf32>
    %283 = arith.negf %282 : vector<2x128xf32>
    %284 = math.exp %283 : vector<2x128xf32>
    %cst_68 = arith.constant 1.000000e+00 : f32
    %285 = vector.broadcast %cst_68 : f32 to vector<2x128xf32>
    %286 = arith.addf %285, %284 : vector<2x128xf32>
    %287 = arith.divf %285, %286 : vector<2x128xf32>
    %288 = vector.extract_strided_slice %281 {offsets = [0, 128], sizes = [2, 128], strides = [1, 1]} : vector<2x512xf32> to vector<2x128xf32>
    %289 = arith.negf %288 : vector<2x128xf32>
    %290 = math.exp %289 : vector<2x128xf32>
    %cst_69 = arith.constant 1.000000e+00 : f32
    %291 = vector.broadcast %cst_69 : f32 to vector<2x128xf32>
    %292 = arith.addf %291, %290 : vector<2x128xf32>
    %293 = arith.divf %291, %292 : vector<2x128xf32>
    %294 = vector.extract_strided_slice %281 {offsets = [0, 256], sizes = [2, 128], strides = [1, 1]} : vector<2x512xf32> to vector<2x128xf32>
    %295 = math.tanh %294 : vector<2x128xf32>
    %296 = vector.extract_strided_slice %281 {offsets = [0, 384], sizes = [2, 128], strides = [1, 1]} : vector<2x512xf32> to vector<2x128xf32>
    %297 = arith.negf %296 : vector<2x128xf32>
    %298 = math.exp %297 : vector<2x128xf32>
    %cst_70 = arith.constant 1.000000e+00 : f32
    %299 = vector.broadcast %cst_70 : f32 to vector<2x128xf32>
    %300 = arith.addf %299, %298 : vector<2x128xf32>
    %301 = arith.divf %299, %300 : vector<2x128xf32>
    %302 = arith.mulf %293, %275 : vector<2x128xf32>
    %303 = arith.mulf %287, %295 : vector<2x128xf32>
    %304 = arith.addf %302, %303 : vector<2x128xf32>
    %305 = math.tanh %304 : vector<2x128xf32>
    %306 = arith.mulf %301, %305 : vector<2x128xf32>
    %c2_71 = arith.constant 2 : index
    %c0_72 = arith.constant 0 : index
    %307 = vector.load %arg12[%c2_71, %c0_72] : memref<16x128xf32, #tpu.memory_space<vmem>>, vector<2x128xf32>
    tpu.vector_store %arg12[%c2_71, %c0_72], %306 {strides = array<i32>} : memref<16x128xf32, #tpu.memory_space<vmem>>, vector<2x128xf32>,
    %308 = vector.extract_strided_slice %247 {offsets = [4, 0], sizes = [2, 512], strides = [1, 1]} : vector<16x512xf32> to vector<2x512xf32>
    %cst_73 = arith.constant dense<0.000000e+00> : vector<2x512xf32>
    %309 = tpu.matmul %306, %243, %cst_73 {dimension_numbers = #tpu.dot_dimension_numbers<[1], [0], [0], [1], [0, 0, 1, 1], [], []>} : vector<2x128xf32>, vector<128x512xf32>, vector<2x512xf32> -> vector<2x512xf32>
    %310 = arith.addf %308, %309 : vector<2x512xf32>
    %311 = vector.extract_strided_slice %310 {offsets = [0, 0], sizes = [2, 128], strides = [1, 1]} : vector<2x512xf32> to vector<2x128xf32>
    %312 = arith.negf %311 : vector<2x128xf32>
    %313 = math.exp %312 : vector<2x128xf32>
    %cst_74 = arith.constant 1.000000e+00 : f32
    %314 = vector.broadcast %cst_74 : f32 to vector<2x128xf32>
    %315 = arith.addf %314, %313 : vector<2x128xf32>
    %316 = arith.divf %314, %315 : vector<2x128xf32>
    %317 = vector.extract_strided_slice %310 {offsets = [0, 128], sizes = [2, 128], strides = [1, 1]} : vector<2x512xf32> to vector<2x128xf32>
    %318 = arith.negf %317 : vector<2x128xf32>
    %319 = math.exp %318 : vector<2x128xf32>
    %cst_75 = arith.constant 1.000000e+00 : f32
    %320 = vector.broadcast %cst_75 : f32 to vector<2x128xf32>
    %321 = arith.addf %320, %319 : vector<2x128xf32>
    %322 = arith.divf %320, %321 : vector<2x128xf32>
    %323 = vector.extract_strided_slice %310 {offsets = [0, 256], sizes = [2, 128], strides = [1, 1]} : vector<2x512xf32> to vector<2x128xf32>
    %324 = math.tanh %323 : vector<2x128xf32>
    %325 = vector.extract_strided_slice %310 {offsets = [0, 384], sizes = [2, 128], strides = [1, 1]} : vector<2x512xf32> to vector<2x128xf32>
    %326 = arith.negf %325 : vector<2x128xf32>
    %327 = math.exp %326 : vector<2x128xf32>
    %cst_76 = arith.constant 1.000000e+00 : f32
    %328 = vector.broadcast %cst_76 : f32 to vector<2x128xf32>
    %329 = arith.addf %328, %327 : vector<2x128xf32>
    %330 = arith.divf %328, %329 : vector<2x128xf32>
    %331 = arith.mulf %322, %304 : vector<2x128xf32>
    %332 = arith.mulf %316, %324 : vector<2x128xf32>
    %333 = arith.addf %331, %332 : vector<2x128xf32>
    %334 = math.tanh %333 : vector<2x128xf32>
    %335 = arith.mulf %330, %334 : vector<2x128xf32>
    %c4_77 = arith.constant 4 : index
    %c0_78 = arith.constant 0 : index
    %336 = vector.load %arg12[%c4_77, %c0_78] : memref<16x128xf32, #tpu.memory_space<vmem>>, vector<2x128xf32>
    tpu.vector_store %arg12[%c4_77, %c0_78], %335 {strides = array<i32>} : memref<16x128xf32, #tpu.memory_space<vmem>>, vector<2x128xf32>,
    %337 = vector.extract_strided_slice %247 {offsets = [6, 0], sizes = [2, 512], strides = [1, 1]} : vector<16x512xf32> to vector<2x512xf32>
    %cst_79 = arith.constant dense<0.000000e+00> : vector<2x512xf32>
    %338 = tpu.matmul %335, %243, %cst_79 {dimension_numbers = #tpu.dot_dimension_numbers<[1], [0], [0], [1], [0, 0, 1, 1], [], []>} : vector<2x128xf32>, vector<128x512xf32>, vector<2x512xf32> -> vector<2x512xf32>
    %339 = arith.addf %337, %338 : vector<2x512xf32>
    %340 = vector.extract_strided_slice %339 {offsets = [0, 0], sizes = [2, 128], strides = [1, 1]} : vector<2x512xf32> to vector<2x128xf32>
    %341 = arith.negf %340 : vector<2x128xf32>
    %342 = math.exp %341 : vector<2x128xf32>
    %cst_80 = arith.constant 1.000000e+00 : f32
    %343 = vector.broadcast %cst_80 : f32 to vector<2x128xf32>
    %344 = arith.addf %343, %342 : vector<2x128xf32>
    %345 = arith.divf %343, %344 : vector<2x128xf32>
    %346 = vector.extract_strided_slice %339 {offsets = [0, 128], sizes = [2, 128], strides = [1, 1]} : vector<2x512xf32> to vector<2x128xf32>
    %347 = arith.negf %346 : vector<2x128xf32>
    %348 = math.exp %347 : vector<2x128xf32>
    %cst_81 = arith.constant 1.000000e+00 : f32
    %349 = vector.broadcast %cst_81 : f32 to vector<2x128xf32>
    %350 = arith.addf %349, %348 : vector<2x128xf32>
    %351 = arith.divf %349, %350 : vector<2x128xf32>
    %352 = vector.extract_strided_slice %339 {offsets = [0, 256], sizes = [2, 128], strides = [1, 1]} : vector<2x512xf32> to vector<2x128xf32>
    %353 = math.tanh %352 : vector<2x128xf32>
    %354 = vector.extract_strided_slice %339 {offsets = [0, 384], sizes = [2, 128], strides = [1, 1]} : vector<2x512xf32> to vector<2x128xf32>
    %355 = arith.negf %354 : vector<2x128xf32>
    %356 = math.exp %355 : vector<2x128xf32>
    %cst_82 = arith.constant 1.000000e+00 : f32
    %357 = vector.broadcast %cst_82 : f32 to vector<2x128xf32>
    %358 = arith.addf %357, %356 : vector<2x128xf32>
    %359 = arith.divf %357, %358 : vector<2x128xf32>
    %360 = arith.mulf %351, %333 : vector<2x128xf32>
    %361 = arith.mulf %345, %353 : vector<2x128xf32>
    %362 = arith.addf %360, %361 : vector<2x128xf32>
    %363 = math.tanh %362 : vector<2x128xf32>
    %364 = arith.mulf %359, %363 : vector<2x128xf32>
    %c6_83 = arith.constant 6 : index
    %c0_84 = arith.constant 0 : index
    %365 = vector.load %arg12[%c6_83, %c0_84] : memref<16x128xf32, #tpu.memory_space<vmem>>, vector<2x128xf32>
    tpu.vector_store %arg12[%c6_83, %c0_84], %364 {strides = array<i32>} : memref<16x128xf32, #tpu.memory_space<vmem>>, vector<2x128xf32>,
    %366 = vector.extract_strided_slice %247 {offsets = [8, 0], sizes = [2, 512], strides = [1, 1]} : vector<16x512xf32> to vector<2x512xf32>
    %cst_85 = arith.constant dense<0.000000e+00> : vector<2x512xf32>
    %367 = tpu.matmul %364, %243, %cst_85 {dimension_numbers = #tpu.dot_dimension_numbers<[1], [0], [0], [1], [0, 0, 1, 1], [], []>} : vector<2x128xf32>, vector<128x512xf32>, vector<2x512xf32> -> vector<2x512xf32>
    %368 = arith.addf %366, %367 : vector<2x512xf32>
    %369 = vector.extract_strided_slice %368 {offsets = [0, 0], sizes = [2, 128], strides = [1, 1]} : vector<2x512xf32> to vector<2x128xf32>
    %370 = arith.negf %369 : vector<2x128xf32>
    %371 = math.exp %370 : vector<2x128xf32>
    %cst_86 = arith.constant 1.000000e+00 : f32
    %372 = vector.broadcast %cst_86 : f32 to vector<2x128xf32>
    %373 = arith.addf %372, %371 : vector<2x128xf32>
    %374 = arith.divf %372, %373 : vector<2x128xf32>
    %375 = vector.extract_strided_slice %368 {offsets = [0, 128], sizes = [2, 128], strides = [1, 1]} : vector<2x512xf32> to vector<2x128xf32>
    %376 = arith.negf %375 : vector<2x128xf32>
    %377 = math.exp %376 : vector<2x128xf32>
    %cst_87 = arith.constant 1.000000e+00 : f32
    %378 = vector.broadcast %cst_87 : f32 to vector<2x128xf32>
    %379 = arith.addf %378, %377 : vector<2x128xf32>
    %380 = arith.divf %378, %379 : vector<2x128xf32>
    %381 = vector.extract_strided_slice %368 {offsets = [0, 256], sizes = [2, 128], strides = [1, 1]} : vector<2x512xf32> to vector<2x128xf32>
    %382 = math.tanh %381 : vector<2x128xf32>
    %383 = vector.extract_strided_slice %368 {offsets = [0, 384], sizes = [2, 128], strides = [1, 1]} : vector<2x512xf32> to vector<2x128xf32>
    %384 = arith.negf %383 : vector<2x128xf32>
    %385 = math.exp %384 : vector<2x128xf32>
    %cst_88 = arith.constant 1.000000e+00 : f32
    %386 = vector.broadcast %cst_88 : f32 to vector<2x128xf32>
    %387 = arith.addf %386, %385 : vector<2x128xf32>
    %388 = arith.divf %386, %387 : vector<2x128xf32>
    %389 = arith.mulf %380, %362 : vector<2x128xf32>
    %390 = arith.mulf %374, %382 : vector<2x128xf32>
    %391 = arith.addf %389, %390 : vector<2x128xf32>
    %392 = math.tanh %391 : vector<2x128xf32>
    %393 = arith.mulf %388, %392 : vector<2x128xf32>
    %c8_89 = arith.constant 8 : index
    %c0_90 = arith.constant 0 : index
    %394 = vector.load %arg12[%c8_89, %c0_90] : memref<16x128xf32, #tpu.memory_space<vmem>>, vector<2x128xf32>
    tpu.vector_store %arg12[%c8_89, %c0_90], %393 {strides = array<i32>} : memref<16x128xf32, #tpu.memory_space<vmem>>, vector<2x128xf32>,
    %395 = vector.extract_strided_slice %247 {offsets = [10, 0], sizes = [2, 512], strides = [1, 1]} : vector<16x512xf32> to vector<2x512xf32>
    %cst_91 = arith.constant dense<0.000000e+00> : vector<2x512xf32>
    %396 = tpu.matmul %393, %243, %cst_91 {dimension_numbers = #tpu.dot_dimension_numbers<[1], [0], [0], [1], [0, 0, 1, 1], [], []>} : vector<2x128xf32>, vector<128x512xf32>, vector<2x512xf32> -> vector<2x512xf32>
    %397 = arith.addf %395, %396 : vector<2x512xf32>
    %398 = vector.extract_strided_slice %397 {offsets = [0, 0], sizes = [2, 128], strides = [1, 1]} : vector<2x512xf32> to vector<2x128xf32>
    %399 = arith.negf %398 : vector<2x128xf32>
    %400 = math.exp %399 : vector<2x128xf32>
    %cst_92 = arith.constant 1.000000e+00 : f32
    %401 = vector.broadcast %cst_92 : f32 to vector<2x128xf32>
    %402 = arith.addf %401, %400 : vector<2x128xf32>
    %403 = arith.divf %401, %402 : vector<2x128xf32>
    %404 = vector.extract_strided_slice %397 {offsets = [0, 128], sizes = [2, 128], strides = [1, 1]} : vector<2x512xf32> to vector<2x128xf32>
    %405 = arith.negf %404 : vector<2x128xf32>
    %406 = math.exp %405 : vector<2x128xf32>
    %cst_93 = arith.constant 1.000000e+00 : f32
    %407 = vector.broadcast %cst_93 : f32 to vector<2x128xf32>
    %408 = arith.addf %407, %406 : vector<2x128xf32>
    %409 = arith.divf %407, %408 : vector<2x128xf32>
    %410 = vector.extract_strided_slice %397 {offsets = [0, 256], sizes = [2, 128], strides = [1, 1]} : vector<2x512xf32> to vector<2x128xf32>
    %411 = math.tanh %410 : vector<2x128xf32>
    %412 = vector.extract_strided_slice %397 {offsets = [0, 384], sizes = [2, 128], strides = [1, 1]} : vector<2x512xf32> to vector<2x128xf32>
    %413 = arith.negf %412 : vector<2x128xf32>
    %414 = math.exp %413 : vector<2x128xf32>
    %cst_94 = arith.constant 1.000000e+00 : f32
    %415 = vector.broadcast %cst_94 : f32 to vector<2x128xf32>
    %416 = arith.addf %415, %414 : vector<2x128xf32>
    %417 = arith.divf %415, %416 : vector<2x128xf32>
    %418 = arith.mulf %409, %391 : vector<2x128xf32>
    %419 = arith.mulf %403, %411 : vector<2x128xf32>
    %420 = arith.addf %418, %419 : vector<2x128xf32>
    %421 = math.tanh %420 : vector<2x128xf32>
    %422 = arith.mulf %417, %421 : vector<2x128xf32>
    %c10_95 = arith.constant 10 : index
    %c0_96 = arith.constant 0 : index
    %423 = vector.load %arg12[%c10_95, %c0_96] : memref<16x128xf32, #tpu.memory_space<vmem>>, vector<2x128xf32>
    tpu.vector_store %arg12[%c10_95, %c0_96], %422 {strides = array<i32>} : memref<16x128xf32, #tpu.memory_space<vmem>>, vector<2x128xf32>,
    %424 = vector.extract_strided_slice %247 {offsets = [12, 0], sizes = [2, 512], strides = [1, 1]} : vector<16x512xf32> to vector<2x512xf32>
    %cst_97 = arith.constant dense<0.000000e+00> : vector<2x512xf32>
    %425 = tpu.matmul %422, %243, %cst_97 {dimension_numbers = #tpu.dot_dimension_numbers<[1], [0], [0], [1], [0, 0, 1, 1], [], []>} : vector<2x128xf32>, vector<128x512xf32>, vector<2x512xf32> -> vector<2x512xf32>
    %426 = arith.addf %424, %425 : vector<2x512xf32>
    %427 = vector.extract_strided_slice %426 {offsets = [0, 0], sizes = [2, 128], strides = [1, 1]} : vector<2x512xf32> to vector<2x128xf32>
    %428 = arith.negf %427 : vector<2x128xf32>
    %429 = math.exp %428 : vector<2x128xf32>
    %cst_98 = arith.constant 1.000000e+00 : f32
    %430 = vector.broadcast %cst_98 : f32 to vector<2x128xf32>
    %431 = arith.addf %430, %429 : vector<2x128xf32>
    %432 = arith.divf %430, %431 : vector<2x128xf32>
    %433 = vector.extract_strided_slice %426 {offsets = [0, 128], sizes = [2, 128], strides = [1, 1]} : vector<2x512xf32> to vector<2x128xf32>
    %434 = arith.negf %433 : vector<2x128xf32>
    %435 = math.exp %434 : vector<2x128xf32>
    %cst_99 = arith.constant 1.000000e+00 : f32
    %436 = vector.broadcast %cst_99 : f32 to vector<2x128xf32>
    %437 = arith.addf %436, %435 : vector<2x128xf32>
    %438 = arith.divf %436, %437 : vector<2x128xf32>
    %439 = vector.extract_strided_slice %426 {offsets = [0, 256], sizes = [2, 128], strides = [1, 1]} : vector<2x512xf32> to vector<2x128xf32>
    %440 = math.tanh %439 : vector<2x128xf32>
    %441 = vector.extract_strided_slice %426 {offsets = [0, 384], sizes = [2, 128], strides = [1, 1]} : vector<2x512xf32> to vector<2x128xf32>
    %442 = arith.negf %441 : vector<2x128xf32>
    %443 = math.exp %442 : vector<2x128xf32>
    %cst_100 = arith.constant 1.000000e+00 : f32
    %444 = vector.broadcast %cst_100 : f32 to vector<2x128xf32>
    %445 = arith.addf %444, %443 : vector<2x128xf32>
    %446 = arith.divf %444, %445 : vector<2x128xf32>
    %447 = arith.mulf %438, %420 : vector<2x128xf32>
    %448 = arith.mulf %432, %440 : vector<2x128xf32>
    %449 = arith.addf %447, %448 : vector<2x128xf32>
    %450 = math.tanh %449 : vector<2x128xf32>
    %451 = arith.mulf %446, %450 : vector<2x128xf32>
    %c12_101 = arith.constant 12 : index
    %c0_102 = arith.constant 0 : index
    %452 = vector.load %arg12[%c12_101, %c0_102] : memref<16x128xf32, #tpu.memory_space<vmem>>, vector<2x128xf32>
    tpu.vector_store %arg12[%c12_101, %c0_102], %451 {strides = array<i32>} : memref<16x128xf32, #tpu.memory_space<vmem>>, vector<2x128xf32>,
    %453 = vector.extract_strided_slice %247 {offsets = [14, 0], sizes = [2, 512], strides = [1, 1]} : vector<16x512xf32> to vector<2x512xf32>
    %cst_103 = arith.constant dense<0.000000e+00> : vector<2x512xf32>
    %454 = tpu.matmul %451, %243, %cst_103 {dimension_numbers = #tpu.dot_dimension_numbers<[1], [0], [0], [1], [0, 0, 1, 1], [], []>} : vector<2x128xf32>, vector<128x512xf32>, vector<2x512xf32> -> vector<2x512xf32>
    %455 = arith.addf %453, %454 : vector<2x512xf32>
    %456 = vector.extract_strided_slice %455 {offsets = [0, 0], sizes = [2, 128], strides = [1, 1]} : vector<2x512xf32> to vector<2x128xf32>
    %457 = arith.negf %456 : vector<2x128xf32>
    %458 = math.exp %457 : vector<2x128xf32>
    %cst_104 = arith.constant 1.000000e+00 : f32
    %459 = vector.broadcast %cst_104 : f32 to vector<2x128xf32>
    %460 = arith.addf %459, %458 : vector<2x128xf32>
    %461 = arith.divf %459, %460 : vector<2x128xf32>
    %462 = vector.extract_strided_slice %455 {offsets = [0, 128], sizes = [2, 128], strides = [1, 1]} : vector<2x512xf32> to vector<2x128xf32>
    %463 = arith.negf %462 : vector<2x128xf32>
    %464 = math.exp %463 : vector<2x128xf32>
    %cst_105 = arith.constant 1.000000e+00 : f32
    %465 = vector.broadcast %cst_105 : f32 to vector<2x128xf32>
    %466 = arith.addf %465, %464 : vector<2x128xf32>
    %467 = arith.divf %465, %466 : vector<2x128xf32>
    %468 = vector.extract_strided_slice %455 {offsets = [0, 256], sizes = [2, 128], strides = [1, 1]} : vector<2x512xf32> to vector<2x128xf32>
    %469 = math.tanh %468 : vector<2x128xf32>
    %470 = vector.extract_strided_slice %455 {offsets = [0, 384], sizes = [2, 128], strides = [1, 1]} : vector<2x512xf32> to vector<2x128xf32>
    %471 = arith.negf %470 : vector<2x128xf32>
    %472 = math.exp %471 : vector<2x128xf32>
    %cst_106 = arith.constant 1.000000e+00 : f32
    %473 = vector.broadcast %cst_106 : f32 to vector<2x128xf32>
    %474 = arith.addf %473, %472 : vector<2x128xf32>
    %475 = arith.divf %473, %474 : vector<2x128xf32>
    %476 = arith.mulf %467, %449 : vector<2x128xf32>
    %477 = arith.mulf %461, %469 : vector<2x128xf32>
    %478 = arith.addf %476, %477 : vector<2x128xf32>
    %479 = math.tanh %478 : vector<2x128xf32>
    %480 = arith.mulf %475, %479 : vector<2x128xf32>
    %c14_107 = arith.constant 14 : index
    %c0_108 = arith.constant 0 : index
    %481 = vector.load %arg12[%c14_107, %c0_108] : memref<16x128xf32, #tpu.memory_space<vmem>>, vector<2x128xf32>
    tpu.vector_store %arg12[%c14_107, %c0_108], %480 {strides = array<i32>} : memref<16x128xf32, #tpu.memory_space<vmem>>, vector<2x128xf32>,
    %c0_109 = arith.constant 0 : index
    %c0_110 = arith.constant 0 : index
    %482 = vector.load %arg12[%c0_109, %c0_110] : memref<16x128xf32, #tpu.memory_space<vmem>>, vector<16x128xf32>
    %c0_111 = arith.constant 0 : index
    %c0_112 = arith.constant 0 : index
    %483 = vector.load %arg7[%c0_111, %c0_112] : memref<128x84xf32, #tpu.memory_space<vmem>>, vector<128x84xf32>
    %cst_113 = arith.constant dense<0.000000e+00> : vector<16x84xf32>
    %484 = tpu.matmul %482, %483, %cst_113 {dimension_numbers = #tpu.dot_dimension_numbers<[1], [0], [0], [1], [0, 0, 1, 1], [], []>} : vector<16x128xf32>, vector<128x84xf32>, vector<16x84xf32> -> vector<16x84xf32>
    %c0_114 = arith.constant 0 : index
    %c0_115 = arith.constant 0 : index
    %485 = vector.load %arg8[%c0_114, %c0_115] : memref<1x84xf32, #tpu.memory_space<vmem>>, vector<1x84xf32>
    %486 = vector.broadcast %485 : vector<1x84xf32> to vector<16x84xf32>
    %487 = arith.addf %484, %486 : vector<16x84xf32>
    %c0_116 = arith.constant 0 : index
    %c0_117 = arith.constant 0 : index
    %488 = vector.load %arg9[%c0_116, %c0_117] : memref<84x128xf32, #tpu.memory_space<vmem>>, vector<84x128xf32>
    %cst_118 = arith.constant dense<0.000000e+00> : vector<16x128xf32>
    %489 = tpu.matmul %487, %488, %cst_118 {dimension_numbers = #tpu.dot_dimension_numbers<[1], [0], [0], [1], [0, 0, 1, 1], [], []>} : vector<16x84xf32>, vector<84x128xf32>, vector<16x128xf32> -> vector<16x128xf32>
    %c0_119 = arith.constant 0 : index
    %c0_120 = arith.constant 0 : index
    %490 = vector.load %arg10[%c0_119, %c0_120] : memref<1x128xf32, #tpu.memory_space<vmem>>, vector<1x128xf32>
    %491 = vector.broadcast %490 : vector<1x128xf32> to vector<16x128xf32>
    %492 = arith.addf %489, %491 : vector<16x128xf32>
    %c0_121 = arith.constant 0 : index
    %c0_122 = arith.constant 0 : index
    %493 = vector.load %arg11[%c0_121, %c0_122] : memref<16x128xf32, #tpu.memory_space<vmem>>, vector<16x128xf32>
    tpu.vector_store %arg11[%c0_121, %c0_122], %492 {strides = array<i32>} : memref<16x128xf32, #tpu.memory_space<vmem>>, vector<16x128xf32>,
    return
  }
}

</mosaic_0001>

<llo_original>
// kernel: hand_lstm_forward.1
$region0: #{hand_lstm_forward.1}
  #allocation0 [shape = 'u32[]', space=smem, size = 0x4, offset = 0x4, fixed_abs, tag = 'smem constant byte address 0x4 - core index']
  #allocation1 [shape = 'u32[72,128]{1,0:T(1,128)}', space=vmem, size = 0x9000, scoped, tag = 'internal scratch']
  #allocation2 [shape = 'f32[16,128]{1,0:T(8,128)}', space=vmem, size = 0x2000, scoped, tag = 'scratch operand']
  %s0 = inlined_call_operand.vmem [shape: f32[16,30], index: 0, kind: input, shape index: {}]
  %s1 = inlined_call_operand.vmem [shape: f32[30,512], index: 1, kind: input, shape index: {}]
  %s2 = inlined_call_operand.hbm [shape: f32[128,512], index: 2, kind: input, shape index: {}]
  %s3 = inlined_call_operand.vmem [shape: f32[1,512], index: 3, kind: input, shape index: {}]
  %s4 = inlined_call_operand.hbm [shape: f32[128,512], index: 4, kind: input, shape index: {}]
  %s5 = inlined_call_operand.hbm [shape: f32[128,512], index: 5, kind: input, shape index: {}]
  %s6 = inlined_call_operand.vmem [shape: f32[1,512], index: 6, kind: input, shape index: {}]
  %s7 = inlined_call_operand.vmem [shape: f32[128,84], index: 7, kind: input, shape index: {}]
  %s8 = inlined_call_operand.vmem [shape: f32[1,84], index: 8, kind: input, shape index: {}]
  %s9 = inlined_call_operand.vmem [shape: f32[84,128], index: 9, kind: input, shape index: {}]
  %s10 = inlined_call_operand.vmem [shape: f32[1,128], index: 10, kind: input, shape index: {}]
  %s11 = inlined_call_operand.vmem [shape: f32[16,128], index: 11, kind: output, shape index: {}]
  %s12 = sld [smem:[#allocation0]]
  $region66: #{hand_lstm_forward.1} parent=0
    _
  %s14 = ssub.s32 1, %s12
  %s15 = scalar_select 0, %s14, %s12
  $region1: #{hand_lstm_forward.1} parent=0
    #allocation3 [shape = 'u8[262144]{0}', space=vmem, size = 0x40000, scoped, tag = 'input window, operand 2, single buffered']
    #allocation4 [shape = 's32[1]{0}', space=sflag, size = 0x4, scoped, tag = 'scoped memory for hand_lstm_forward.1']
    #allocation5 [shape = 'u8[262144]{0}', space=vmem, size = 0x40000, scoped, tag = 'input window, operand 4, single buffered']
    #allocation6 [shape = 's32[1]{0}', space=sflag, size = 0x4, scoped, tag = 'scoped memory for hand_lstm_forward.1']
    #allocation7 [shape = 'u8[262144]{0}', space=vmem, size = 0x40000, scoped, tag = 'input window, operand 5, single buffered']
    %16 = vsyncpa [#allocation4], 0
    %17 = vsyncpa [#allocation6], 0
    // Predicated region
    $region2: #{hand_lstm_forward.1} parent=1 // pred_check
      _
    $region3: #{hand_lstm_forward.1} parent=1 // pred_check_branch
      %19 = sbr.rel (0) target = $region5
    $region4: #{hand_lstm_forward.1} parent=1 // pred_region
      _
    $region5: #{hand_lstm_forward.1} parent=1 // pred_fallthru
      _
    // Predicated region
    $region6: #{hand_lstm_forward.1} parent=1 // pred_check
      _
    $region7: #{hand_lstm_forward.1} parent=1 // pred_check_branch
      %21 = sbr.rel (0) target = $region9
    $region8: #{hand_lstm_forward.1} parent=1 // pred_region
      _
    $region9: #{hand_lstm_forward.1} parent=1 // pred_fallthru
      _
    // Predicated region
    $region10: #{hand_lstm_forward.1} parent=1 // pred_check
      _
    $region11: #{hand_lstm_forward.1} parent=1 // pred_check_branch
      %23 = sbr.rel (0) target = $region13
    $region12: #{hand_lstm_forward.1} parent=1 // pred_region
      %25 = vsyncadd [#allocation4], 0
      %s26 = sshll.u32 %s2, 4
      %s27 = int_to_ptr.hbm [resolvable:$true] %s26
      %s28 = sshll.u32 [#allocation3], 4
      %s29 = int_to_ptr.vmem [resolvable:$true] %s28
      %34 = dma.hbm_to_vmem [thread:$0]  %s27, 8192, %s29, [#allocation4], 512, 512, 32
    $region13: #{hand_lstm_forward.1} parent=1 // pred_fallthru
      _
    // Predicated region
    $region14: #{hand_lstm_forward.1} parent=1 // pred_check
      _
    $region15: #{hand_lstm_forward.1} parent=1 // pred_check_branch
      %36 = sbr.rel (0) target = $region17
    $region16: #{hand_lstm_forward.1} parent=1 // pred_region
      _
    $region17: #{hand_lstm_forward.1} parent=1 // pred_fallthru
      _
    // Predicated region
    $region18: #{hand_lstm_forward.1} parent=1 // pred_check
      _
    $region19: #{hand_lstm_forward.1} parent=1 // pred_check_branch
      %38 = sbr.rel (0) target = $region21
    $region20: #{hand_lstm_forward.1} parent=1 // pred_region
      %40 = vsyncadd [#allocation6], 0
      %s41 = sshll.u32 %s4, 4
      %s42 = int_to_ptr.hbm [resolvable:$true] %s41
      %s43 = sshll.u32 [#allocation5], 4
      %s44 = int_to_ptr.vmem [resolvable:$true] %s43
      %49 = dma.hbm_to_vmem [thread:$0]  %s42, 8192, %s44, [#allocation6], 512, 512, 32
    $region21: #{hand_lstm_forward.1} parent=1 // pred_fallthru
      _
    // Predicated region
    $region22: #{hand_lstm_forward.1} parent=1 // pred_check
      _
    $region23: #{hand_lstm_forward.1} parent=1 // pred_check_branch
      %51 = sbr.rel (0) target = $region25
    $region24: #{hand_lstm_forward.1} parent=1 // pred_region
      %53 = vsyncadd [#allocation6], 0
      %s54 = sshll.u32 %s5, 4
      %s55 = int_to_ptr.hbm [resolvable:$true] %s54
      %s56 = sshll.u32 [#allocation7], 4
      %s57 = int_to_ptr.vmem [resolvable:$true] %s56
      %62 = dma.hbm_to_vmem [thread:$0]  %s55, 8192, %s57, [#allocation6], 512, 512, 32
    $region25: #{hand_lstm_forward.1} parent=1 // pred_fallthru
      _
    // Predicated region
    $region26: #{hand_lstm_forward.1} parent=1 // pred_check
      _
    $region27: #{hand_lstm_forward.1} parent=1 // pred_check_branch
      %64 = sbr.rel (0) target = $region29
    $region28: #{hand_lstm_forward.1} parent=1 // pred_region
      _
    $region29: #{hand_lstm_forward.1} parent=1 // pred_fallthru
      _
    // Predicated region
    $region30: #{hand_lstm_forward.1} parent=1 // pred_check
      _
    $region31: #{hand_lstm_forward.1} parent=1 // pred_check_branch
      %66 = sbr.rel (0) target = $region33
    $region32: #{hand_lstm_forward.1} parent=1 // pred_region
      _
    $region33: #{hand_lstm_forward.1} parent=1 // pred_fallthru
      _
    // Predicated region
    $region34: #{hand_lstm_forward.1} parent=1 // pred_check
      _
    $region35: #{hand_lstm_forward.1} parent=1 // pred_check_branch
      %68 = sbr.rel (0) target = $region37
    $region36: #{hand_lstm_forward.1} parent=1 // pred_region
      _
    $region37: #{hand_lstm_forward.1} parent=1 // pred_fallthru
      _
    // Predicated region
    $region38: #{hand_lstm_forward.1} parent=1 // pred_check
      _
    $region39: #{hand_lstm_forward.1} parent=1 // pred_check_branch
      %70 = sbr.rel (0) target = $region41
    $region40: #{hand_lstm_forward.1} parent=1 // pred_region
      _
    $region41: #{hand_lstm_forward.1} parent=1 // pred_fallthru
      _
    // Predicated region
    $region42: #{hand_lstm_forward.1} parent=1 // pred_check
      _
    $region43: #{hand_lstm_forward.1} parent=1 // pred_check_branch
      %72 = sbr.rel (0) target = $region45
    $region44: #{hand_lstm_forward.1} parent=1 // pred_region
      _
    $region45: #{hand_lstm_forward.1} parent=1 // pred_fallthru
      _
    // Predicated region
    $region46: #{hand_lstm_forward.1} parent=1 // pred_check
      _
    $region47: #{hand_lstm_forward.1} parent=1 // pred_check_branch
      %74 = sbr.rel (0) target = $region49
    $region48: #{hand_lstm_forward.1} parent=1 // pred_region
      %76 = dma.done [#allocation4], 8192
    $region49: #{hand_lstm_forward.1} parent=1 // pred_fallthru
      _
    // Predicated region
    $region50: #{hand_lstm_forward.1} parent=1 // pred_check
      _
    $region51: #{hand_lstm_forward.1} parent=1 // pred_check_branch
      %78 = sbr.rel (0) target = $region53
    $region52: #{hand_lstm_forward.1} parent=1 // pred_region
      %80 = dma.done [#allocation6], 8192
    $region53: #{hand_lstm_forward.1} parent=1 // pred_fallthru
      _
    // Predicated region
    $region54: #{hand_lstm_forward.1} parent=1 // pred_check
      _
    $region55: #{hand_lstm_forward.1} parent=1 // pred_check_branch
      %82 = sbr.rel (0) target = $region57
    $region56: #{hand_lstm_forward.1} parent=1 // pred_region
      %84 = dma.done [#allocation6], 8192
    $region57: #{hand_lstm_forward.1} parent=1 // pred_fallthru
      _
    %v85 = vld [vmem:[%s0] sm:$0xff]
    %v86 = vld [vmem:[%s0 + $0x8] sm:$0xff]
    %v87 = vld [vmem:[%s1] sm:$0xff]
    %v88 = vld [vmem:[%s1 + $0x8] sm:$0xff]
    %v89 = vld [vmem:[%s1 + $0x10] sm:$0xff]
    %v90 = vld [vmem:[%s1 + $0x18] sm:$0xff]
    %v91 = vld [vmem:[%s1 + $0x20] sm:$0xff]
    %v92 = vld [vmem:[%s1 + $0x28] sm:$0xff]
    %v93 = vld [vmem:[%s1 + $0x30] sm:$0xff]
    %v94 = vld [vmem:[%s1 + $0x38] sm:$0xff]
    %v95 = vld [vmem:[%s1 + $0x40] sm:$0xff]
    %v96 = vld [vmem:[%s1 + $0x48] sm:$0xff]
    %v97 = vld [vmem:[%s1 + $0x50] sm:$0xff]
    %v98 = vld [vmem:[%s1 + $0x58] sm:$0xff]
    %v99 = vld [vmem:[%s1 + $0x60] sm:$0x3f]
    %v100 = vld [vmem:[%s1 + $0x68] sm:$0x3f]
    %v101 = vld [vmem:[%s1 + $0x70] sm:$0x3f]
    %v102 = vld [vmem:[%s1 + $0x78] sm:$0x3f]
    %v103 = vld [vmem:[#allocation3] sm:$0xff]
    %v104 = vld [vmem:[#allocation3 + $0x8] sm:$0xff]
    %v105 = vld [vmem:[#allocation3 + $0x10] sm:$0xff]
    %v106 = vld [vmem:[#allocation3 + $0x18] sm:$0xff]
    %v107 = vld [vmem:[#allocation3 + $0x20] sm:$0xff]
    %v108 = vld [vmem:[#allocation3 + $0x28] sm:$0xff]
    %v109 = vld [vmem:[#allocation3 + $0x30] sm:$0xff]
    %v110 = vld [vmem:[#allocation3 + $0x38] sm:$0xff]
    %v111 = vld [vmem:[#allocation3 + $0x40] sm:$0xff]
    %v112 = vld [vmem:[#allocation3 + $0x48] sm:$0xff]
    %v113 = vld [vmem:[#allocation3 + $0x50] sm:$0xff]
    %v114 = vld [vmem:[#allocation3 + $0x58] sm:$0xff]
    %v115 = vld [vmem:[#allocation3 + $0x60] sm:$0xff]
    %v116 = vld [vmem:[#allocation3 + $0x68] sm:$0xff]
    %v117 = vld [vmem:[#allocation3 + $0x70] sm:$0xff]
    %v118 = vld [vmem:[#allocation3 + $0x78] sm:$0xff]
    %v119 = vld [vmem:[#allocation3 + $0x80] sm:$0xff]
    %v120 = vld [vmem:[#allocation3 + $0x88] sm:$0xff]
    %v121 = vld [vmem:[#allocation3 + $0x90] sm:$0xff]
    %v122 = vld [vmem:[#allocation3 + $0x98] sm:$0xff]
    %v123 = vld [vmem:[#allocation3 + $0xa0] sm:$0xff]
    %v124 = vld [vmem:[#allocation3 + $0xa8] sm:$0xff]
    %v125 = vld [vmem:[#allocation3 + $0xb0] sm:$0xff]
    %v126 = vld [vmem:[#allocation3 + $0xb8] sm:$0xff]
    %v127 = vld [vmem:[#allocation3 + $0xc0] sm:$0xff]
    %v128 = vld [vmem:[#allocation3 + $0xc8] sm:$0xff]
    %v129 = vld [vmem:[#allocation3 + $0xd0] sm:$0xff]
    %v130 = vld [vmem:[#allocation3 + $0xd8] sm:$0xff]
    %v131 = vld [vmem:[#allocation3 + $0xe0] sm:$0xff]
    %v132 = vld [vmem:[#allocation3 + $0xe8] sm:$0xff]
    %v133 = vld [vmem:[#allocation3 + $0xf0] sm:$0xff]
    %v134 = vld [vmem:[#allocation3 + $0xf8] sm:$0xff]
    %v135 = vld [vmem:[#allocation3 + $0x100] sm:$0xff]
    %v136 = vld [vmem:[#allocation3 + $0x108] sm:$0xff]
    %v137 = vld [vmem:[#allocation3 + $0x110] sm:$0xff]
    %v138 = vld [vmem:[#allocation3 + $0x118] sm:$0xff]
    %v139 = vld [vmem:[#allocation3 + $0x120] sm:$0xff]
    %v140 = vld [vmem:[#allocation3 + $0x128] sm:$0xff]
    %v141 = vld [vmem:[#allocation3 + $0x130] sm:$0xff]
    %v142 = vld [vmem:[#allocation3 + $0x138] sm:$0xff]
    %v143 = vld [vmem:[#allocation3 + $0x140] sm:$0xff]
    %v144 = vld [vmem:[#allocation3 + $0x148] sm:$0xff]
    %v145 = vld [vmem:[#allocation3 + $0x150] sm:$0xff]
    %v146 = vld [vmem:[#allocation3 + $0x158] sm:$0xff]
    %v147 = vld [vmem:[#allocation3 + $0x160] sm:$0xff]
    %v148 = vld [vmem:[#allocation3 + $0x168] sm:$0xff]
    %v149 = vld [vmem:[#allocation3 + $0x170] sm:$0xff]
    %v150 = vld [vmem:[#allocation3 + $0x178] sm:$0xff]
    %v151 = vld [vmem:[#allocation3 + $0x180] sm:$0xff]
    %v152 = vld [vmem:[#allocation3 + $0x188] sm:$0xff]
    %v153 = vld [vmem:[#allocation3 + $0x190] sm:$0xff]
    %v154 = vld [vmem:[#allocation3 + $0x198] sm:$0xff]
    %v155 = vld [vmem:[#allocation3 + $0x1a0] sm:$0xff]
    %v156 = vld [vmem:[#allocation3 + $0x1a8] sm:$0xff]
    %v157 = vld [vmem:[#allocation3 + $0x1b0] sm:$0xff]
    %v158 = vld [vmem:[#allocation3 + $0x1b8] sm:$0xff]
    %v159 = vld [vmem:[#allocation3 + $0x1c0] sm:$0xff]
    %v160 = vld [vmem:[#allocation3 + $0x1c8] sm:$0xff]
    %v161 = vld [vmem:[#allocation3 + $0x1d0] sm:$0xff]
    %v162 = vld [vmem:[#allocation3 + $0x1d8] sm:$0xff]
    %v163 = vld [vmem:[#allocation3 + $0x1e0] sm:$0xff]
    %v164 = vld [vmem:[#allocation3 + $0x1e8] sm:$0xff]
    %v165 = vld [vmem:[#allocation3 + $0x1f0] sm:$0xff]
    %v166 = vld [vmem:[#allocation3 + $0x1f8] sm:$0xff]
    %v167 = vld [vmem:[%s3] sm:$0xf]
    %v169 = vperm.slane %v167, 0
    %v170 = vperm.slane %v167, 1
    %v171 = vperm.slane %v167, 2
    %v172 = vperm.slane %v167, 3
    %vm177 = vcmask 244736
    %v179 = vsel %vm177, %v85, 0
    %v182 = vsel %vm177, %v86, 0
    %vm184 = vcmask 1045504
    %v186 = vsel %vm184, %v99, 0
    %v189 = vsel %vm184, %v100, 0
    %v192 = vsel %vm184, %v101, 0
    %v195 = vsel %vm184, %v102, 0
    %197 = vmatpush.msra.mxu0 0.0
    %198 = vmatpush.msra.mxu0 0.0
    %199 = vmatpush.msra.mxu0 0.0
    %200 = vmatpush.msra.mxu0 0.0
    %201 = vmatpush.msra.mxu0 0.0
    %202 = vmatpush.msra.mxu0 0.0
    %203 = vmatpush.msra.mxu0 0.0
    %204 = vmatpush.msra.mxu0 0.0
    %205 = vmatpush.msra.mxu0 0.0
    %206 = vmatpush.msra.mxu0 0.0
    %207 = vmatpush.msra.mxu0 0.0
    %208 = vmatpush.msra.mxu0 0.0
    %209 = vmatpush.msra.mxu0 %v186
    %210 = vmatpush.msra.mxu0 %v95
    %211 = vmatpush.msra.mxu0 %v91
    %212 = vmatpush.msra.mxu0 %v87
    %213 = vmatmul.f32.gmra.mxu0 %v179
    %v214 = vpop.f32.mrf.mxu0
    %v215 = vadd.f32 %v169, %v214
    %216 = vmatmul.f32.gmra.mxu0 %v182
    %v217 = vpop.f32.mrf.mxu0
    %v218 = vadd.f32 %v169, %v217
    %219 = vdwg.mxu0
    %220 = vmatpush.msra.mxu0 0.0
    %221 = vmatpush.msra.mxu0 0.0
    %222 = vmatpush.msra.mxu0 0.0
    %223 = vmatpush.msra.mxu0 0.0
    %224 = vmatpush.msra.mxu0 0.0
    %225 = vmatpush.msra.mxu0 0.0
    %226 = vmatpush.msra.mxu0 0.0
    %227 = vmatpush.msra.mxu0 0.0
    %228 = vmatpush.msra.mxu0 0.0
    %229 = vmatpush.msra.mxu0 0.0
    %230 = vmatpush.msra.mxu0 0.0
    %231 = vmatpush.msra.mxu0 0.0
    %232 = vmatpush.msra.mxu0 %v189
    %233 = vmatpush.msra.mxu0 %v96
    %234 = vmatpush.msra.mxu0 %v92
    %235 = vmatpush.msra.mxu0 %v88
    %236 = vmatmul.f32.gmra.mxu0 %v179
    %v237 = vpop.f32.mrf.mxu0
    %v238 = vadd.f32 %v170, %v237
    %239 = vmatmul.f32.gmra.mxu0 %v182
    %v240 = vpop.f32.mrf.mxu0
    %v241 = vadd.f32 %v170, %v240
    %242 = vdwg.mxu0
    %243 = vmatpush.msra.mxu0 0.0
    %244 = vmatpush.msra.mxu0 0.0
    %245 = vmatpush.msra.mxu0 0.0
    %246 = vmatpush.msra.mxu0 0.0
    %247 = vmatpush.msra.mxu0 0.0
    %248 = vmatpush.msra.mxu0 0.0
    %249 = vmatpush.msra.mxu0 0.0
    %250 = vmatpush.msra.mxu0 0.0
    %251 = vmatpush.msra.mxu0 0.0
    %252 = vmatpush.msra.mxu0 0.0
    %253 = vmatpush.msra.mxu0 0.0
    %254 = vmatpush.msra.mxu0 0.0
    %255 = vmatpush.msra.mxu0 %v192
    %256 = vmatpush.msra.mxu0 %v97
    %257 = vmatpush.msra.mxu0 %v93
    %258 = vmatpush.msra.mxu0 %v89
    %259 = vmatmul.f32.gmra.mxu0 %v179
    %v260 = vpop.f32.mrf.mxu0
    %v261 = vadd.f32 %v171, %v260
    %262 = vmatmul.f32.gmra.mxu0 %v182
    %v263 = vpop.f32.mrf.mxu0
    %v264 = vadd.f32 %v171, %v263
    %265 = vdwg.mxu0
    %266 = vmatpush.msra.mxu0 0.0
    %267 = vmatpush.msra.mxu0 0.0
    %268 = vmatpush.msra.mxu0 0.0
    %269 = vmatpush.msra.mxu0 0.0
    %270 = vmatpush.msra.mxu0 0.0
    %271 = vmatpush.msra.mxu0 0.0
    %272 = vmatpush.msra.mxu0 0.0
    %273 = vmatpush.msra.mxu0 0.0
    %274 = vmatpush.msra.mxu0 0.0
    %275 = vmatpush.msra.mxu0 0.0
    %276 = vmatpush.msra.mxu0 0.0
    %277 = vmatpush.msra.mxu0 0.0
    %278 = vmatpush.msra.mxu0 %v195
    %279 = vmatpush.msra.mxu0 %v98
    %280 = vmatpush.msra.mxu0 %v94
    %281 = vmatpush.msra.mxu0 %v90
    %282 = vmatmul.f32.gmra.mxu0 %v179
    %v283 = vpop.f32.mrf.mxu0
    %v284 = vadd.f32 %v172, %v283
    %285 = vmatmul.f32.gmra.mxu0 %v182
    %v286 = vpop.f32.mrf.mxu0
    %v287 = vadd.f32 %v172, %v286
    %288 = vdwg.mxu0
    %289 = vmatpush.msra.mxu0 %v163
    %290 = vmatpush.msra.mxu0 %v159
    %291 = vmatpush.msra.mxu0 %v155
    %292 = vmatpush.msra.mxu0 %v151
    %293 = vmatpush.msra.mxu0 %v147
    %294 = vmatpush.msra.mxu0 %v143
    %295 = vmatpush.msra.mxu0 %v139
    %296 = vmatpush.msra.mxu0 %v135
    %297 = vmatpush.msra.mxu0 %v131
    %298 = vmatpush.msra.mxu0 %v127
    %299 = vmatpush.msra.mxu0 %v123
    %300 = vmatpush.msra.mxu0 %v119
    %301 = vmatpush.msra.mxu0 %v115
    %302 = vmatpush.msra.mxu0 %v111
    %303 = vmatpush.msra.mxu0 %v107
    %304 = vmatpush.msra.mxu0 %v103
    %305 = vmatmul.f32.gmra.mxu0 0.0
    %v306 = vpop.f32.mrf.mxu0
    %v307 = vadd.f32 0.0, %v306
    %308 = vdwg.mxu0
    %309 = vmatpush.msra.mxu0 %v164
    %310 = vmatpush.msra.mxu0 %v160
    %311 = vmatpush.msra.mxu0 %v156
    %312 = vmatpush.msra.mxu0 %v152
    %313 = vmatpush.msra.mxu0 %v148
    %314 = vmatpush.msra.mxu0 %v144
    %315 = vmatpush.msra.mxu0 %v140
    %316 = vmatpush.msra.mxu0 %v136
    %317 = vmatpush.msra.mxu0 %v132
    %318 = vmatpush.msra.mxu0 %v128
    %319 = vmatpush.msra.mxu0 %v124
    %320 = vmatpush.msra.mxu0 %v120
    %321 = vmatpush.msra.mxu0 %v116
    %322 = vmatpush.msra.mxu0 %v112
    %323 = vmatpush.msra.mxu0 %v108
    %324 = vmatpush.msra.mxu0 %v104
    %325 = vmatmul.f32.gmra.mxu0 0.0
    %v326 = vpop.f32.mrf.mxu0
    %v327 = vadd.f32 0.0, %v326
    %328 = vdwg.mxu0
    %329 = vmatpush.msra.mxu0 %v165
    %330 = vmatpush.msra.mxu0 %v161
    %331 = vmatpush.msra.mxu0 %v157
    %332 = vmatpush.msra.mxu0 %v153
    %333 = vmatpush.msra.mxu0 %v149
    %334 = vmatpush.msra.mxu0 %v145
    %335 = vmatpush.msra.mxu0 %v141
    %336 = vmatpush.msra.mxu0 %v137
    %337 = vmatpush.msra.mxu0 %v133
    %338 = vmatpush.msra.mxu0 %v129
    %339 = vmatpush.msra.mxu0 %v125
    %340 = vmatpush.msra.mxu0 %v121
    %341 = vmatpush.msra.mxu0 %v117
    %342 = vmatpush.msra.mxu0 %v113
    %343 = vmatpush.msra.mxu0 %v109
    %344 = vmatpush.msra.mxu0 %v105
    %345 = vmatmul.f32.gmra.mxu0 0.0
    %v346 = vpop.f32.mrf.mxu0
    %v347 = vadd.f32 0.0, %v346
    %348 = vdwg.mxu0
    %349 = vmatpush.msra.mxu0 %v166
    %350 = vmatpush.msra.mxu0 %v162
    %351 = vmatpush.msra.mxu0 %v158
    %352 = vmatpush.msra.mxu0 %v154
    %353 = vmatpush.msra.mxu0 %v150
    %354 = vmatpush.msra.mxu0 %v146
    %355 = vmatpush.msra.mxu0 %v142
    %356 = vmatpush.msra.mxu0 %v138
    %357 = vmatpush.msra.mxu0 %v134
    %358 = vmatpush.msra.mxu0 %v130
    %359 = vmatpush.msra.mxu0 %v126
    %360 = vmatpush.msra.mxu0 %v122
    %361 = vmatpush.msra.mxu0 %v118
    %362 = vmatpush.msra.mxu0 %v114
    %363 = vmatpush.msra.mxu0 %v110
    %364 = vmatpush.msra.mxu0 %v106
    %365 = vmatmul.f32.gmra.mxu0 0.0
    %v366 = vpop.f32.mrf.mxu0
    %v367 = vadd.f32 0.0, %v366
    %368 = vdwg.mxu0
    %v369 = vadd.f32 %v215, %v307
    %v370 = vadd.f32 %v238, %v327
    %v371 = vadd.f32 %v261, %v347
    %v372 = vadd.f32 %v284, %v367
    %v373 = vxor.u32 %v369, 2147483648
    %v374 = vmul.f32 %v373, 1.442695
    %v375 = vpow.pop %v374
    %v376 = vadd.f32 %v375, 1.0
    %v377 = vrcp.pop %v376
    %v378 = vmul.f32 %v376, %v377
    %v379 = vsub.f32 1.0, %v378
    %v380 = vmul.f32 %v377, %v379
    %v381 = vadd.f32 %v377, %v380
    %vm382 = vweird.f32 %v376
    %vm383 = vweird.f32 %v377
    %vm384 = vmor %vm382, %vm383
    %v385 = vsel %vm384, %v377, %v381
    %v386 = vand.u32 2147483647, %v376
    %vm387 = vcmp.eq.f32.partialorder %v386, 8.507059e+37
    %v388 = vand.u32 %v376, 2147483648
    %v389 = vor.u32 1.1754944e-38, %v388
    %v390 = vsel %vm387, %v389, %v385
    %v391 = vmul.f32 1.0, %v390
    %v392 = vxor.u32 %v370, 2147483648
    %v393 = vmul.f32 %v392, 1.442695
    %v394 = vpow.pop %v393
    %v395 = vadd.f32 %v394, 1.0
    %v396 = vrcp.pop %v395
    %v397 = vmul.f32 %v395, %v396
    %v398 = vsub.f32 1.0, %v397
    %v399 = vmul.f32 %v396, %v398
    %v400 = vadd.f32 %v396, %v399
    %vm401 = vweird.f32 %v395
    %vm402 = vweird.f32 %v396
    %vm403 = vmor %vm401, %vm402
    %v404 = vsel %vm403, %v396, %v400
    %v405 = vand.u32 2147483647, %v395
    %vm406 = vcmp.eq.f32.partialorder %v405, 8.507059e+37
    %v407 = vand.u32 %v395, 2147483648
    %v408 = vor.u32 1.1754944e-38, %v407
    %v409 = vsel %vm406, %v408, %v404
    %v410 = vmul.f32 1.0, %v409
    %v411 = vtanh.pop %v371
    %v412 = vxor.u32 %v372, 2147483648
    %v413 = vmul.f32 %v412, 1.442695
    %v414 = vpow.pop %v413
    %v415 = vadd.f32 %v414, 1.0
    %v416 = vrcp.pop %v415
    %v417 = vmul.f32 %v415, %v416
    %v418 = vsub.f32 1.0, %v417
    %v419 = vmul.f32 %v416, %v418
    %v420 = vadd.f32 %v416, %v419
    %vm421 = vweird.f32 %v415
    %vm422 = vweird.f32 %v416
    %vm423 = vmor %vm421, %vm422
    %v424 = vsel %vm423, %v416, %v420
    %v425 = vand.u32 2147483647, %v415
    %vm426 = vcmp.eq.f32.partialorder %v425, 8.507059e+37
    %v427 = vand.u32 %v415, 2147483648
    %v428 = vor.u32 1.1754944e-38, %v427
    %v429 = vsel %vm426, %v428, %v424
    %v430 = vmul.f32 1.0, %v429
    %v431 = vmul.f32 %v410, 0.0
    %v432 = vmul.f32 %v391, %v411
    %v433 = vadd.f32 %v431, %v432
    %v434 = vtanh.pop %v433
    %v435 = vmul.f32 %v430, %v434
    %436 = vst [vmem:[#allocation2] sm:$0x3] %v435
    %437 = vmatpush.msra.mxu0 %v163
    %438 = vmatpush.msra.mxu0 %v159
    %439 = vmatpush.msra.mxu0 %v155
    %440 = vmatpush.msra.mxu0 %v151
    %441 = vmatpush.msra.mxu0 %v147
    %442 = vmatpush.msra.mxu0 %v143
    %443 = vmatpush.msra.mxu0 %v139
    %444 = vmatpush.msra.mxu0 %v135
    %445 = vmatpush.msra.mxu0 %v131
    %446 = vmatpush.msra.mxu0 %v127
    %447 = vmatpush.msra.mxu0 %v123
    %448 = vmatpush.msra.mxu0 %v119
    %449 = vmatpush.msra.mxu0 %v115
    %450 = vmatpush.msra.mxu0 %v111
    %451 = vmatpush.msra.mxu0 %v107
    %452 = vmatpush.msra.mxu0 %v103
    %453 = vmatmul.f32.gmra.mxu0 %v435
    %v454 = vpop.f32.mrf.mxu0
    %v455 = vadd.f32 0.0, %v454
    %456 = vdwg.mxu0
    %457 = vmatpush.msra.mxu0 %v164
    %458 = vmatpush.msra.mxu0 %v160
    %459 = vmatpush.msra.mxu0 %v156
    %460 = vmatpush.msra.mxu0 %v152
    %461 = vmatpush.msra.mxu0 %v148
    %462 = vmatpush.msra.mxu0 %v144
    %463 = vmatpush.msra.mxu0 %v140
    %464 = vmatpush.msra.mxu0 %v136
    %465 = vmatpush.msra.mxu0 %v132
    %466 = vmatpush.msra.mxu0 %v128
    %467 = vmatpush.msra.mxu0 %v124
    %468 = vmatpush.msra.mxu0 %v120
    %469 = vmatpush.msra.mxu0 %v116
    %470 = vmatpush.msra.mxu0 %v112
    %471 = vmatpush.msra.mxu0 %v108
    %472 = vmatpush.msra.mxu0 %v104
    %473 = vmatmul.f32.gmra.mxu0 %v435
    %v474 = vpop.f32.mrf.mxu0
    %v475 = vadd.f32 0.0, %v474
    %476 = vdwg.mxu0
    %477 = vmatpush.msra.mxu0 %v165
    %478 = vmatpush.msra.mxu0 %v161
    %479 = vmatpush.msra.mxu0 %v157
    %480 = vmatpush.msra.mxu0 %v153
    %481 = vmatpush.msra.mxu0 %v149
    %482 = vmatpush.msra.mxu0 %v145
    %483 = vmatpush.msra.mxu0 %v141
    %484 = vmatpush.msra.mxu0 %v137
    %485 = vmatpush.msra.mxu0 %v133
    %486 = vmatpush.msra.mxu0 %v129
    %487 = vmatpush.msra.mxu0 %v125
    %488 = vmatpush.msra.mxu0 %v121
    %489 = vmatpush.msra.mxu0 %v117
    %490 = vmatpush.msra.mxu0 %v113
    %491 = vmatpush.msra.mxu0 %v109
    %492 = vmatpush.msra.mxu0 %v105
    %493 = vmatmul.f32.gmra.mxu0 %v435
    %v494 = vpop.f32.mrf.mxu0
    %v495 = vadd.f32 0.0, %v494
    %496 = vdwg.mxu0
    %497 = vmatpush.msra.mxu0 %v166
    %498 = vmatpush.msra.mxu0 %v162
    %499 = vmatpush.msra.mxu0 %v158
    %500 = vmatpush.msra.mxu0 %v154
    %501 = vmatpush.msra.mxu0 %v150
    %502 = vmatpush.msra.mxu0 %v146
    %503 = vmatpush.msra.mxu0 %v142
    %504 = vmatpush.msra.mxu0 %v138
    %505 = vmatpush.msra.mxu0 %v134
    %506 = vmatpush.msra.mxu0 %v130
    %507 = vmatpush.msra.mxu0 %v126
    %508 = vmatpush.msra.mxu0 %v122
    %509 = vmatpush.msra.mxu0 %v118
    %510 = vmatpush.msra.mxu0 %v114
    %511 = vmatpush.msra.mxu0 %v110
    %512 = vmatpush.msra.mxu0 %v106
    %513 = vmatmul.f32.gmra.mxu0 %v435
    %v514 = vpop.f32.mrf.mxu0
    %v515 = vadd.f32 0.0, %v514
    %516 = vdwg.mxu0
    %v521 = vrot.slane %v455, 6
    %v522 = vrot.slane %v475, 6
    %v523 = vrot.slane %v495, 6
    %v524 = vrot.slane %v515, 6
    %v529 = vadd.f32 %v215, %v521
    %v530 = vadd.f32 %v238, %v522
    %v531 = vadd.f32 %v261, %v523
    %v532 = vadd.f32 %v284, %v524
    %v533 = vxor.u32 %v529, 2147483648
    %v534 = vmul.f32 %v533, 1.442695
    %v535 = vpow.pop %v534
    %v536 = vadd.f32 %v535, 1.0
    %v537 = vrcp.pop %v536
    %v538 = vmul.f32 %v536, %v537
    %v539 = vsub.f32 1.0, %v538
    %v540 = vmul.f32 %v537, %v539
    %v541 = vadd.f32 %v537, %v540
    %vm542 = vweird.f32 %v536
    %vm543 = vweird.f32 %v537
    %vm544 = vmor %vm542, %vm543
    %v545 = vsel %vm544, %v537, %v541
    %v546 = vand.u32 2147483647, %v536
    %vm547 = vcmp.eq.f32.partialorder %v546, 8.507059e+37
    %v548 = vand.u32 %v536, 2147483648
    %v549 = vor.u32 1.1754944e-38, %v548
    %v550 = vsel %vm547, %v549, %v545
    %v551 = vmul.f32 1.0, %v550
    %v552 = vxor.u32 %v530, 2147483648
    %v553 = vmul.f32 %v552, 1.442695
    %v554 = vpow.pop %v553
    %v555 = vadd.f32 %v554, 1.0
    %v556 = vrcp.pop %v555
    %v557 = vmul.f32 %v555, %v556
    %v558 = vsub.f32 1.0, %v557
    %v559 = vmul.f32 %v556, %v558
    %v560 = vadd.f32 %v556, %v559
    %vm561 = vweird.f32 %v555
    %vm562 = vweird.f32 %v556
    %vm563 = vmor %vm561, %vm562
    %v564 = vsel %vm563, %v556, %v560
    %v565 = vand.u32 2147483647, %v555
    %vm566 = vcmp.eq.f32.partialorder %v565, 8.507059e+37
    %v567 = vand.u32 %v555, 2147483648
    %v568 = vor.u32 1.1754944e-38, %v567
    %v569 = vsel %vm566, %v568, %v564
    %v570 = vmul.f32 1.0, %v569
    %v571 = vtanh.pop %v531
    %v572 = vxor.u32 %v532, 2147483648
    %v573 = vmul.f32 %v572, 1.442695
    %v574 = vpow.pop %v573
    %v575 = vadd.f32 %v574, 1.0
    %v576 = vrcp.pop %v575
    %v577 = vmul.f32 %v575, %v576
    %v578 = vsub.f32 1.0, %v577
    %v579 = vmul.f32 %v576, %v578
    %v580 = vadd.f32 %v576, %v579
    %vm581 = vweird.f32 %v575
    %vm582 = vweird.f32 %v576
    %vm583 = vmor %vm581, %vm582
    %v584 = vsel %vm583, %v576, %v580
    %v585 = vand.u32 2147483647, %v575
    %vm586 = vcmp.eq.f32.partialorder %v585, 8.507059e+37
    %v587 = vand.u32 %v575, 2147483648
    %v588 = vor.u32 1.1754944e-38, %v587
    %v589 = vsel %vm586, %v588, %v584
    %v590 = vmul.f32 1.0, %v589
    %v592 = vrot.slane %v433, 6
    %v594 = vmul.f32 %v570, %v592
    %v595 = vmul.f32 %v551, %v571
    %v596 = vadd.f32 %v594, %v595
    %v597 = vtanh.pop %v596
    %v598 = vmul.f32 %v590, %v597
    %599 = vst [vmem:[#allocation2] sm:$0xc] %v598
    %v601 = vrot.slane %v598, 2
    %603 = vmatpush.msra.mxu0 %v163
    %604 = vmatpush.msra.mxu0 %v159
    %605 = vmatpush.msra.mxu0 %v155
    %606 = vmatpush.msra.mxu0 %v151
    %607 = vmatpush.msra.mxu0 %v147
    %608 = vmatpush.msra.mxu0 %v143
    %609 = vmatpush.msra.mxu0 %v139
    %610 = vmatpush.msra.mxu0 %v135
    %611 = vmatpush.msra.mxu0 %v131
    %612 = vmatpush.msra.mxu0 %v127
    %613 = vmatpush.msra.mxu0 %v123
    %614 = vmatpush.msra.mxu0 %v119
    %615 = vmatpush.msra.mxu0 %v115
    %616 = vmatpush.msra.mxu0 %v111
    %617 = vmatpush.msra.mxu0 %v107
    %618 = vmatpush.msra.mxu0 %v103
    %619 = vmatmul.f32.gmra.mxu0 %v601
    %v620 = vpop.f32.mrf.mxu0
    %v621 = vadd.f32 0.0, %v620
    %622 = vdwg.mxu0
    %623 = vmatpush.msra.mxu0 %v164
    %624 = vmatpush.msra.mxu0 %v160
    %625 = vmatpush.msra.mxu0 %v156
    %626 = vmatpush.msra.mxu0 %v152
    %627 = vmatpush.msra.mxu0 %v148
    %628 = vmatpush.msra.mxu0 %v144
    %629 = vmatpush.msra.mxu0 %v140
    %630 = vmatpush.msra.mxu0 %v136
    %631 = vmatpush.msra.mxu0 %v132
    %632 = vmatpush.msra.mxu0 %v128
    %633 = vmatpush.msra.mxu0 %v124
    %634 = vmatpush.msra.mxu0 %v120
    %635 = vmatpush.msra.mxu0 %v116
    %636 = vmatpush.msra.mxu0 %v112
    %637 = vmatpush.msra.mxu0 %v108
    %638 = vmatpush.msra.mxu0 %v104
    %639 = vmatmul.f32.gmra.mxu0 %v601
    %v640 = vpop.f32.mrf.mxu0
    %v641 = vadd.f32 0.0, %v640
    %642 = vdwg.mxu0
    %643 = vmatpush.msra.mxu0 %v165
    %644 = vmatpush.msra.mxu0 %v161
    %645 = vmatpush.msra.mxu0 %v157
    %646 = vmatpush.msra.mxu0 %v153
    %647 = vmatpush.msra.mxu0 %v149
    %648 = vmatpush.msra.mxu0 %v145
    %649 = vmatpush.msra.mxu0 %v141
    %650 = vmatpush.msra.mxu0 %v137
    %651 = vmatpush.msra.mxu0 %v133
    %652 = vmatpush.msra.mxu0 %v129
    %653 = vmatpush.msra.mxu0 %v125
    %654 = vmatpush.msra.mxu0 %v121
    %655 = vmatpush.msra.mxu0 %v117
    %656 = vmatpush.msra.mxu0 %v113
    %657 = vmatpush.msra.mxu0 %v109
    %658 = vmatpush.msra.mxu0 %v105
    %659 = vmatmul.f32.gmra.mxu0 %v601
    %v660 = vpop.f32.mrf.mxu0
    %v661 = vadd.f32 0.0, %v660
    %662 = vdwg.mxu0
    %663 = vmatpush.msra.mxu0 %v166
    %664 = vmatpush.msra.mxu0 %v162
    %665 = vmatpush.msra.mxu0 %v158
    %666 = vmatpush.msra.mxu0 %v154
    %667 = vmatpush.msra.mxu0 %v150
    %668 = vmatpush.msra.mxu0 %v146
    %669 = vmatpush.msra.mxu0 %v142
    %670 = vmatpush.msra.mxu0 %v138
    %671 = vmatpush.msra.mxu0 %v134
    %672 = vmatpush.msra.mxu0 %v130
    %673 = vmatpush.msra.mxu0 %v126
    %674 = vmatpush.msra.mxu0 %v122
    %675 = vmatpush.msra.mxu0 %v118
    %676 = vmatpush.msra.mxu0 %v114
    %677 = vmatpush.msra.mxu0 %v110
    %678 = vmatpush.msra.mxu0 %v106
    %679 = vmatmul.f32.gmra.mxu0 %v601
    %v680 = vpop.f32.mrf.mxu0
    %v681 = vadd.f32 0.0, %v680
    %682 = vdwg.mxu0
    %v687 = vrot.slane %v621, 4
    %v688 = vrot.slane %v641, 4
    %v689 = vrot.slane %v661, 4
    %v690 = vrot.slane %v681, 4
    %v695 = vadd.f32 %v215, %v687
    %v696 = vadd.f32 %v238, %v688
    %v697 = vadd.f32 %v261, %v689
    %v698 = vadd.f32 %v284, %v690
    %v699 = vxor.u32 %v695, 2147483648
    %v700 = vmul.f32 %v699, 1.442695
    %v701 = vpow.pop %v700
    %v702 = vadd.f32 %v701, 1.0
    %v703 = vrcp.pop %v702
    %v704 = vmul.f32 %v702, %v703
    %v705 = vsub.f32 1.0, %v704
    %v706 = vmul.f32 %v703, %v705
    %v707 = vadd.f32 %v703, %v706
    %vm708 = vweird.f32 %v702
    %vm709 = vweird.f32 %v703
    %vm710 = vmor %vm708, %vm709
    %v711 = vsel %vm710, %v703, %v707
    %v712 = vand.u32 2147483647, %v702
    %vm713 = vcmp.eq.f32.partialorder %v712, 8.507059e+37
    %v714 = vand.u32 %v702, 2147483648
    %v715 = vor.u32 1.1754944e-38, %v714
    %v716 = vsel %vm713, %v715, %v711
    %v717 = vmul.f32 1.0, %v716
    %v718 = vxor.u32 %v696, 2147483648
    %v719 = vmul.f32 %v718, 1.442695
    %v720 = vpow.pop %v719
    %v721 = vadd.f32 %v720, 1.0
    %v722 = vrcp.pop %v721
    %v723 = vmul.f32 %v721, %v722
    %v724 = vsub.f32 1.0, %v723
    %v725 = vmul.f32 %v722, %v724
    %v726 = vadd.f32 %v722, %v725
    %vm727 = vweird.f32 %v721
    %vm728 = vweird.f32 %v722
    %vm729 = vmor %vm727, %vm728
    %v730 = vsel %vm729, %v722, %v726
    %v731 = vand.u32 2147483647, %v721
    %vm732 = vcmp.eq.f32.partialorder %v731, 8.507059e+37
    %v733 = vand.u32 %v721, 2147483648
    %v734 = vor.u32 1.1754944e-38, %v733
    %v735 = vsel %vm732, %v734, %v730
    %v736 = vmul.f32 1.0, %v735
    %v737 = vtanh.pop %v697
    %v738 = vxor.u32 %v698, 2147483648
    %v739 = vmul.f32 %v738, 1.442695
    %v740 = vpow.pop %v739
    %v741 = vadd.f32 %v740, 1.0
    %v742 = vrcp.pop %v741
    %v743 = vmul.f32 %v741, %v742
    %v744 = vsub.f32 1.0, %v743
    %v745 = vmul.f32 %v742, %v744
    %v746 = vadd.f32 %v742, %v745
    %vm747 = vweird.f32 %v741
    %vm748 = vweird.f32 %v742
    %vm749 = vmor %vm747, %vm748
    %v750 = vsel %vm749, %v742, %v746
    %v751 = vand.u32 2147483647, %v741
    %vm752 = vcmp.eq.f32.partialorder %v751, 8.507059e+37
    %v753 = vand.u32 %v741, 2147483648
    %v754 = vor.u32 1.1754944e-38, %v753
    %v755 = vsel %vm752, %v754, %v750
    %v756 = vmul.f32 1.0, %v755
    %v758 = vrot.slane %v596, 6
    %v760 = vmul.f32 %v736, %v758
    %v761 = vmul.f32 %v717, %v737
    %v762 = vadd.f32 %v760, %v761
    %v763 = vtanh.pop %v762
    %v764 = vmul.f32 %v756, %v763
    %765 = vst [vmem:[#allocation2] sm:$0x30] %v764
    %v767 = vrot.slane %v764, 4
    %769 = vmatpush.msra.mxu0 %v163
    %770 = vmatpush.msra.mxu0 %v159
    %771 = vmatpush.msra.mxu0 %v155
    %772 = vmatpush.msra.mxu0 %v151
    %773 = vmatpush.msra.mxu0 %v147
    %774 = vmatpush.msra.mxu0 %v143
    %775 = vmatpush.msra.mxu0 %v139
    %776 = vmatpush.msra.mxu0 %v135
    %777 = vmatpush.msra.mxu0 %v131
    %778 = vmatpush.msra.mxu0 %v127
    %779 = vmatpush.msra.mxu0 %v123
    %780 = vmatpush.msra.mxu0 %v119
    %781 = vmatpush.msra.mxu0 %v115
    %782 = vmatpush.msra.mxu0 %v111
    %783 = vmatpush.msra.mxu0 %v107
    %784 = vmatpush.msra.mxu0 %v103
    %785 = vmatmul.f32.gmra.mxu0 %v767
    %v786 = vpop.f32.mrf.mxu0
    %v787 = vadd.f32 0.0, %v786
    %788 = vdwg.mxu0
    %789 = vmatpush.msra.mxu0 %v164
    %790 = vmatpush.msra.mxu0 %v160
    %791 = vmatpush.msra.mxu0 %v156
    %792 = vmatpush.msra.mxu0 %v152
    %793 = vmatpush.msra.mxu0 %v148
    %794 = vmatpush.msra.mxu0 %v144
    %795 = vmatpush.msra.mxu0 %v140
    %796 = vmatpush.msra.mxu0 %v136
    %797 = vmatpush.msra.mxu0 %v132
    %798 = vmatpush.msra.mxu0 %v128
    %799 = vmatpush.msra.mxu0 %v124
    %800 = vmatpush.msra.mxu0 %v120
    %801 = vmatpush.msra.mxu0 %v116
    %802 = vmatpush.msra.mxu0 %v112
    %803 = vmatpush.msra.mxu0 %v108
    %804 = vmatpush.msra.mxu0 %v104
    %805 = vmatmul.f32.gmra.mxu0 %v767
    %v806 = vpop.f32.mrf.mxu0
    %v807 = vadd.f32 0.0, %v806
    %808 = vdwg.mxu0
    %809 = vmatpush.msra.mxu0 %v165
    %810 = vmatpush.msra.mxu0 %v161
    %811 = vmatpush.msra.mxu0 %v157
    %812 = vmatpush.msra.mxu0 %v153
    %813 = vmatpush.msra.mxu0 %v149
    %814 = vmatpush.msra.mxu0 %v145
    %815 = vmatpush.msra.mxu0 %v141
    %816 = vmatpush.msra.mxu0 %v137
    %817 = vmatpush.msra.mxu0 %v133
    %818 = vmatpush.msra.mxu0 %v129
    %819 = vmatpush.msra.mxu0 %v125
    %820 = vmatpush.msra.mxu0 %v121
    %821 = vmatpush.msra.mxu0 %v117
    %822 = vmatpush.msra.mxu0 %v113
    %823 = vmatpush.msra.mxu0 %v109
    %824 = vmatpush.msra.mxu0 %v105
    %825 = vmatmul.f32.gmra.mxu0 %v767
    %v826 = vpop.f32.mrf.mxu0
    %v827 = vadd.f32 0.0, %v826
    %828 = vdwg.mxu0
    %829 = vmatpush.msra.mxu0 %v166
    %830 = vmatpush.msra.mxu0 %v162
    %831 = vmatpush.msra.mxu0 %v158
    %832 = vmatpush.msra.mxu0 %v154
    %833 = vmatpush.msra.mxu0 %v150
    %834 = vmatpush.msra.mxu0 %v146
    %835 = vmatpush.msra.mxu0 %v142
    %836 = vmatpush.msra.mxu0 %v138
    %837 = vmatpush.msra.mxu0 %v134
    %838 = vmatpush.msra.mxu0 %v130
    %839 = vmatpush.msra.mxu0 %v126
    %840 = vmatpush.msra.mxu0 %v122
    %841 = vmatpush.msra.mxu0 %v118
    %842 = vmatpush.msra.mxu0 %v114
    %843 = vmatpush.msra.mxu0 %v110
    %844 = vmatpush.msra.mxu0 %v106
    %845 = vmatmul.f32.gmra.mxu0 %v767
    %v846 = vpop.f32.mrf.mxu0
    %v847 = vadd.f32 0.0, %v846
    %848 = vdwg.mxu0
    %v853 = vrot.slane %v787, 2
    %v854 = vrot.slane %v807, 2
    %v855 = vrot.slane %v827, 2
    %v856 = vrot.slane %v847, 2
    %v861 = vadd.f32 %v215, %v853
    %v862 = vadd.f32 %v238, %v854
    %v863 = vadd.f32 %v261, %v855
    %v864 = vadd.f32 %v284, %v856
    %v865 = vxor.u32 %v861, 2147483648
    %v866 = vmul.f32 %v865, 1.442695
    %v867 = vpow.pop %v866
    %v868 = vadd.f32 %v867, 1.0
    %v869 = vrcp.pop %v868
    %v870 = vmul.f32 %v868, %v869
    %v871 = vsub.f32 1.0, %v870
    %v872 = vmul.f32 %v869, %v871
    %v873 = vadd.f32 %v869, %v872
    %vm874 = vweird.f32 %v868
    %vm875 = vweird.f32 %v869
    %vm876 = vmor %vm874, %vm875
    %v877 = vsel %vm876, %v869, %v873
    %v878 = vand.u32 2147483647, %v868
    %vm879 = vcmp.eq.f32.partialorder %v878, 8.507059e+37
    %v880 = vand.u32 %v868, 2147483648
    %v881 = vor.u32 1.1754944e-38, %v880
    %v882 = vsel %vm879, %v881, %v877
    %v883 = vmul.f32 1.0, %v882
    %v884 = vxor.u32 %v862, 2147483648
    %v885 = vmul.f32 %v884, 1.442695
    %v886 = vpow.pop %v885
    %v887 = vadd.f32 %v886, 1.0
    %v888 = vrcp.pop %v887
    %v889 = vmul.f32 %v887, %v888
    %v890 = vsub.f32 1.0, %v889
    %v891 = vmul.f32 %v888, %v890
    %v892 = vadd.f32 %v888, %v891
    %vm893 = vweird.f32 %v887
    %vm894 = vweird.f32 %v888
    %vm895 = vmor %vm893, %vm894
    %v896 = vsel %vm895, %v888, %v892
    %v897 = vand.u32 2147483647, %v887
    %vm898 = vcmp.eq.f32.partialorder %v897, 8.507059e+37
    %v899 = vand.u32 %v887, 2147483648
    %v900 = vor.u32 1.1754944e-38, %v899
    %v901 = vsel %vm898, %v900, %v896
    %v902 = vmul.f32 1.0, %v901
    %v903 = vtanh.pop %v863
    %v904 = vxor.u32 %v864, 2147483648
    %v905 = vmul.f32 %v904, 1.442695
    %v906 = vpow.pop %v905
    %v907 = vadd.f32 %v906, 1.0
    %v908 = vrcp.pop %v907
    %v909 = vmul.f32 %v907, %v908
    %v910 = vsub.f32 1.0, %v909
    %v911 = vmul.f32 %v908, %v910
    %v912 = vadd.f32 %v908, %v911
    %vm913 = vweird.f32 %v907
    %vm914 = vweird.f32 %v908
    %vm915 = vmor %vm913, %vm914
    %v916 = vsel %vm915, %v908, %v912
    %v917 = vand.u32 2147483647, %v907
    %vm918 = vcmp.eq.f32.partialorder %v917, 8.507059e+37
    %v919 = vand.u32 %v907, 2147483648
    %v920 = vor.u32 1.1754944e-38, %v919
    %v921 = vsel %vm918, %v920, %v916
    %v922 = vmul.f32 1.0, %v921
    %v924 = vrot.slane %v762, 6
    %v926 = vmul.f32 %v902, %v924
    %v927 = vmul.f32 %v883, %v903
    %v928 = vadd.f32 %v926, %v927
    %v929 = vtanh.pop %v928
    %v930 = vmul.f32 %v922, %v929
    %931 = vst [vmem:[#allocation2] sm:$0xc0] %v930
    %v933 = vrot.slane %v930, 6
    %935 = vmatpush.msra.mxu0 %v163
    %936 = vmatpush.msra.mxu0 %v159
    %937 = vmatpush.msra.mxu0 %v155
    %938 = vmatpush.msra.mxu0 %v151
    %939 = vmatpush.msra.mxu0 %v147
    %940 = vmatpush.msra.mxu0 %v143
    %941 = vmatpush.msra.mxu0 %v139
    %942 = vmatpush.msra.mxu0 %v135
    %943 = vmatpush.msra.mxu0 %v131
    %944 = vmatpush.msra.mxu0 %v127
    %945 = vmatpush.msra.mxu0 %v123
    %946 = vmatpush.msra.mxu0 %v119
    %947 = vmatpush.msra.mxu0 %v115
    %948 = vmatpush.msra.mxu0 %v111
    %949 = vmatpush.msra.mxu0 %v107
    %950 = vmatpush.msra.mxu0 %v103
    %951 = vmatmul.f32.gmra.mxu0 %v933
    %v952 = vpop.f32.mrf.mxu0
    %v953 = vadd.f32 0.0, %v952
    %954 = vdwg.mxu0
    %955 = vmatpush.msra.mxu0 %v164
    %956 = vmatpush.msra.mxu0 %v160
    %957 = vmatpush.msra.mxu0 %v156
    %958 = vmatpush.msra.mxu0 %v152
    %959 = vmatpush.msra.mxu0 %v148
    %960 = vmatpush.msra.mxu0 %v144
    %961 = vmatpush.msra.mxu0 %v140
    %962 = vmatpush.msra.mxu0 %v136
    %963 = vmatpush.msra.mxu0 %v132
    %964 = vmatpush.msra.mxu0 %v128
    %965 = vmatpush.msra.mxu0 %v124
    %966 = vmatpush.msra.mxu0 %v120
    %967 = vmatpush.msra.mxu0 %v116
    %968 = vmatpush.msra.mxu0 %v112
    %969 = vmatpush.msra.mxu0 %v108
    %970 = vmatpush.msra.mxu0 %v104
    %971 = vmatmul.f32.gmra.mxu0 %v933
    %v972 = vpop.f32.mrf.mxu0
    %v973 = vadd.f32 0.0, %v972
    %974 = vdwg.mxu0
    %975 = vmatpush.msra.mxu0 %v165
    %976 = vmatpush.msra.mxu0 %v161
    %977 = vmatpush.msra.mxu0 %v157
    %978 = vmatpush.msra.mxu0 %v153
    %979 = vmatpush.msra.mxu0 %v149
    %980 = vmatpush.msra.mxu0 %v145
    %981 = vmatpush.msra.mxu0 %v141
    %982 = vmatpush.msra.mxu0 %v137
    %983 = vmatpush.msra.mxu0 %v133
    %984 = vmatpush.msra.mxu0 %v129
    %985 = vmatpush.msra.mxu0 %v125
    %986 = vmatpush.msra.mxu0 %v121
    %987 = vmatpush.msra.mxu0 %v117
    %988 = vmatpush.msra.mxu0 %v113
    %989 = vmatpush.msra.mxu0 %v109
    %990 = vmatpush.msra.mxu0 %v105
    %991 = vmatmul.f32.gmra.mxu0 %v933
    %v992 = vpop.f32.mrf.mxu0
    %v993 = vadd.f32 0.0, %v992
    %994 = vdwg.mxu0
    %995 = vmatpush.msra.mxu0 %v166
    %996 = vmatpush.msra.mxu0 %v162
    %997 = vmatpush.msra.mxu0 %v158
    %998 = vmatpush.msra.mxu0 %v154
    %999 = vmatpush.msra.mxu0 %v150
    %1000 = vmatpush.msra.mxu0 %v146
    %1001 = vmatpush.msra.mxu0 %v142
    %1002 = vmatpush.msra.mxu0 %v138
    %1003 = vmatpush.msra.mxu0 %v134
    %1004 = vmatpush.msra.mxu0 %v130
    %1005 = vmatpush.msra.mxu0 %v126
    %1006 = vmatpush.msra.mxu0 %v122
    %1007 = vmatpush.msra.mxu0 %v118
    %1008 = vmatpush.msra.mxu0 %v114
    %1009 = vmatpush.msra.mxu0 %v110
    %1010 = vmatpush.msra.mxu0 %v106
    %1011 = vmatmul.f32.gmra.mxu0 %v933
    %v1012 = vpop.f32.mrf.mxu0
    %v1013 = vadd.f32 0.0, %v1012
    %1014 = vdwg.mxu0
    %v1015 = vadd.f32 %v218, %v953
    %v1016 = vadd.f32 %v241, %v973
    %v1017 = vadd.f32 %v264, %v993
    %v1018 = vadd.f32 %v287, %v1013
    %v1019 = vxor.u32 %v1015, 2147483648
    %v1020 = vmul.f32 %v1019, 1.442695
    %v1021 = vpow.pop %v1020
    %v1022 = vadd.f32 %v1021, 1.0
    %v1023 = vrcp.pop %v1022
    %v1024 = vmul.f32 %v1022, %v1023
    %v1025 = vsub.f32 1.0, %v1024
    %v1026 = vmul.f32 %v1023, %v1025
    %v1027 = vadd.f32 %v1023, %v1026
    %vm1028 = vweird.f32 %v1022
    %vm1029 = vweird.f32 %v1023
    %vm1030 = vmor %vm1028, %vm1029
    %v1031 = vsel %vm1030, %v1023, %v1027
    %v1032 = vand.u32 2147483647, %v1022
    %vm1033 = vcmp.eq.f32.partialorder %v1032, 8.507059e+37
    %v1034 = vand.u32 %v1022, 2147483648
    %v1035 = vor.u32 1.1754944e-38, %v1034
    %v1036 = vsel %vm1033, %v1035, %v1031
    %v1037 = vmul.f32 1.0, %v1036
    %v1038 = vxor.u32 %v1016, 2147483648
    %v1039 = vmul.f32 %v1038, 1.442695
    %v1040 = vpow.pop %v1039
    %v1041 = vadd.f32 %v1040, 1.0
    %v1042 = vrcp.pop %v1041
    %v1043 = vmul.f32 %v1041, %v1042
    %v1044 = vsub.f32 1.0, %v1043
    %v1045 = vmul.f32 %v1042, %v1044
    %v1046 = vadd.f32 %v1042, %v1045
    %vm1047 = vweird.f32 %v1041
    %vm1048 = vweird.f32 %v1042
    %vm1049 = vmor %vm1047, %vm1048
    %v1050 = vsel %vm1049, %v1042, %v1046
    %v1051 = vand.u32 2147483647, %v1041
    %vm1052 = vcmp.eq.f32.partialorder %v1051, 8.507059e+37
    %v1053 = vand.u32 %v1041, 2147483648
    %v1054 = vor.u32 1.1754944e-38, %v1053
    %v1055 = vsel %vm1052, %v1054, %v1050
    %v1056 = vmul.f32 1.0, %v1055
    %v1057 = vtanh.pop %v1017
    %v1058 = vxor.u32 %v1018, 2147483648
    %v1059 = vmul.f32 %v1058, 1.442695
    %v1060 = vpow.pop %v1059
    %v1061 = vadd.f32 %v1060, 1.0
    %v1062 = vrcp.pop %v1061
    %v1063 = vmul.f32 %v1061, %v1062
    %v1064 = vsub.f32 1.0, %v1063
    %v1065 = vmul.f32 %v1062, %v1064
    %v1066 = vadd.f32 %v1062, %v1065
    %vm1067 = vweird.f32 %v1061
    %vm1068 = vweird.f32 %v1062
    %vm1069 = vmor %vm1067, %vm1068
    %v1070 = vsel %vm1069, %v1062, %v1066
    %v1071 = vand.u32 2147483647, %v1061
    %vm1072 = vcmp.eq.f32.partialorder %v1071, 8.507059e+37
    %v1073 = vand.u32 %v1061, 2147483648
    %v1074 = vor.u32 1.1754944e-38, %v1073
    %v1075 = vsel %vm1072, %v1074, %v1070
    %v1076 = vmul.f32 1.0, %v1075
    %v1078 = vrot.slane %v928, 6
    %v1080 = vmul.f32 %v1056, %v1078
    %v1081 = vmul.f32 %v1037, %v1057
    %v1082 = vadd.f32 %v1080, %v1081
    %v1083 = vtanh.pop %v1082
    %v1084 = vmul.f32 %v1076, %v1083
    %1085 = vst [vmem:[#allocation2 + $0x8] sm:$0x3] %v1084
    %1086 = vmatpush.msra.mxu0 %v163
    %1087 = vmatpush.msra.mxu0 %v159
    %1088 = vmatpush.msra.mxu0 %v155
    %1089 = vmatpush.msra.mxu0 %v151
    %1090 = vmatpush.msra.mxu0 %v147
    %1091 = vmatpush.msra.mxu0 %v143
    %1092 = vmatpush.msra.mxu0 %v139
    %1093 = vmatpush.msra.mxu0 %v135
    %1094 = vmatpush.msra.mxu0 %v131
    %1095 = vmatpush.msra.mxu0 %v127
    %1096 = vmatpush.msra.mxu0 %v123
    %1097 = vmatpush.msra.mxu0 %v119
    %1098 = vmatpush.msra.mxu0 %v115
    %1099 = vmatpush.msra.mxu0 %v111
    %1100 = vmatpush.msra.mxu0 %v107
    %1101 = vmatpush.msra.mxu0 %v103
    %1102 = vmatmul.f32.gmra.mxu0 %v1084
    %v1103 = vpop.f32.mrf.mxu0
    %v1104 = vadd.f32 0.0, %v1103
    %1105 = vdwg.mxu0
    %1106 = vmatpush.msra.mxu0 %v164
    %1107 = vmatpush.msra.mxu0 %v160
    %1108 = vmatpush.msra.mxu0 %v156
    %1109 = vmatpush.msra.mxu0 %v152
    %1110 = vmatpush.msra.mxu0 %v148
    %1111 = vmatpush.msra.mxu0 %v144
    %1112 = vmatpush.msra.mxu0 %v140
    %1113 = vmatpush.msra.mxu0 %v136
    %1114 = vmatpush.msra.mxu0 %v132
    %1115 = vmatpush.msra.mxu0 %v128
    %1116 = vmatpush.msra.mxu0 %v124
    %1117 = vmatpush.msra.mxu0 %v120
    %1118 = vmatpush.msra.mxu0 %v116
    %1119 = vmatpush.msra.mxu0 %v112
    %1120 = vmatpush.msra.mxu0 %v108
    %1121 = vmatpush.msra.mxu0 %v104
    %1122 = vmatmul.f32.gmra.mxu0 %v1084
    %v1123 = vpop.f32.mrf.mxu0
    %v1124 = vadd.f32 0.0, %v1123
    %1125 = vdwg.mxu0
    %1126 = vmatpush.msra.mxu0 %v165
    %1127 = vmatpush.msra.mxu0 %v161
    %1128 = vmatpush.msra.mxu0 %v157
    %1129 = vmatpush.msra.mxu0 %v153
    %1130 = vmatpush.msra.mxu0 %v149
    %1131 = vmatpush.msra.mxu0 %v145
    %1132 = vmatpush.msra.mxu0 %v141
    %1133 = vmatpush.msra.mxu0 %v137
    %1134 = vmatpush.msra.mxu0 %v133
    %1135 = vmatpush.msra.mxu0 %v129
    %1136 = vmatpush.msra.mxu0 %v125
    %1137 = vmatpush.msra.mxu0 %v121
    %1138 = vmatpush.msra.mxu0 %v117
    %1139 = vmatpush.msra.mxu0 %v113
    %1140 = vmatpush.msra.mxu0 %v109
    %1141 = vmatpush.msra.mxu0 %v105
    %1142 = vmatmul.f32.gmra.mxu0 %v1084
    %v1143 = vpop.f32.mrf.mxu0
    %v1144 = vadd.f32 0.0, %v1143
    %1145 = vdwg.mxu0
    %1146 = vmatpush.msra.mxu0 %v166
    %1147 = vmatpush.msra.mxu0 %v162
    %1148 = vmatpush.msra.mxu0 %v158
    %1149 = vmatpush.msra.mxu0 %v154
    %1150 = vmatpush.msra.mxu0 %v150
    %1151 = vmatpush.msra.mxu0 %v146
    %1152 = vmatpush.msra.mxu0 %v142
    %1153 = vmatpush.msra.mxu0 %v138
    %1154 = vmatpush.msra.mxu0 %v134
    %1155 = vmatpush.msra.mxu0 %v130
    %1156 = vmatpush.msra.mxu0 %v126
    %1157 = vmatpush.msra.mxu0 %v122
    %1158 = vmatpush.msra.mxu0 %v118
    %1159 = vmatpush.msra.mxu0 %v114
    %1160 = vmatpush.msra.mxu0 %v110
    %1161 = vmatpush.msra.mxu0 %v106
    %1162 = vmatmul.f32.gmra.mxu0 %v1084
    %v1163 = vpop.f32.mrf.mxu0
    %v1164 = vadd.f32 0.0, %v1163
    %1165 = vdwg.mxu0
    %v1170 = vrot.slane %v1104, 6
    %v1171 = vrot.slane %v1124, 6
    %v1172 = vrot.slane %v1144, 6
    %v1173 = vrot.slane %v1164, 6
    %v1178 = vadd.f32 %v218, %v1170
    %v1179 = vadd.f32 %v241, %v1171
    %v1180 = vadd.f32 %v264, %v1172
    %v1181 = vadd.f32 %v287, %v1173
    %v1182 = vxor.u32 %v1178, 2147483648
    %v1183 = vmul.f32 %v1182, 1.442695
    %v1184 = vpow.pop %v1183
    %v1185 = vadd.f32 %v1184, 1.0
    %v1186 = vrcp.pop %v1185
    %v1187 = vmul.f32 %v1185, %v1186
    %v1188 = vsub.f32 1.0, %v1187
    %v1189 = vmul.f32 %v1186, %v1188
    %v1190 = vadd.f32 %v1186, %v1189
    %vm1191 = vweird.f32 %v1185
    %vm1192 = vweird.f32 %v1186
    %vm1193 = vmor %vm1191, %vm1192
    %v1194 = vsel %vm1193, %v1186, %v1190
    %v1195 = vand.u32 2147483647, %v1185
    %vm1196 = vcmp.eq.f32.partialorder %v1195, 8.507059e+37
    %v1197 = vand.u32 %v1185, 2147483648
    %v1198 = vor.u32 1.1754944e-38, %v1197
    %v1199 = vsel %vm1196, %v1198, %v1194
    %v1200 = vmul.f32 1.0, %v1199
    %v1201 = vxor.u32 %v1179, 2147483648
    %v1202 = vmul.f32 %v1201, 1.442695
    %v1203 = vpow.pop %v1202
    %v1204 = vadd.f32 %v1203, 1.0
    %v1205 = vrcp.pop %v1204
    %v1206 = vmul.f32 %v1204, %v1205
    %v1207 = vsub.f32 1.0, %v1206
    %v1208 = vmul.f32 %v1205, %v1207
    %v1209 = vadd.f32 %v1205, %v1208
    %vm1210 = vweird.f32 %v1204
    %vm1211 = vweird.f32 %v1205
    %vm1212 = vmor %vm1210, %vm1211
    %v1213 = vsel %vm1212, %v1205, %v1209
    %v1214 = vand.u32 2147483647, %v1204
    %vm1215 = vcmp.eq.f32.partialorder %v1214, 8.507059e+37
    %v1216 = vand.u32 %v1204, 2147483648
    %v1217 = vor.u32 1.1754944e-38, %v1216
    %v1218 = vsel %vm1215, %v1217, %v1213
    %v1219 = vmul.f32 1.0, %v1218
    %v1220 = vtanh.pop %v1180
    %v1221 = vxor.u32 %v1181, 2147483648
    %v1222 = vmul.f32 %v1221, 1.442695
    %v1223 = vpow.pop %v1222
    %v1224 = vadd.f32 %v1223, 1.0
    %v1225 = vrcp.pop %v1224
    %v1226 = vmul.f32 %v1224, %v1225
    %v1227 = vsub.f32 1.0, %v1226
    %v1228 = vmul.f32 %v1225, %v1227
    %v1229 = vadd.f32 %v1225, %v1228
    %vm1230 = vweird.f32 %v1224
    %vm1231 = vweird.f32 %v1225
    %vm1232 = vmor %vm1230, %vm1231
    %v1233 = vsel %vm1232, %v1225, %v1229
    %v1234 = vand.u32 2147483647, %v1224
    %vm1235 = vcmp.eq.f32.partialorder %v1234, 8.507059e+37
    %v1236 = vand.u32 %v1224, 2147483648
    %v1237 = vor.u32 1.1754944e-38, %v1236
    %v1238 = vsel %vm1235, %v1237, %v1233
    %v1239 = vmul.f32 1.0, %v1238
    %v1241 = vrot.slane %v1082, 6
    %v1243 = vmul.f32 %v1219, %v1241
    %v1244 = vmul.f32 %v1200, %v1220
    %v1245 = vadd.f32 %v1243, %v1244
    %v1246 = vtanh.pop %v1245
    %v1247 = vmul.f32 %v1239, %v1246
    %1248 = vst [vmem:[#allocation2 + $0x8] sm:$0xc] %v1247
    %v1250 = vrot.slane %v1247, 2
    %1252 = vmatpush.msra.mxu0 %v163
    %1253 = vmatpush.msra.mxu0 %v159
    %1254 = vmatpush.msra.mxu0 %v155
    %1255 = vmatpush.msra.mxu0 %v151
    %1256 = vmatpush.msra.mxu0 %v147
    %1257 = vmatpush.msra.mxu0 %v143
    %1258 = vmatpush.msra.mxu0 %v139
    %1259 = vmatpush.msra.mxu0 %v135
    %1260 = vmatpush.msra.mxu0 %v131
    %1261 = vmatpush.msra.mxu0 %v127
    %1262 = vmatpush.msra.mxu0 %v123
    %1263 = vmatpush.msra.mxu0 %v119
    %1264 = vmatpush.msra.mxu0 %v115
    %1265 = vmatpush.msra.mxu0 %v111
    %1266 = vmatpush.msra.mxu0 %v107
    %1267 = vmatpush.msra.mxu0 %v103
    %1268 = vmatmul.f32.gmra.mxu0 %v1250
    %v1269 = vpop.f32.mrf.mxu0
    %v1270 = vadd.f32 0.0, %v1269
    %1271 = vdwg.mxu0
    %1272 = vmatpush.msra.mxu0 %v164
    %1273 = vmatpush.msra.mxu0 %v160
    %1274 = vmatpush.msra.mxu0 %v156
    %1275 = vmatpush.msra.mxu0 %v152
    %1276 = vmatpush.msra.mxu0 %v148
    %1277 = vmatpush.msra.mxu0 %v144
    %1278 = vmatpush.msra.mxu0 %v140
    %1279 = vmatpush.msra.mxu0 %v136
    %1280 = vmatpush.msra.mxu0 %v132
    %1281 = vmatpush.msra.mxu0 %v128
    %1282 = vmatpush.msra.mxu0 %v124
    %1283 = vmatpush.msra.mxu0 %v120
    %1284 = vmatpush.msra.mxu0 %v116
    %1285 = vmatpush.msra.mxu0 %v112
    %1286 = vmatpush.msra.mxu0 %v108
    %1287 = vmatpush.msra.mxu0 %v104
    %1288 = vmatmul.f32.gmra.mxu0 %v1250
    %v1289 = vpop.f32.mrf.mxu0
    %v1290 = vadd.f32 0.0, %v1289
    %1291 = vdwg.mxu0
    %1292 = vmatpush.msra.mxu0 %v165
    %1293 = vmatpush.msra.mxu0 %v161
    %1294 = vmatpush.msra.mxu0 %v157
    %1295 = vmatpush.msra.mxu0 %v153
    %1296 = vmatpush.msra.mxu0 %v149
    %1297 = vmatpush.msra.mxu0 %v145
    %1298 = vmatpush.msra.mxu0 %v141
    %1299 = vmatpush.msra.mxu0 %v137
    %1300 = vmatpush.msra.mxu0 %v133
    %1301 = vmatpush.msra.mxu0 %v129
    %1302 = vmatpush.msra.mxu0 %v125
    %1303 = vmatpush.msra.mxu0 %v121
    %1304 = vmatpush.msra.mxu0 %v117
    %1305 = vmatpush.msra.mxu0 %v113
    %1306 = vmatpush.msra.mxu0 %v109
    %1307 = vmatpush.msra.mxu0 %v105
    %1308 = vmatmul.f32.gmra.mxu0 %v1250
    %v1309 = vpop.f32.mrf.mxu0
    %v1310 = vadd.f32 0.0, %v1309
    %1311 = vdwg.mxu0
    %1312 = vmatpush.msra.mxu0 %v166
    %1313 = vmatpush.msra.mxu0 %v162
    %1314 = vmatpush.msra.mxu0 %v158
    %1315 = vmatpush.msra.mxu0 %v154
    %1316 = vmatpush.msra.mxu0 %v150
    %1317 = vmatpush.msra.mxu0 %v146
    %1318 = vmatpush.msra.mxu0 %v142
    %1319 = vmatpush.msra.mxu0 %v138
    %1320 = vmatpush.msra.mxu0 %v134
    %1321 = vmatpush.msra.mxu0 %v130
    %1322 = vmatpush.msra.mxu0 %v126
    %1323 = vmatpush.msra.mxu0 %v122
    %1324 = vmatpush.msra.mxu0 %v118
    %1325 = vmatpush.msra.mxu0 %v114
    %1326 = vmatpush.msra.mxu0 %v110
    %1327 = vmatpush.msra.mxu0 %v106
    %1328 = vmatmul.f32.gmra.mxu0 %v1250
    %v1329 = vpop.f32.mrf.mxu0
    %v1330 = vadd.f32 0.0, %v1329
    %1331 = vdwg.mxu0
    %v1336 = vrot.slane %v1270, 4
    %v1337 = vrot.slane %v1290, 4
    %v1338 = vrot.slane %v1310, 4
    %v1339 = vrot.slane %v1330, 4
    %v1344 = vadd.f32 %v218, %v1336
    %v1345 = vadd.f32 %v241, %v1337
    %v1346 = vadd.f32 %v264, %v1338
    %v1347 = vadd.f32 %v287, %v1339
    %v1348 = vxor.u32 %v1344, 2147483648
    %v1349 = vmul.f32 %v1348, 1.442695
    %v1350 = vpow.pop %v1349
    %v1351 = vadd.f32 %v1350, 1.0
    %v1352 = vrcp.pop %v1351
    %v1353 = vmul.f32 %v1351, %v1352
    %v1354 = vsub.f32 1.0, %v1353
    %v1355 = vmul.f32 %v1352, %v1354
    %v1356 = vadd.f32 %v1352, %v1355
    %vm1357 = vweird.f32 %v1351
    %vm1358 = vweird.f32 %v1352
    %vm1359 = vmor %vm1357, %vm1358
    %v1360 = vsel %vm1359, %v1352, %v1356
    %v1361 = vand.u32 2147483647, %v1351
    %vm1362 = vcmp.eq.f32.partialorder %v1361, 8.507059e+37
    %v1363 = vand.u32 %v1351, 2147483648
    %v1364 = vor.u32 1.1754944e-38, %v1363
    %v1365 = vsel %vm1362, %v1364, %v1360
    %v1366 = vmul.f32 1.0, %v1365
    %v1367 = vxor.u32 %v1345, 2147483648
    %v1368 = vmul.f32 %v1367, 1.442695
    %v1369 = vpow.pop %v1368
    %v1370 = vadd.f32 %v1369, 1.0
    %v1371 = vrcp.pop %v1370
    %v1372 = vmul.f32 %v1370, %v1371
    %v1373 = vsub.f32 1.0, %v1372
    %v1374 = vmul.f32 %v1371, %v1373
    %v1375 = vadd.f32 %v1371, %v1374
    %vm1376 = vweird.f32 %v1370
    %vm1377 = vweird.f32 %v1371
    %vm1378 = vmor %vm1376, %vm1377
    %v1379 = vsel %vm1378, %v1371, %v1375
    %v1380 = vand.u32 2147483647, %v1370
    %vm1381 = vcmp.eq.f32.partialorder %v1380, 8.507059e+37
    %v1382 = vand.u32 %v1370, 2147483648
    %v1383 = vor.u32 1.1754944e-38, %v1382
    %v1384 = vsel %vm1381, %v1383, %v1379
    %v1385 = vmul.f32 1.0, %v1384
    %v1386 = vtanh.pop %v1346
    %v1387 = vxor.u32 %v1347, 2147483648
    %v1388 = vmul.f32 %v1387, 1.442695
    %v1389 = vpow.pop %v1388
    %v1390 = vadd.f32 %v1389, 1.0
    %v1391 = vrcp.pop %v1390
    %v1392 = vmul.f32 %v1390, %v1391
    %v1393 = vsub.f32 1.0, %v1392
    %v1394 = vmul.f32 %v1391, %v1393
    %v1395 = vadd.f32 %v1391, %v1394
    %vm1396 = vweird.f32 %v1390
    %vm1397 = vweird.f32 %v1391
    %vm1398 = vmor %vm1396, %vm1397
    %v1399 = vsel %vm1398, %v1391, %v1395
    %v1400 = vand.u32 2147483647, %v1390
    %vm1401 = vcmp.eq.f32.partialorder %v1400, 8.507059e+37
    %v1402 = vand.u32 %v1390, 2147483648
    %v1403 = vor.u32 1.1754944e-38, %v1402
    %v1404 = vsel %vm1401, %v1403, %v1399
    %v1405 = vmul.f32 1.0, %v1404
    %v1407 = vrot.slane %v1245, 6
    %v1409 = vmul.f32 %v1385, %v1407
    %v1410 = vmul.f32 %v1366, %v1386
    %v1411 = vadd.f32 %v1409, %v1410
    %v1412 = vtanh.pop %v1411
    %v1413 = vmul.f32 %v1405, %v1412
    %1414 = vst [vmem:[#allocation2 + $0x8] sm:$0x30] %v1413
    %v1416 = vrot.slane %v1413, 4
    %1418 = vmatpush.msra.mxu0 %v163
    %1419 = vmatpush.msra.mxu0 %v159
    %1420 = vmatpush.msra.mxu0 %v155
    %1421 = vmatpush.msra.mxu0 %v151
    %1422 = vmatpush.msra.mxu0 %v147
    %1423 = vmatpush.msra.mxu0 %v143
    %1424 = vmatpush.msra.mxu0 %v139
    %1425 = vmatpush.msra.mxu0 %v135
    %1426 = vmatpush.msra.mxu0 %v131
    %1427 = vmatpush.msra.mxu0 %v127
    %1428 = vmatpush.msra.mxu0 %v123
    %1429 = vmatpush.msra.mxu0 %v119
    %1430 = vmatpush.msra.mxu0 %v115
    %1431 = vmatpush.msra.mxu0 %v111
    %1432 = vmatpush.msra.mxu0 %v107
    %1433 = vmatpush.msra.mxu0 %v103
    %1434 = vmatmul.f32.gmra.mxu0 %v1416
    %v1435 = vpop.f32.mrf.mxu0
    %v1436 = vadd.f32 0.0, %v1435
    %1437 = vdwg.mxu0
    %1438 = vmatpush.msra.mxu0 %v164
    %1439 = vmatpush.msra.mxu0 %v160
    %1440 = vmatpush.msra.mxu0 %v156
    %1441 = vmatpush.msra.mxu0 %v152
    %1442 = vmatpush.msra.mxu0 %v148
    %1443 = vmatpush.msra.mxu0 %v144
    %1444 = vmatpush.msra.mxu0 %v140
    %1445 = vmatpush.msra.mxu0 %v136
    %1446 = vmatpush.msra.mxu0 %v132
    %1447 = vmatpush.msra.mxu0 %v128
    %1448 = vmatpush.msra.mxu0 %v124
    %1449 = vmatpush.msra.mxu0 %v120
    %1450 = vmatpush.msra.mxu0 %v116
    %1451 = vmatpush.msra.mxu0 %v112
    %1452 = vmatpush.msra.mxu0 %v108
    %1453 = vmatpush.msra.mxu0 %v104
    %1454 = vmatmul.f32.gmra.mxu0 %v1416
    %v1455 = vpop.f32.mrf.mxu0
    %v1456 = vadd.f32 0.0, %v1455
    %1457 = vdwg.mxu0
    %1458 = vmatpush.msra.mxu0 %v165
    %1459 = vmatpush.msra.mxu0 %v161
    %1460 = vmatpush.msra.mxu0 %v157
    %1461 = vmatpush.msra.mxu0 %v153
    %1462 = vmatpush.msra.mxu0 %v149
    %1463 = vmatpush.msra.mxu0 %v145
    %1464 = vmatpush.msra.mxu0 %v141
    %1465 = vmatpush.msra.mxu0 %v137
    %1466 = vmatpush.msra.mxu0 %v133
    %1467 = vmatpush.msra.mxu0 %v129
    %1468 = vmatpush.msra.mxu0 %v125
    %1469 = vmatpush.msra.mxu0 %v121
    %1470 = vmatpush.msra.mxu0 %v117
    %1471 = vmatpush.msra.mxu0 %v113
    %1472 = vmatpush.msra.mxu0 %v109
    %1473 = vmatpush.msra.mxu0 %v105
    %1474 = vmatmul.f32.gmra.mxu0 %v1416
    %v1475 = vpop.f32.mrf.mxu0
    %v1476 = vadd.f32 0.0, %v1475
    %1477 = vdwg.mxu0
    %1478 = vmatpush.msra.mxu0 %v166
    %1479 = vmatpush.msra.mxu0 %v162
    %1480 = vmatpush.msra.mxu0 %v158
    %1481 = vmatpush.msra.mxu0 %v154
    %1482 = vmatpush.msra.mxu0 %v150
    %1483 = vmatpush.msra.mxu0 %v146
    %1484 = vmatpush.msra.mxu0 %v142
    %1485 = vmatpush.msra.mxu0 %v138
    %1486 = vmatpush.msra.mxu0 %v134
    %1487 = vmatpush.msra.mxu0 %v130
    %1488 = vmatpush.msra.mxu0 %v126
    %1489 = vmatpush.msra.mxu0 %v122
    %1490 = vmatpush.msra.mxu0 %v118
    %1491 = vmatpush.msra.mxu0 %v114
    %1492 = vmatpush.msra.mxu0 %v110
    %1493 = vmatpush.msra.mxu0 %v106
    %1494 = vmatmul.f32.gmra.mxu0 %v1416
    %v1495 = vpop.f32.mrf.mxu0
    %v1496 = vadd.f32 0.0, %v1495
    %1497 = vdwg.mxu0
    %v1502 = vrot.slane %v1436, 2
    %v1503 = vrot.slane %v1456, 2
    %v1504 = vrot.slane %v1476, 2
    %v1505 = vrot.slane %v1496, 2
    %v1510 = vadd.f32 %v218, %v1502
    %v1511 = vadd.f32 %v241, %v1503
    %v1512 = vadd.f32 %v264, %v1504
    %v1513 = vadd.f32 %v287, %v1505
    %v1514 = vxor.u32 %v1510, 2147483648
    %v1515 = vmul.f32 %v1514, 1.442695
    %v1516 = vpow.pop %v1515
    %v1517 = vadd.f32 %v1516, 1.0
    %v1518 = vrcp.pop %v1517
    %v1519 = vmul.f32 %v1517, %v1518
    %v1520 = vsub.f32 1.0, %v1519
    %v1521 = vmul.f32 %v1518, %v1520
    %v1522 = vadd.f32 %v1518, %v1521
    %vm1523 = vweird.f32 %v1517
    %vm1524 = vweird.f32 %v1518
    %vm1525 = vmor %vm1523, %vm1524
    %v1526 = vsel %vm1525, %v1518, %v1522
    %v1527 = vand.u32 2147483647, %v1517
    %vm1528 = vcmp.eq.f32.partialorder %v1527, 8.507059e+37
    %v1529 = vand.u32 %v1517, 2147483648
    %v1530 = vor.u32 1.1754944e-38, %v1529
    %v1531 = vsel %vm1528, %v1530, %v1526
    %v1532 = vmul.f32 1.0, %v1531
    %v1533 = vxor.u32 %v1511, 2147483648
    %v1534 = vmul.f32 %v1533, 1.442695
    %v1535 = vpow.pop %v1534
    %v1536 = vadd.f32 %v1535, 1.0
    %v1537 = vrcp.pop %v1536
    %v1538 = vmul.f32 %v1536, %v1537
    %v1539 = vsub.f32 1.0, %v1538
    %v1540 = vmul.f32 %v1537, %v1539
    %v1541 = vadd.f32 %v1537, %v1540
    %vm1542 = vweird.f32 %v1536
    %vm1543 = vweird.f32 %v1537
    %vm1544 = vmor %vm1542, %vm1543
    %v1545 = vsel %vm1544, %v1537, %v1541
    %v1546 = vand.u32 2147483647, %v1536
    %vm1547 = vcmp.eq.f32.partialorder %v1546, 8.507059e+37
    %v1548 = vand.u32 %v1536, 2147483648
    %v1549 = vor.u32 1.1754944e-38, %v1548
    %v1550 = vsel %vm1547, %v1549, %v1545
    %v1551 = vmul.f32 1.0, %v1550
    %v1552 = vtanh.pop %v1512
    %v1553 = vxor.u32 %v1513, 2147483648
    %v1554 = vmul.f32 %v1553, 1.442695
    %v1555 = vpow.pop %v1554
    %v1556 = vadd.f32 %v1555, 1.0
    %v1557 = vrcp.pop %v1556
    %v1558 = vmul.f32 %v1556, %v1557
    %v1559 = vsub.f32 1.0, %v1558
    %v1560 = vmul.f32 %v1557, %v1559
    %v1561 = vadd.f32 %v1557, %v1560
    %vm1562 = vweird.f32 %v1556
    %vm1563 = vweird.f32 %v1557
    %vm1564 = vmor %vm1562, %vm1563
    %v1565 = vsel %vm1564, %v1557, %v1561
    %v1566 = vand.u32 2147483647, %v1556
    %vm1567 = vcmp.eq.f32.partialorder %v1566, 8.507059e+37
    %v1568 = vand.u32 %v1556, 2147483648
    %v1569 = vor.u32 1.1754944e-38, %v1568
    %v1570 = vsel %vm1567, %v1569, %v1565
    %v1571 = vmul.f32 1.0, %v1570
    %v1573 = vrot.slane %v1411, 6
    %v1575 = vmul.f32 %v1551, %v1573
    %v1576 = vmul.f32 %v1532, %v1552
    %v1577 = vadd.f32 %v1575, %v1576
    %v1578 = vtanh.pop %v1577
    %v1579 = vmul.f32 %v1571, %v1578
    %1580 = vst [vmem:[#allocation2 + $0x8] sm:$0xc0] %v1579
    %v1581 = vld [vmem:[#allocation2] sm:$0xff]
    %v1582 = vld [vmem:[#allocation2 + $0x8] sm:$0xff]
    %v1583 = vld [vmem:[#allocation5] sm:$0xff]
    %v1584 = vld [vmem:[#allocation5 + $0x8] sm:$0xff]
    %v1585 = vld [vmem:[#allocation5 + $0x10] sm:$0xff]
    %v1586 = vld [vmem:[#allocation5 + $0x18] sm:$0xff]
    %v1587 = vld [vmem:[#allocation5 + $0x20] sm:$0xff]
    %v1588 = vld [vmem:[#allocation5 + $0x28] sm:$0xff]
    %v1589 = vld [vmem:[#allocation5 + $0x30] sm:$0xff]
    %v1590 = vld [vmem:[#allocation5 + $0x38] sm:$0xff]
    %v1591 = vld [vmem:[#allocation5 + $0x40] sm:$0xff]
    %v1592 = vld [vmem:[#allocation5 + $0x48] sm:$0xff]
    %v1593 = vld [vmem:[#allocation5 + $0x50] sm:$0xff]
    %v1594 = vld [vmem:[#allocation5 + $0x58] sm:$0xff]
    %v1595 = vld [vmem:[#allocation5 + $0x60] sm:$0xff]
    %v1596 = vld [vmem:[#allocation5 + $0x68] sm:$0xff]
    %v1597 = vld [vmem:[#allocation5 + $0x70] sm:$0xff]
    %v1598 = vld [vmem:[#allocation5 + $0x78] sm:$0xff]
    %v1599 = vld [vmem:[#allocation5 + $0x80] sm:$0xff]
    %v1600 = vld [vmem:[#allocation5 + $0x88] sm:$0xff]
    %v1601 = vld [vmem:[#allocation5 + $0x90] sm:$0xff]
    %v1602 = vld [vmem:[#allocation5 + $0x98] sm:$0xff]
    %v1603 = vld [vmem:[#allocation5 + $0xa0] sm:$0xff]
    %v1604 = vld [vmem:[#allocation5 + $0xa8] sm:$0xff]
    %v1605 = vld [vmem:[#allocation5 + $0xb0] sm:$0xff]
    %v1606 = vld [vmem:[#allocation5 + $0xb8] sm:$0xff]
    %v1607 = vld [vmem:[#allocation5 + $0xc0] sm:$0xff]
    %v1608 = vld [vmem:[#allocation5 + $0xc8] sm:$0xff]
    %v1609 = vld [vmem:[#allocation5 + $0xd0] sm:$0xff]
    %v1610 = vld [vmem:[#allocation5 + $0xd8] sm:$0xff]
    %v1611 = vld [vmem:[#allocation5 + $0xe0] sm:$0xff]
    %v1612 = vld [vmem:[#allocation5 + $0xe8] sm:$0xff]
    %v1613 = vld [vmem:[#allocation5 + $0xf0] sm:$0xff]
    %v1614 = vld [vmem:[#allocation5 + $0xf8] sm:$0xff]
    %v1615 = vld [vmem:[#allocation5 + $0x100] sm:$0xff]
    %v1616 = vld [vmem:[#allocation5 + $0x108] sm:$0xff]
    %v1617 = vld [vmem:[#allocation5 + $0x110] sm:$0xff]
    %v1618 = vld [vmem:[#allocation5 + $0x118] sm:$0xff]
    %v1619 = vld [vmem:[#allocation5 + $0x120] sm:$0xff]
    %v1620 = vld [vmem:[#allocation5 + $0x128] sm:$0xff]
    %v1621 = vld [vmem:[#allocation5 + $0x130] sm:$0xff]
    %v1622 = vld [vmem:[#allocation5 + $0x138] sm:$0xff]
    %v1623 = vld [vmem:[#allocation5 + $0x140] sm:$0xff]
    %v1624 = vld [vmem:[#allocation5 + $0x148] sm:$0xff]
    %v1625 = vld [vmem:[#allocation5 + $0x150] sm:$0xff]
    %v1626 = vld [vmem:[#allocation5 + $0x158] sm:$0xff]
    %v1627 = vld [vmem:[#allocation5 + $0x160] sm:$0xff]
    %v1628 = vld [vmem:[#allocation5 + $0x168] sm:$0xff]
    %v1629 = vld [vmem:[#allocation5 + $0x170] sm:$0xff]
    %v1630 = vld [vmem:[#allocation5 + $0x178] sm:$0xff]
    %v1631 = vld [vmem:[#allocation5 + $0x180] sm:$0xff]
    %v1632 = vld [vmem:[#allocation5 + $0x188] sm:$0xff]
    %v1633 = vld [vmem:[#allocation5 + $0x190] sm:$0xff]
    %v1634 = vld [vmem:[#allocation5 + $0x198] sm:$0xff]
    %v1635 = vld [vmem:[#allocation5 + $0x1a0] sm:$0xff]
    %v1636 = vld [vmem:[#allocation5 + $0x1a8] sm:$0xff]
    %v1637 = vld [vmem:[#allocation5 + $0x1b0] sm:$0xff]
    %v1638 = vld [vmem:[#allocation5 + $0x1b8] sm:$0xff]
    %v1639 = vld [vmem:[#allocation5 + $0x1c0] sm:$0xff]
    %v1640 = vld [vmem:[#allocation5 + $0x1c8] sm:$0xff]
    %v1641 = vld [vmem:[#allocation5 + $0x1d0] sm:$0xff]
    %v1642 = vld [vmem:[#allocation5 + $0x1d8] sm:$0xff]
    %v1643 = vld [vmem:[#allocation5 + $0x1e0] sm:$0xff]
    %v1644 = vld [vmem:[#allocation5 + $0x1e8] sm:$0xff]
    %v1645 = vld [vmem:[#allocation5 + $0x1f0] sm:$0xff]
    %v1646 = vld [vmem:[#allocation5 + $0x1f8] sm:$0xff]
    %v1647 = vld [vmem:[#allocation7] sm:$0xff]
    %v1648 = vld [vmem:[#allocation7 + $0x8] sm:$0xff]
    %v1649 = vld [vmem:[#allocation7 + $0x10] sm:$0xff]
    %v1650 = vld [vmem:[#allocation7 + $0x18] sm:$0xff]
    %v1651 = vld [vmem:[#allocation7 + $0x20] sm:$0xff]
    %v1652 = vld [vmem:[#allocation7 + $0x28] sm:$0xff]
    %v1653 = vld [vmem:[#allocation7 + $0x30] sm:$0xff]
    %v1654 = vld [vmem:[#allocation7 + $0x38] sm:$0xff]
    %v1655 = vld [vmem:[#allocation7 + $0x40] sm:$0xff]
    %v1656 = vld [vmem:[#allocation7 + $0x48] sm:$0xff]
    %v1657 = vld [vmem:[#allocation7 + $0x50] sm:$0xff]
    %v1658 = vld [vmem:[#allocation7 + $0x58] sm:$0xff]
    %v1659 = vld [vmem:[#allocation7 + $0x60] sm:$0xff]
    %v1660 = vld [vmem:[#allocation7 + $0x68] sm:$0xff]
    %v1661 = vld [vmem:[#allocation7 + $0x70] sm:$0xff]
    %v1662 = vld [vmem:[#allocation7 + $0x78] sm:$0xff]
    %v1663 = vld [vmem:[#allocation7 + $0x80] sm:$0xff]
    %v1664 = vld [vmem:[#allocation7 + $0x88] sm:$0xff]
    %v1665 = vld [vmem:[#allocation7 + $0x90] sm:$0xff]
    %v1666 = vld [vmem:[#allocation7 + $0x98] sm:$0xff]
    %v1667 = vld [vmem:[#allocation7 + $0xa0] sm:$0xff]
    %v1668 = vld [vmem:[#allocation7 + $0xa8] sm:$0xff]
    %v1669 = vld [vmem:[#allocation7 + $0xb0] sm:$0xff]
    %v1670 = vld [vmem:[#allocation7 + $0xb8] sm:$0xff]
    %v1671 = vld [vmem:[#allocation7 + $0xc0] sm:$0xff]
    %v1672 = vld [vmem:[#allocation7 + $0xc8] sm:$0xff]
    %v1673 = vld [vmem:[#allocation7 + $0xd0] sm:$0xff]
    %v1674 = vld [vmem:[#allocation7 + $0xd8] sm:$0xff]
    %v1675 = vld [vmem:[#allocation7 + $0xe0] sm:$0xff]
    %v1676 = vld [vmem:[#allocation7 + $0xe8] sm:$0xff]
    %v1677 = vld [vmem:[#allocation7 + $0xf0] sm:$0xff]
    %v1678 = vld [vmem:[#allocation7 + $0xf8] sm:$0xff]
    %v1679 = vld [vmem:[#allocation7 + $0x100] sm:$0xff]
    %v1680 = vld [vmem:[#allocation7 + $0x108] sm:$0xff]
    %v1681 = vld [vmem:[#allocation7 + $0x110] sm:$0xff]
    %v1682 = vld [vmem:[#allocation7 + $0x118] sm:$0xff]
    %v1683 = vld [vmem:[#allocation7 + $0x120] sm:$0xff]
    %v1684 = vld [vmem:[#allocation7 + $0x128] sm:$0xff]
    %v1685 = vld [vmem:[#allocation7 + $0x130] sm:$0xff]
    %v1686 = vld [vmem:[#allocation7 + $0x138] sm:$0xff]
    %v1687 = vld [vmem:[#allocation7 + $0x140] sm:$0xff]
    %v1688 = vld [vmem:[#allocation7 + $0x148] sm:$0xff]
    %v1689 = vld [vmem:[#allocation7 + $0x150] sm:$0xff]
    %v1690 = vld [vmem:[#allocation7 + $0x158] sm:$0xff]
    %v1691 = vld [vmem:[#allocation7 + $0x160] sm:$0xff]
    %v1692 = vld [vmem:[#allocation7 + $0x168] sm:$0xff]
    %v1693 = vld [vmem:[#allocation7 + $0x170] sm:$0xff]
    %v1694 = vld [vmem:[#allocation7 + $0x178] sm:$0xff]
    %v1695 = vld [vmem:[#allocation7 + $0x180] sm:$0xff]
    %v1696 = vld [vmem:[#allocation7 + $0x188] sm:$0xff]
    %v1697 = vld [vmem:[#allocation7 + $0x190] sm:$0xff]
    %v1698 = vld [vmem:[#allocation7 + $0x198] sm:$0xff]
    %v1699 = vld [vmem:[#allocation7 + $0x1a0] sm:$0xff]
    %v1700 = vld [vmem:[#allocation7 + $0x1a8] sm:$0xff]
    %v1701 = vld [vmem:[#allocation7 + $0x1b0] sm:$0xff]
    %v1702 = vld [vmem:[#allocation7 + $0x1b8] sm:$0xff]
    %v1703 = vld [vmem:[#allocation7 + $0x1c0] sm:$0xff]
    %v1704 = vld [vmem:[#allocation7 + $0x1c8] sm:$0xff]
    %v1705 = vld [vmem:[#allocation7 + $0x1d0] sm:$0xff]
    %v1706 = vld [vmem:[#allocation7 + $0x1d8] sm:$0xff]
    %v1707 = vld [vmem:[#allocation7 + $0x1e0] sm:$0xff]
    %v1708 = vld [vmem:[#allocation7 + $0x1e8] sm:$0xff]
    %v1709 = vld [vmem:[#allocation7 + $0x1f0] sm:$0xff]
    %v1710 = vld [vmem:[#allocation7 + $0x1f8] sm:$0xff]
    %v1711 = vld [vmem:[%s6] sm:$0xf]
    %v1713 = vperm.slane %v1711, 0
    %v1714 = vperm.slane %v1711, 1
    %v1715 = vperm.slane %v1711, 2
    %v1716 = vperm.slane %v1711, 3
    %1721 = vmatpush.msra.mxu0 %v1643
    %1722 = vmatpush.msra.mxu0 %v1639
    %1723 = vmatpush.msra.mxu0 %v1635
    %1724 = vmatpush.msra.mxu0 %v1631
    %1725 = vmatpush.msra.mxu0 %v1627
    %1726 = vmatpush.msra.mxu0 %v1623
    %1727 = vmatpush.msra.mxu0 %v1619
    %1728 = vmatpush.msra.mxu0 %v1615
    %1729 = vmatpush.msra.mxu0 %v1611
    %1730 = vmatpush.msra.mxu0 %v1607
    %1731 = vmatpush.msra.mxu0 %v1603
    %1732 = vmatpush.msra.mxu0 %v1599
    %1733 = vmatpush.msra.mxu0 %v1595
    %1734 = vmatpush.msra.mxu0 %v1591
    %1735 = vmatpush.msra.mxu0 %v1587
    %1736 = vmatpush.msra.mxu0 %v1583
    %1737 = vmatmul.f32.gmra.mxu0 %v1581
    %v1738 = vpop.f32.mrf.mxu0
    %v1739 = vadd.f32 %v1713, %v1738
    %1740 = vmatmul.f32.gmra.mxu0 %v1582
    %v1741 = vpop.f32.mrf.mxu0
    %v1742 = vadd.f32 %v1713, %v1741
    %1743 = vdwg.mxu0
    %1744 = vmatpush.msra.mxu0 %v1644
    %1745 = vmatpush.msra.mxu0 %v1640
    %1746 = vmatpush.msra.mxu0 %v1636
    %1747 = vmatpush.msra.mxu0 %v1632
    %1748 = vmatpush.msra.mxu0 %v1628
    %1749 = vmatpush.msra.mxu0 %v1624
    %1750 = vmatpush.msra.mxu0 %v1620
    %1751 = vmatpush.msra.mxu0 %v1616
    %1752 = vmatpush.msra.mxu0 %v1612
    %1753 = vmatpush.msra.mxu0 %v1608
    %1754 = vmatpush.msra.mxu0 %v1604
    %1755 = vmatpush.msra.mxu0 %v1600
    %1756 = vmatpush.msra.mxu0 %v1596
    %1757 = vmatpush.msra.mxu0 %v1592
    %1758 = vmatpush.msra.mxu0 %v1588
    %1759 = vmatpush.msra.mxu0 %v1584
    %1760 = vmatmul.f32.gmra.mxu0 %v1581
    %v1761 = vpop.f32.mrf.mxu0
    %v1762 = vadd.f32 %v1714, %v1761
    %1763 = vmatmul.f32.gmra.mxu0 %v1582
    %v1764 = vpop.f32.mrf.mxu0
    %v1765 = vadd.f32 %v1714, %v1764
    %1766 = vdwg.mxu0
    %1767 = vmatpush.msra.mxu0 %v1645
    %1768 = vmatpush.msra.mxu0 %v1641
    %1769 = vmatpush.msra.mxu0 %v1637
    %1770 = vmatpush.msra.mxu0 %v1633
    %1771 = vmatpush.msra.mxu0 %v1629
    %1772 = vmatpush.msra.mxu0 %v1625
    %1773 = vmatpush.msra.mxu0 %v1621
    %1774 = vmatpush.msra.mxu0 %v1617
    %1775 = vmatpush.msra.mxu0 %v1613
    %1776 = vmatpush.msra.mxu0 %v1609
    %1777 = vmatpush.msra.mxu0 %v1605
    %1778 = vmatpush.msra.mxu0 %v1601
    %1779 = vmatpush.msra.mxu0 %v1597
    %1780 = vmatpush.msra.mxu0 %v1593
    %1781 = vmatpush.msra.mxu0 %v1589
    %1782 = vmatpush.msra.mxu0 %v1585
    %1783 = vmatmul.f32.gmra.mxu0 %v1581
    %v1784 = vpop.f32.mrf.mxu0
    %v1785 = vadd.f32 %v1715, %v1784
    %1786 = vmatmul.f32.gmra.mxu0 %v1582
    %v1787 = vpop.f32.mrf.mxu0
    %v1788 = vadd.f32 %v1715, %v1787
    %1789 = vdwg.mxu0
    %1790 = vmatpush.msra.mxu0 %v1646
    %1791 = vmatpush.msra.mxu0 %v1642
    %1792 = vmatpush.msra.mxu0 %v1638
    %1793 = vmatpush.msra.mxu0 %v1634
    %1794 = vmatpush.msra.mxu0 %v1630
    %1795 = vmatpush.msra.mxu0 %v1626
    %1796 = vmatpush.msra.mxu0 %v1622
    %1797 = vmatpush.msra.mxu0 %v1618
    %1798 = vmatpush.msra.mxu0 %v1614
    %1799 = vmatpush.msra.mxu0 %v1610
    %1800 = vmatpush.msra.mxu0 %v1606
    %1801 = vmatpush.msra.mxu0 %v1602
    %1802 = vmatpush.msra.mxu0 %v1598
    %1803 = vmatpush.msra.mxu0 %v1594
    %1804 = vmatpush.msra.mxu0 %v1590
    %1805 = vmatpush.msra.mxu0 %v1586
    %1806 = vmatmul.f32.gmra.mxu0 %v1581
    %v1807 = vpop.f32.mrf.mxu0
    %v1808 = vadd.f32 %v1716, %v1807
    %1809 = vmatmul.f32.gmra.mxu0 %v1582
    %v1810 = vpop.f32.mrf.mxu0
    %v1811 = vadd.f32 %v1716, %v1810
    %1812 = vdwg.mxu0
    %1813 = vmatpush.msra.mxu0 %v1707
    %1814 = vmatpush.msra.mxu0 %v1703
    %1815 = vmatpush.msra.mxu0 %v1699
    %1816 = vmatpush.msra.mxu0 %v1695
    %1817 = vmatpush.msra.mxu0 %v1691
    %1818 = vmatpush.msra.mxu0 %v1687
    %1819 = vmatpush.msra.mxu0 %v1683
    %1820 = vmatpush.msra.mxu0 %v1679
    %1821 = vmatpush.msra.mxu0 %v1675
    %1822 = vmatpush.msra.mxu0 %v1671
    %1823 = vmatpush.msra.mxu0 %v1667
    %1824 = vmatpush.msra.mxu0 %v1663
    %1825 = vmatpush.msra.mxu0 %v1659
    %1826 = vmatpush.msra.mxu0 %v1655
    %1827 = vmatpush.msra.mxu0 %v1651
    %1828 = vmatpush.msra.mxu0 %v1647
    %1829 = vmatmul.f32.gmra.mxu0 0.0
    %v1830 = vpop.f32.mrf.mxu0
    %v1831 = vadd.f32 0.0, %v1830
    %1832 = vdwg.mxu0
    %1833 = vmatpush.msra.mxu0 %v1708
    %1834 = vmatpush.msra.mxu0 %v1704
    %1835 = vmatpush.msra.mxu0 %v1700
    %1836 = vmatpush.msra.mxu0 %v1696
    %1837 = vmatpush.msra.mxu0 %v1692
    %1838 = vmatpush.msra.mxu0 %v1688
    %1839 = vmatpush.msra.mxu0 %v1684
    %1840 = vmatpush.msra.mxu0 %v1680
    %1841 = vmatpush.msra.mxu0 %v1676
    %1842 = vmatpush.msra.mxu0 %v1672
    %1843 = vmatpush.msra.mxu0 %v1668
    %1844 = vmatpush.msra.mxu0 %v1664
    %1845 = vmatpush.msra.mxu0 %v1660
    %1846 = vmatpush.msra.mxu0 %v1656
    %1847 = vmatpush.msra.mxu0 %v1652
    %1848 = vmatpush.msra.mxu0 %v1648
    %1849 = vmatmul.f32.gmra.mxu0 0.0
    %v1850 = vpop.f32.mrf.mxu0
    %v1851 = vadd.f32 0.0, %v1850
    %1852 = vdwg.mxu0
    %1853 = vmatpush.msra.mxu0 %v1709
    %1854 = vmatpush.msra.mxu0 %v1705
    %1855 = vmatpush.msra.mxu0 %v1701
    %1856 = vmatpush.msra.mxu0 %v1697
    %1857 = vmatpush.msra.mxu0 %v1693
    %1858 = vmatpush.msra.mxu0 %v1689
    %1859 = vmatpush.msra.mxu0 %v1685
    %1860 = vmatpush.msra.mxu0 %v1681
    %1861 = vmatpush.msra.mxu0 %v1677
    %1862 = vmatpush.msra.mxu0 %v1673
    %1863 = vmatpush.msra.mxu0 %v1669
    %1864 = vmatpush.msra.mxu0 %v1665
    %1865 = vmatpush.msra.mxu0 %v1661
    %1866 = vmatpush.msra.mxu0 %v1657
    %1867 = vmatpush.msra.mxu0 %v1653
    %1868 = vmatpush.msra.mxu0 %v1649
    %1869 = vmatmul.f32.gmra.mxu0 0.0
    %v1870 = vpop.f32.mrf.mxu0
    %v1871 = vadd.f32 0.0, %v1870
    %1872 = vdwg.mxu0
    %1873 = vmatpush.msra.mxu0 %v1710
    %1874 = vmatpush.msra.mxu0 %v1706
    %1875 = vmatpush.msra.mxu0 %v1702
    %1876 = vmatpush.msra.mxu0 %v1698
    %1877 = vmatpush.msra.mxu0 %v1694
    %1878 = vmatpush.msra.mxu0 %v1690
    %1879 = vmatpush.msra.mxu0 %v1686
    %1880 = vmatpush.msra.mxu0 %v1682
    %1881 = vmatpush.msra.mxu0 %v1678
    %1882 = vmatpush.msra.mxu0 %v1674
    %1883 = vmatpush.msra.mxu0 %v1670
    %1884 = vmatpush.msra.mxu0 %v1666
    %1885 = vmatpush.msra.mxu0 %v1662
    %1886 = vmatpush.msra.mxu0 %v1658
    %1887 = vmatpush.msra.mxu0 %v1654
    %1888 = vmatpush.msra.mxu0 %v1650
    %1889 = vmatmul.f32.gmra.mxu0 0.0
    %v1890 = vpop.f32.mrf.mxu0
    %v1891 = vadd.f32 0.0, %v1890
    %1892 = vdwg.mxu0
    %v1893 = vadd.f32 %v1739, %v1831
    %v1894 = vadd.f32 %v1762, %v1851
    %v1895 = vadd.f32 %v1785, %v1871
    %v1896 = vadd.f32 %v1808, %v1891
    %v1897 = vxor.u32 %v1893, 2147483648
    %v1898 = vmul.f32 %v1897, 1.442695
    %v1899 = vpow.pop %v1898
    %v1900 = vadd.f32 %v1899, 1.0
    %v1901 = vrcp.pop %v1900
    %v1902 = vmul.f32 %v1900, %v1901
    %v1903 = vsub.f32 1.0, %v1902
    %v1904 = vmul.f32 %v1901, %v1903
    %v1905 = vadd.f32 %v1901, %v1904
    %vm1906 = vweird.f32 %v1900
    %vm1907 = vweird.f32 %v1901
    %vm1908 = vmor %vm1906, %vm1907
    %v1909 = vsel %vm1908, %v1901, %v1905
    %v1910 = vand.u32 2147483647, %v1900
    %vm1911 = vcmp.eq.f32.partialorder %v1910, 8.507059e+37
    %v1912 = vand.u32 %v1900, 2147483648
    %v1913 = vor.u32 1.1754944e-38, %v1912
    %v1914 = vsel %vm1911, %v1913, %v1909
    %v1915 = vmul.f32 1.0, %v1914
    %v1916 = vxor.u32 %v1894, 2147483648
    %v1917 = vmul.f32 %v1916, 1.442695
    %v1918 = vpow.pop %v1917
    %v1919 = vadd.f32 %v1918, 1.0
    %v1920 = vrcp.pop %v1919
    %v1921 = vmul.f32 %v1919, %v1920
    %v1922 = vsub.f32 1.0, %v1921
    %v1923 = vmul.f32 %v1920, %v1922
    %v1924 = vadd.f32 %v1920, %v1923
    %vm1925 = vweird.f32 %v1919
    %vm1926 = vweird.f32 %v1920
    %vm1927 = vmor %vm1925, %vm1926
    %v1928 = vsel %vm1927, %v1920, %v1924
    %v1929 = vand.u32 2147483647, %v1919
    %vm1930 = vcmp.eq.f32.partialorder %v1929, 8.507059e+37
    %v1931 = vand.u32 %v1919, 2147483648
    %v1932 = vor.u32 1.1754944e-38, %v1931
    %v1933 = vsel %vm1930, %v1932, %v1928
    %v1934 = vmul.f32 1.0, %v1933
    %v1935 = vtanh.pop %v1895
    %v1936 = vxor.u32 %v1896, 2147483648
    %v1937 = vmul.f32 %v1936, 1.442695
    %v1938 = vpow.pop %v1937
    %v1939 = vadd.f32 %v1938, 1.0
    %v1940 = vrcp.pop %v1939
    %v1941 = vmul.f32 %v1939, %v1940
    %v1942 = vsub.f32 1.0, %v1941
    %v1943 = vmul.f32 %v1940, %v1942
    %v1944 = vadd.f32 %v1940, %v1943
    %vm1945 = vweird.f32 %v1939
    %vm1946 = vweird.f32 %v1940
    %vm1947 = vmor %vm1945, %vm1946
    %v1948 = vsel %vm1947, %v1940, %v1944
    %v1949 = vand.u32 2147483647, %v1939
    %vm1950 = vcmp.eq.f32.partialorder %v1949, 8.507059e+37
    %v1951 = vand.u32 %v1939, 2147483648
    %v1952 = vor.u32 1.1754944e-38, %v1951
    %v1953 = vsel %vm1950, %v1952, %v1948
    %v1954 = vmul.f32 1.0, %v1953
    %v1955 = vmul.f32 %v1934, 0.0
    %v1956 = vmul.f32 %v1915, %v1935
    %v1957 = vadd.f32 %v1955, %v1956
    %v1958 = vtanh.pop %v1957
    %v1959 = vmul.f32 %v1954, %v1958
    %1960 = vst [vmem:[#allocation2] sm:$0x3] %v1959
    %1961 = vmatpush.msra.mxu0 %v1707
    %1962 = vmatpush.msra.mxu0 %v1703
    %1963 = vmatpush.msra.mxu0 %v1699
    %1964 = vmatpush.msra.mxu0 %v1695
    %1965 = vmatpush.msra.mxu0 %v1691
    %1966 = vmatpush.msra.mxu0 %v1687
    %1967 = vmatpush.msra.mxu0 %v1683
    %1968 = vmatpush.msra.mxu0 %v1679
    %1969 = vmatpush.msra.mxu0 %v1675
    %1970 = vmatpush.msra.mxu0 %v1671
    %1971 = vmatpush.msra.mxu0 %v1667
    %1972 = vmatpush.msra.mxu0 %v1663
    %1973 = vmatpush.msra.mxu0 %v1659
    %1974 = vmatpush.msra.mxu0 %v1655
    %1975 = vmatpush.msra.mxu0 %v1651
    %1976 = vmatpush.msra.mxu0 %v1647
    %1977 = vmatmul.f32.gmra.mxu0 %v1959
    %v1978 = vpop.f32.mrf.mxu0
    %v1979 = vadd.f32 0.0, %v1978
    %1980 = vdwg.mxu0
    %1981 = vmatpush.msra.mxu0 %v1708
    %1982 = vmatpush.msra.mxu0 %v1704
    %1983 = vmatpush.msra.mxu0 %v1700
    %1984 = vmatpush.msra.mxu0 %v1696
    %1985 = vmatpush.msra.mxu0 %v1692
    %1986 = vmatpush.msra.mxu0 %v1688
    %1987 = vmatpush.msra.mxu0 %v1684
    %1988 = vmatpush.msra.mxu0 %v1680
    %1989 = vmatpush.msra.mxu0 %v1676
    %1990 = vmatpush.msra.mxu0 %v1672
    %1991 = vmatpush.msra.mxu0 %v1668
    %1992 = vmatpush.msra.mxu0 %v1664
    %1993 = vmatpush.msra.mxu0 %v1660
    %1994 = vmatpush.msra.mxu0 %v1656
    %1995 = vmatpush.msra.mxu0 %v1652
    %1996 = vmatpush.msra.mxu0 %v1648
    %1997 = vmatmul.f32.gmra.mxu0 %v1959
    %v1998 = vpop.f32.mrf.mxu0
    %v1999 = vadd.f32 0.0, %v1998
    %2000 = vdwg.mxu0
    %2001 = vmatpush.msra.mxu0 %v1709
    %2002 = vmatpush.msra.mxu0 %v1705
    %2003 = vmatpush.msra.mxu0 %v1701
    %2004 = vmatpush.msra.mxu0 %v1697
    %2005 = vmatpush.msra.mxu0 %v1693
    %2006 = vmatpush.msra.mxu0 %v1689
    %2007 = vmatpush.msra.mxu0 %v1685
    %2008 = vmatpush.msra.mxu0 %v1681
    %2009 = vmatpush.msra.mxu0 %v1677
    %2010 = vmatpush.msra.mxu0 %v1673
    %2011 = vmatpush.msra.mxu0 %v1669
    %2012 = vmatpush.msra.mxu0 %v1665
    %2013 = vmatpush.msra.mxu0 %v1661
    %2014 = vmatpush.msra.mxu0 %v1657
    %2015 = vmatpush.msra.mxu0 %v1653
    %2016 = vmatpush.msra.mxu0 %v1649
    %2017 = vmatmul.f32.gmra.mxu0 %v1959
    %v2018 = vpop.f32.mrf.mxu0
    %v2019 = vadd.f32 0.0, %v2018
    %2020 = vdwg.mxu0
    %2021 = vmatpush.msra.mxu0 %v1710
    %2022 = vmatpush.msra.mxu0 %v1706
    %2023 = vmatpush.msra.mxu0 %v1702
    %2024 = vmatpush.msra.mxu0 %v1698
    %2025 = vmatpush.msra.mxu0 %v1694
    %2026 = vmatpush.msra.mxu0 %v1690
    %2027 = vmatpush.msra.mxu0 %v1686
    %2028 = vmatpush.msra.mxu0 %v1682
    %2029 = vmatpush.msra.mxu0 %v1678
    %2030 = vmatpush.msra.mxu0 %v1674
    %2031 = vmatpush.msra.mxu0 %v1670
    %2032 = vmatpush.msra.mxu0 %v1666
    %2033 = vmatpush.msra.mxu0 %v1662
    %2034 = vmatpush.msra.mxu0 %v1658
    %2035 = vmatpush.msra.mxu0 %v1654
    %2036 = vmatpush.msra.mxu0 %v1650
    %2037 = vmatmul.f32.gmra.mxu0 %v1959
    %v2038 = vpop.f32.mrf.mxu0
    %v2039 = vadd.f32 0.0, %v2038
    %2040 = vdwg.mxu0
    %v2045 = vrot.slane %v1979, 6
    %v2046 = vrot.slane %v1999, 6
    %v2047 = vrot.slane %v2019, 6
    %v2048 = vrot.slane %v2039, 6
    %v2053 = vadd.f32 %v1739, %v2045
    %v2054 = vadd.f32 %v1762, %v2046
    %v2055 = vadd.f32 %v1785, %v2047
    %v2056 = vadd.f32 %v1808, %v2048
    %v2057 = vxor.u32 %v2053, 2147483648
    %v2058 = vmul.f32 %v2057, 1.442695
    %v2059 = vpow.pop %v2058
    %v2060 = vadd.f32 %v2059, 1.0
    %v2061 = vrcp.pop %v2060
    %v2062 = vmul.f32 %v2060, %v2061
    %v2063 = vsub.f32 1.0, %v2062
    %v2064 = vmul.f32 %v2061, %v2063
    %v2065 = vadd.f32 %v2061, %v2064
    %vm2066 = vweird.f32 %v2060
    %vm2067 = vweird.f32 %v2061
    %vm2068 = vmor %vm2066, %vm2067
    %v2069 = vsel %vm2068, %v2061, %v2065
    %v2070 = vand.u32 2147483647, %v2060
    %vm2071 = vcmp.eq.f32.partialorder %v2070, 8.507059e+37
    %v2072 = vand.u32 %v2060, 2147483648
    %v2073 = vor.u32 1.1754944e-38, %v2072
    %v2074 = vsel %vm2071, %v2073, %v2069
    %v2075 = vmul.f32 1.0, %v2074
    %v2076 = vxor.u32 %v2054, 2147483648
    %v2077 = vmul.f32 %v2076, 1.442695
    %v2078 = vpow.pop %v2077
    %v2079 = vadd.f32 %v2078, 1.0
    %v2080 = vrcp.pop %v2079
    %v2081 = vmul.f32 %v2079, %v2080
    %v2082 = vsub.f32 1.0, %v2081
    %v2083 = vmul.f32 %v2080, %v2082
    %v2084 = vadd.f32 %v2080, %v2083
    %vm2085 = vweird.f32 %v2079
    %vm2086 = vweird.f32 %v2080
    %vm2087 = vmor %vm2085, %vm2086
    %v2088 = vsel %vm2087, %v2080, %v2084
    %v2089 = vand.u32 2147483647, %v2079
    %vm2090 = vcmp.eq.f32.partialorder %v2089, 8.507059e+37
    %v2091 = vand.u32 %v2079, 2147483648
    %v2092 = vor.u32 1.1754944e-38, %v2091
    %v2093 = vsel %vm2090, %v2092, %v2088
    %v2094 = vmul.f32 1.0, %v2093
    %v2095 = vtanh.pop %v2055
    %v2096 = vxor.u32 %v2056, 2147483648
    %v2097 = vmul.f32 %v2096, 1.442695
    %v2098 = vpow.pop %v2097
    %v2099 = vadd.f32 %v2098, 1.0
    %v2100 = vrcp.pop %v2099
    %v2101 = vmul.f32 %v2099, %v2100
    %v2102 = vsub.f32 1.0, %v2101
    %v2103 = vmul.f32 %v2100, %v2102
    %v2104 = vadd.f32 %v2100, %v2103
    %vm2105 = vweird.f32 %v2099
    %vm2106 = vweird.f32 %v2100
    %vm2107 = vmor %vm2105, %vm2106
    %v2108 = vsel %vm2107, %v2100, %v2104
    %v2109 = vand.u32 2147483647, %v2099
    %vm2110 = vcmp.eq.f32.partialorder %v2109, 8.507059e+37
    %v2111 = vand.u32 %v2099, 2147483648
    %v2112 = vor.u32 1.1754944e-38, %v2111
    %v2113 = vsel %vm2110, %v2112, %v2108
    %v2114 = vmul.f32 1.0, %v2113
    %v2116 = vrot.slane %v1957, 6
    %v2118 = vmul.f32 %v2094, %v2116
    %v2119 = vmul.f32 %v2075, %v2095
    %v2120 = vadd.f32 %v2118, %v2119
    %v2121 = vtanh.pop %v2120
    %v2122 = vmul.f32 %v2114, %v2121
    %2123 = vst [vmem:[#allocation2] sm:$0xc] %v2122
    %v2125 = vrot.slane %v2122, 2
    %2127 = vmatpush.msra.mxu0 %v1707
    %2128 = vmatpush.msra.mxu0 %v1703
    %2129 = vmatpush.msra.mxu0 %v1699
    %2130 = vmatpush.msra.mxu0 %v1695
    %2131 = vmatpush.msra.mxu0 %v1691
    %2132 = vmatpush.msra.mxu0 %v1687
    %2133 = vmatpush.msra.mxu0 %v1683
    %2134 = vmatpush.msra.mxu0 %v1679
    %2135 = vmatpush.msra.mxu0 %v1675
    %2136 = vmatpush.msra.mxu0 %v1671
    %2137 = vmatpush.msra.mxu0 %v1667
    %2138 = vmatpush.msra.mxu0 %v1663
    %2139 = vmatpush.msra.mxu0 %v1659
    %2140 = vmatpush.msra.mxu0 %v1655
    %2141 = vmatpush.msra.mxu0 %v1651
    %2142 = vmatpush.msra.mxu0 %v1647
    %2143 = vmatmul.f32.gmra.mxu0 %v2125
    %v2144 = vpop.f32.mrf.mxu0
    %v2145 = vadd.f32 0.0, %v2144
    %2146 = vdwg.mxu0
    %2147 = vmatpush.msra.mxu0 %v1708
    %2148 = vmatpush.msra.mxu0 %v1704
    %2149 = vmatpush.msra.mxu0 %v1700
    %2150 = vmatpush.msra.mxu0 %v1696
    %2151 = vmatpush.msra.mxu0 %v1692
    %2152 = vmatpush.msra.mxu0 %v1688
    %2153 = vmatpush.msra.mxu0 %v1684
    %2154 = vmatpush.msra.mxu0 %v1680
    %2155 = vmatpush.msra.mxu0 %v1676
    %2156 = vmatpush.msra.mxu0 %v1672
    %2157 = vmatpush.msra.mxu0 %v1668
    %2158 = vmatpush.msra.mxu0 %v1664
    %2159 = vmatpush.msra.mxu0 %v1660
    %2160 = vmatpush.msra.mxu0 %v1656
    %2161 = vmatpush.msra.mxu0 %v1652
    %2162 = vmatpush.msra.mxu0 %v1648
    %2163 = vmatmul.f32.gmra.mxu0 %v2125
    %v2164 = vpop.f32.mrf.mxu0
    %v2165 = vadd.f32 0.0, %v2164
    %2166 = vdwg.mxu0
    %2167 = vmatpush.msra.mxu0 %v1709
    %2168 = vmatpush.msra.mxu0 %v1705
    %2169 = vmatpush.msra.mxu0 %v1701
    %2170 = vmatpush.msra.mxu0 %v1697
    %2171 = vmatpush.msra.mxu0 %v1693
    %2172 = vmatpush.msra.mxu0 %v1689
    %2173 = vmatpush.msra.mxu0 %v1685
    %2174 = vmatpush.msra.mxu0 %v1681
    %2175 = vmatpush.msra.mxu0 %v1677
    %2176 = vmatpush.msra.mxu0 %v1673
    %2177 = vmatpush.msra.mxu0 %v1669
    %2178 = vmatpush.msra.mxu0 %v1665
    %2179 = vmatpush.msra.mxu0 %v1661
    %2180 = vmatpush.msra.mxu0 %v1657
    %2181 = vmatpush.msra.mxu0 %v1653
    %2182 = vmatpush.msra.mxu0 %v1649
    %2183 = vmatmul.f32.gmra.mxu0 %v2125
    %v2184 = vpop.f32.mrf.mxu0
    %v2185 = vadd.f32 0.0, %v2184
    %2186 = vdwg.mxu0
    %2187 = vmatpush.msra.mxu0 %v1710
    %2188 = vmatpush.msra.mxu0 %v1706
    %2189 = vmatpush.msra.mxu0 %v1702
    %2190 = vmatpush.msra.mxu0 %v1698
    %2191 = vmatpush.msra.mxu0 %v1694
    %2192 = vmatpush.msra.mxu0 %v1690
    %2193 = vmatpush.msra.mxu0 %v1686
    %2194 = vmatpush.msra.mxu0 %v1682
    %2195 = vmatpush.msra.mxu0 %v1678
    %2196 = vmatpush.msra.mxu0 %v1674
    %2197 = vmatpush.msra.mxu0 %v1670
    %2198 = vmatpush.msra.mxu0 %v1666
    %2199 = vmatpush.msra.mxu0 %v1662
    %2200 = vmatpush.msra.mxu0 %v1658
    %2201 = vmatpush.msra.mxu0 %v1654
    %2202 = vmatpush.msra.mxu0 %v1650
    %2203 = vmatmul.f32.gmra.mxu0 %v2125
    %v2204 = vpop.f32.mrf.mxu0
    %v2205 = vadd.f32 0.0, %v2204
    %2206 = vdwg.mxu0
    %v2211 = vrot.slane %v2145, 4
    %v2212 = vrot.slane %v2165, 4
    %v2213 = vrot.slane %v2185, 4
    %v2214 = vrot.slane %v2205, 4
    %v2219 = vadd.f32 %v1739, %v2211
    %v2220 = vadd.f32 %v1762, %v2212
    %v2221 = vadd.f32 %v1785, %v2213
    %v2222 = vadd.f32 %v1808, %v2214
    %v2223 = vxor.u32 %v2219, 2147483648
    %v2224 = vmul.f32 %v2223, 1.442695
    %v2225 = vpow.pop %v2224
    %v2226 = vadd.f32 %v2225, 1.0
    %v2227 = vrcp.pop %v2226
    %v2228 = vmul.f32 %v2226, %v2227
    %v2229 = vsub.f32 1.0, %v2228
    %v2230 = vmul.f32 %v2227, %v2229
    %v2231 = vadd.f32 %v2227, %v2230
    %vm2232 = vweird.f32 %v2226
    %vm2233 = vweird.f32 %v2227
    %vm2234 = vmor %vm2232, %vm2233
    %v2235 = vsel %vm2234, %v2227, %v2231
    %v2236 = vand.u32 2147483647, %v2226
    %vm2237 = vcmp.eq.f32.partialorder %v2236, 8.507059e+37
    %v2238 = vand.u32 %v2226, 2147483648
    %v2239 = vor.u32 1.1754944e-38, %v2238
    %v2240 = vsel %vm2237, %v2239, %v2235
    %v2241 = vmul.f32 1.0, %v2240
    %v2242 = vxor.u32 %v2220, 2147483648
    %v2243 = vmul.f32 %v2242, 1.442695
    %v2244 = vpow.pop %v2243
    %v2245 = vadd.f32 %v2244, 1.0
    %v2246 = vrcp.pop %v2245
    %v2247 = vmul.f32 %v2245, %v2246
    %v2248 = vsub.f32 1.0, %v2247
    %v2249 = vmul.f32 %v2246, %v2248
    %v2250 = vadd.f32 %v2246, %v2249
    %vm2251 = vweird.f32 %v2245
    %vm2252 = vweird.f32 %v2246
    %vm2253 = vmor %vm2251, %vm2252
    %v2254 = vsel %vm2253, %v2246, %v2250
    %v2255 = vand.u32 2147483647, %v2245
    %vm2256 = vcmp.eq.f32.partialorder %v2255, 8.507059e+37
    %v2257 = vand.u32 %v2245, 2147483648
    %v2258 = vor.u32 1.1754944e-38, %v2257
    %v2259 = vsel %vm2256, %v2258, %v2254
    %v2260 = vmul.f32 1.0, %v2259
    %v2261 = vtanh.pop %v2221
    %v2262 = vxor.u32 %v2222, 2147483648
    %v2263 = vmul.f32 %v2262, 1.442695
    %v2264 = vpow.pop %v2263
    %v2265 = vadd.f32 %v2264, 1.0
    %v2266 = vrcp.pop %v2265
    %v2267 = vmul.f32 %v2265, %v2266
    %v2268 = vsub.f32 1.0, %v2267
    %v2269 = vmul.f32 %v2266, %v2268
    %v2270 = vadd.f32 %v2266, %v2269
    %vm2271 = vweird.f32 %v2265
    %vm2272 = vweird.f32 %v2266
    %vm2273 = vmor %vm2271, %vm2272
    %v2274 = vsel %vm2273, %v2266, %v2270
    %v2275 = vand.u32 2147483647, %v2265
    %vm2276 = vcmp.eq.f32.partialorder %v2275, 8.507059e+37
    %v2277 = vand.u32 %v2265, 2147483648
    %v2278 = vor.u32 1.1754944e-38, %v2277
    %v2279 = vsel %vm2276, %v2278, %v2274
    %v2280 = vmul.f32 1.0, %v2279
    %v2282 = vrot.slane %v2120, 6
    %v2284 = vmul.f32 %v2260, %v2282
    %v2285 = vmul.f32 %v2241, %v2261
    %v2286 = vadd.f32 %v2284, %v2285
    %v2287 = vtanh.pop %v2286
    %v2288 = vmul.f32 %v2280, %v2287
    %2289 = vst [vmem:[#allocation2] sm:$0x30] %v2288
    %v2291 = vrot.slane %v2288, 4
    %2293 = vmatpush.msra.mxu0 %v1707
    %2294 = vmatpush.msra.mxu0 %v1703
    %2295 = vmatpush.msra.mxu0 %v1699
    %2296 = vmatpush.msra.mxu0 %v1695
    %2297 = vmatpush.msra.mxu0 %v1691
    %2298 = vmatpush.msra.mxu0 %v1687
    %2299 = vmatpush.msra.mxu0 %v1683
    %2300 = vmatpush.msra.mxu0 %v1679
    %2301 = vmatpush.msra.mxu0 %v1675
    %2302 = vmatpush.msra.mxu0 %v1671
    %2303 = vmatpush.msra.mxu0 %v1667
    %2304 = vmatpush.msra.mxu0 %v1663
    %2305 = vmatpush.msra.mxu0 %v1659
    %2306 = vmatpush.msra.mxu0 %v1655
    %2307 = vmatpush.msra.mxu0 %v1651
    %2308 = vmatpush.msra.mxu0 %v1647
    %2309 = vmatmul.f32.gmra.mxu0 %v2291
    %v2310 = vpop.f32.mrf.mxu0
    %v2311 = vadd.f32 0.0, %v2310
    %2312 = vdwg.mxu0
    %2313 = vmatpush.msra.mxu0 %v1708
    %2314 = vmatpush.msra.mxu0 %v1704
    %2315 = vmatpush.msra.mxu0 %v1700
    %2316 = vmatpush.msra.mxu0 %v1696
    %2317 = vmatpush.msra.mxu0 %v1692
    %2318 = vmatpush.msra.mxu0 %v1688
    %2319 = vmatpush.msra.mxu0 %v1684
    %2320 = vmatpush.msra.mxu0 %v1680
    %2321 = vmatpush.msra.mxu0 %v1676
    %2322 = vmatpush.msra.mxu0 %v1672
    %2323 = vmatpush.msra.mxu0 %v1668
    %2324 = vmatpush.msra.mxu0 %v1664
    %2325 = vmatpush.msra.mxu0 %v1660
    %2326 = vmatpush.msra.mxu0 %v1656
    %2327 = vmatpush.msra.mxu0 %v1652
    %2328 = vmatpush.msra.mxu0 %v1648
    %2329 = vmatmul.f32.gmra.mxu0 %v2291
    %v2330 = vpop.f32.mrf.mxu0
    %v2331 = vadd.f32 0.0, %v2330
    %2332 = vdwg.mxu0
    %2333 = vmatpush.msra.mxu0 %v1709
    %2334 = vmatpush.msra.mxu0 %v1705
    %2335 = vmatpush.msra.mxu0 %v1701
    %2336 = vmatpush.msra.mxu0 %v1697
    %2337 = vmatpush.msra.mxu0 %v1693
    %2338 = vmatpush.msra.mxu0 %v1689
    %2339 = vmatpush.msra.mxu0 %v1685
    %2340 = vmatpush.msra.mxu0 %v1681
    %2341 = vmatpush.msra.mxu0 %v1677
    %2342 = vmatpush.msra.mxu0 %v1673
    %2343 = vmatpush.msra.mxu0 %v1669
    %2344 = vmatpush.msra.mxu0 %v1665
    %2345 = vmatpush.msra.mxu0 %v1661
    %2346 = vmatpush.msra.mxu0 %v1657
    %2347 = vmatpush.msra.mxu0 %v1653
    %2348 = vmatpush.msra.mxu0 %v1649
    %2349 = vmatmul.f32.gmra.mxu0 %v2291
    %v2350 = vpop.f32.mrf.mxu0
    %v2351 = vadd.f32 0.0, %v2350
    %2352 = vdwg.mxu0
    %2353 = vmatpush.msra.mxu0 %v1710
    %2354 = vmatpush.msra.mxu0 %v1706
    %2355 = vmatpush.msra.mxu0 %v1702
    %2356 = vmatpush.msra.mxu0 %v1698
    %2357 = vmatpush.msra.mxu0 %v1694
    %2358 = vmatpush.msra.mxu0 %v1690
    %2359 = vmatpush.msra.mxu0 %v1686
    %2360 = vmatpush.msra.mxu0 %v1682
    %2361 = vmatpush.msra.mxu0 %v1678
    %2362 = vmatpush.msra.mxu0 %v1674
    %2363 = vmatpush.msra.mxu0 %v1670
    %2364 = vmatpush.msra.mxu0 %v1666
    %2365 = vmatpush.msra.mxu0 %v1662
    %2366 = vmatpush.msra.mxu0 %v1658
    %2367 = vmatpush.msra.mxu0 %v1654
    %2368 = vmatpush.msra.mxu0 %v1650
    %2369 = vmatmul.f32.gmra.mxu0 %v2291
    %v2370 = vpop.f32.mrf.mxu0
    %v2371 = vadd.f32 0.0, %v2370
    %2372 = vdwg.mxu0
    %v2377 = vrot.slane %v2311, 2
    %v2378 = vrot.slane %v2331, 2
    %v2379 = vrot.slane %v2351, 2
    %v2380 = vrot.slane %v2371, 2
    %v2385 = vadd.f32 %v1739, %v2377
    %v2386 = vadd.f32 %v1762, %v2378
    %v2387 = vadd.f32 %v1785, %v2379
    %v2388 = vadd.f32 %v1808, %v2380
    %v2389 = vxor.u32 %v2385, 2147483648
    %v2390 = vmul.f32 %v2389, 1.442695
    %v2391 = vpow.pop %v2390
    %v2392 = vadd.f32 %v2391, 1.0
    %v2393 = vrcp.pop %v2392
    %v2394 = vmul.f32 %v2392, %v2393
    %v2395 = vsub.f32 1.0, %v2394
    %v2396 = vmul.f32 %v2393, %v2395
    %v2397 = vadd.f32 %v2393, %v2396
    %vm2398 = vweird.f32 %v2392
    %vm2399 = vweird.f32 %v2393
    %vm2400 = vmor %vm2398, %vm2399
    %v2401 = vsel %vm2400, %v2393, %v2397
    %v2402 = vand.u32 2147483647, %v2392
    %vm2403 = vcmp.eq.f32.partialorder %v2402, 8.507059e+37
    %v2404 = vand.u32 %v2392, 2147483648
    %v2405 = vor.u32 1.1754944e-38, %v2404
    %v2406 = vsel %vm2403, %v2405, %v2401
    %v2407 = vmul.f32 1.0, %v2406
    %v2408 = vxor.u32 %v2386, 2147483648
    %v2409 = vmul.f32 %v2408, 1.442695
    %v2410 = vpow.pop %v2409
    %v2411 = vadd.f32 %v2410, 1.0
    %v2412 = vrcp.pop %v2411
    %v2413 = vmul.f32 %v2411, %v2412
    %v2414 = vsub.f32 1.0, %v2413
    %v2415 = vmul.f32 %v2412, %v2414
    %v2416 = vadd.f32 %v2412, %v2415
    %vm2417 = vweird.f32 %v2411
    %vm2418 = vweird.f32 %v2412
    %vm2419 = vmor %vm2417, %vm2418
    %v2420 = vsel %vm2419, %v2412, %v2416
    %v2421 = vand.u32 2147483647, %v2411
    %vm2422 = vcmp.eq.f32.partialorder %v2421, 8.507059e+37
    %v2423 = vand.u32 %v2411, 2147483648
    %v2424 = vor.u32 1.1754944e-38, %v2423
    %v2425 = vsel %vm2422, %v2424, %v2420
    %v2426 = vmul.f32 1.0, %v2425
    %v2427 = vtanh.pop %v2387
    %v2428 = vxor.u32 %v2388, 2147483648
    %v2429 = vmul.f32 %v2428, 1.442695
    %v2430 = vpow.pop %v2429
    %v2431 = vadd.f32 %v2430, 1.0
    %v2432 = vrcp.pop %v2431
    %v2433 = vmul.f32 %v2431, %v2432
    %v2434 = vsub.f32 1.0, %v2433
    %v2435 = vmul.f32 %v2432, %v2434
    %v2436 = vadd.f32 %v2432, %v2435
    %vm2437 = vweird.f32 %v2431
    %vm2438 = vweird.f32 %v2432
    %vm2439 = vmor %vm2437, %vm2438
    %v2440 = vsel %vm2439, %v2432, %v2436
    %v2441 = vand.u32 2147483647, %v2431
    %vm2442 = vcmp.eq.f32.partialorder %v2441, 8.507059e+37
    %v2443 = vand.u32 %v2431, 2147483648
    %v2444 = vor.u32 1.1754944e-38, %v2443
    %v2445 = vsel %vm2442, %v2444, %v2440
    %v2446 = vmul.f32 1.0, %v2445
    %v2448 = vrot.slane %v2286, 6
    %v2450 = vmul.f32 %v2426, %v2448
    %v2451 = vmul.f32 %v2407, %v2427
    %v2452 = vadd.f32 %v2450, %v2451
    %v2453 = vtanh.pop %v2452
    %v2454 = vmul.f32 %v2446, %v2453
    %2455 = vst [vmem:[#allocation2] sm:$0xc0] %v2454
    %v2457 = vrot.slane %v2454, 6
    %2459 = vmatpush.msra.mxu0 %v1707
    %2460 = vmatpush.msra.mxu0 %v1703
    %2461 = vmatpush.msra.mxu0 %v1699
    %2462 = vmatpush.msra.mxu0 %v1695
    %2463 = vmatpush.msra.mxu0 %v1691
    %2464 = vmatpush.msra.mxu0 %v1687
    %2465 = vmatpush.msra.mxu0 %v1683
    %2466 = vmatpush.msra.mxu0 %v1679
    %2467 = vmatpush.msra.mxu0 %v1675
    %2468 = vmatpush.msra.mxu0 %v1671
    %2469 = vmatpush.msra.mxu0 %v1667
    %2470 = vmatpush.msra.mxu0 %v1663
    %2471 = vmatpush.msra.mxu0 %v1659
    %2472 = vmatpush.msra.mxu0 %v1655
    %2473 = vmatpush.msra.mxu0 %v1651
    %2474 = vmatpush.msra.mxu0 %v1647
    %2475 = vmatmul.f32.gmra.mxu0 %v2457
    %v2476 = vpop.f32.mrf.mxu0
    %v2477 = vadd.f32 0.0, %v2476
    %2478 = vdwg.mxu0
    %2479 = vmatpush.msra.mxu0 %v1708
    %2480 = vmatpush.msra.mxu0 %v1704
    %2481 = vmatpush.msra.mxu0 %v1700
    %2482 = vmatpush.msra.mxu0 %v1696
    %2483 = vmatpush.msra.mxu0 %v1692
    %2484 = vmatpush.msra.mxu0 %v1688
    %2485 = vmatpush.msra.mxu0 %v1684
    %2486 = vmatpush.msra.mxu0 %v1680
    %2487 = vmatpush.msra.mxu0 %v1676
    %2488 = vmatpush.msra.mxu0 %v1672
    %2489 = vmatpush.msra.mxu0 %v1668
    %2490 = vmatpush.msra.mxu0 %v1664
    %2491 = vmatpush.msra.mxu0 %v1660
    %2492 = vmatpush.msra.mxu0 %v1656
    %2493 = vmatpush.msra.mxu0 %v1652
    %2494 = vmatpush.msra.mxu0 %v1648
    %2495 = vmatmul.f32.gmra.mxu0 %v2457
    %v2496 = vpop.f32.mrf.mxu0
    %v2497 = vadd.f32 0.0, %v2496
    %2498 = vdwg.mxu0
    %2499 = vmatpush.msra.mxu0 %v1709
    %2500 = vmatpush.msra.mxu0 %v1705
    %2501 = vmatpush.msra.mxu0 %v1701
    %2502 = vmatpush.msra.mxu0 %v1697
    %2503 = vmatpush.msra.mxu0 %v1693
    %2504 = vmatpush.msra.mxu0 %v1689
    %2505 = vmatpush.msra.mxu0 %v1685
    %2506 = vmatpush.msra.mxu0 %v1681
    %2507 = vmatpush.msra.mxu0 %v1677
    %2508 = vmatpush.msra.mxu0 %v1673
    %2509 = vmatpush.msra.mxu0 %v1669
    %2510 = vmatpush.msra.mxu0 %v1665
    %2511 = vmatpush.msra.mxu0 %v1661
    %2512 = vmatpush.msra.mxu0 %v1657
    %2513 = vmatpush.msra.mxu0 %v1653
    %2514 = vmatpush.msra.mxu0 %v1649
    %2515 = vmatmul.f32.gmra.mxu0 %v2457
    %v2516 = vpop.f32.mrf.mxu0
    %v2517 = vadd.f32 0.0, %v2516
    %2518 = vdwg.mxu0
    %2519 = vmatpush.msra.mxu0 %v1710
    %2520 = vmatpush.msra.mxu0 %v1706
    %2521 = vmatpush.msra.mxu0 %v1702
    %2522 = vmatpush.msra.mxu0 %v1698
    %2523 = vmatpush.msra.mxu0 %v1694
    %2524 = vmatpush.msra.mxu0 %v1690
    %2525 = vmatpush.msra.mxu0 %v1686
    %2526 = vmatpush.msra.mxu0 %v1682
    %2527 = vmatpush.msra.mxu0 %v1678
    %2528 = vmatpush.msra.mxu0 %v1674
    %2529 = vmatpush.msra.mxu0 %v1670
    %2530 = vmatpush.msra.mxu0 %v1666
    %2531 = vmatpush.msra.mxu0 %v1662
    %2532 = vmatpush.msra.mxu0 %v1658
    %2533 = vmatpush.msra.mxu0 %v1654
    %2534 = vmatpush.msra.mxu0 %v1650
    %2535 = vmatmul.f32.gmra.mxu0 %v2457
    %v2536 = vpop.f32.mrf.mxu0
    %v2537 = vadd.f32 0.0, %v2536
    %2538 = vdwg.mxu0
    %v2539 = vadd.f32 %v1742, %v2477
    %v2540 = vadd.f32 %v1765, %v2497
    %v2541 = vadd.f32 %v1788, %v2517
    %v2542 = vadd.f32 %v1811, %v2537
    %v2543 = vxor.u32 %v2539, 2147483648
    %v2544 = vmul.f32 %v2543, 1.442695
    %v2545 = vpow.pop %v2544
    %v2546 = vadd.f32 %v2545, 1.0
    %v2547 = vrcp.pop %v2546
    %v2548 = vmul.f32 %v2546, %v2547
    %v2549 = vsub.f32 1.0, %v2548
    %v2550 = vmul.f32 %v2547, %v2549
    %v2551 = vadd.f32 %v2547, %v2550
    %vm2552 = vweird.f32 %v2546
    %vm2553 = vweird.f32 %v2547
    %vm2554 = vmor %vm2552, %vm2553
    %v2555 = vsel %vm2554, %v2547, %v2551
    %v2556 = vand.u32 2147483647, %v2546
    %vm2557 = vcmp.eq.f32.partialorder %v2556, 8.507059e+37
    %v2558 = vand.u32 %v2546, 2147483648
    %v2559 = vor.u32 1.1754944e-38, %v2558
    %v2560 = vsel %vm2557, %v2559, %v2555
    %v2561 = vmul.f32 1.0, %v2560
    %v2562 = vxor.u32 %v2540, 2147483648
    %v2563 = vmul.f32 %v2562, 1.442695
    %v2564 = vpow.pop %v2563
    %v2565 = vadd.f32 %v2564, 1.0
    %v2566 = vrcp.pop %v2565
    %v2567 = vmul.f32 %v2565, %v2566
    %v2568 = vsub.f32 1.0, %v2567
    %v2569 = vmul.f32 %v2566, %v2568
    %v2570 = vadd.f32 %v2566, %v2569
    %vm2571 = vweird.f32 %v2565
    %vm2572 = vweird.f32 %v2566
    %vm2573 = vmor %vm2571, %vm2572
    %v2574 = vsel %vm2573, %v2566, %v2570
    %v2575 = vand.u32 2147483647, %v2565
    %vm2576 = vcmp.eq.f32.partialorder %v2575, 8.507059e+37
    %v2577 = vand.u32 %v2565, 2147483648
    %v2578 = vor.u32 1.1754944e-38, %v2577
    %v2579 = vsel %vm2576, %v2578, %v2574
    %v2580 = vmul.f32 1.0, %v2579
    %v2581 = vtanh.pop %v2541
    %v2582 = vxor.u32 %v2542, 2147483648
    %v2583 = vmul.f32 %v2582, 1.442695
    %v2584 = vpow.pop %v2583
    %v2585 = vadd.f32 %v2584, 1.0
    %v2586 = vrcp.pop %v2585
    %v2587 = vmul.f32 %v2585, %v2586
    %v2588 = vsub.f32 1.0, %v2587
    %v2589 = vmul.f32 %v2586, %v2588
    %v2590 = vadd.f32 %v2586, %v2589
    %vm2591 = vweird.f32 %v2585
    %vm2592 = vweird.f32 %v2586
    %vm2593 = vmor %vm2591, %vm2592
    %v2594 = vsel %vm2593, %v2586, %v2590
    %v2595 = vand.u32 2147483647, %v2585
    %vm2596 = vcmp.eq.f32.partialorder %v2595, 8.507059e+37
    %v2597 = vand.u32 %v2585, 2147483648
    %v2598 = vor.u32 1.1754944e-38, %v2597
    %v2599 = vsel %vm2596, %v2598, %v2594
    %v2600 = vmul.f32 1.0, %v2599
    %v2602 = vrot.slane %v2452, 6
    %v2604 = vmul.f32 %v2580, %v2602
    %v2605 = vmul.f32 %v2561, %v2581
    %v2606 = vadd.f32 %v2604, %v2605
    %v2607 = vtanh.pop %v2606
    %v2608 = vmul.f32 %v2600, %v2607
    %2609 = vst [vmem:[#allocation2 + $0x8] sm:$0x3] %v2608
    %2610 = vmatpush.msra.mxu0 %v1707
    %2611 = vmatpush.msra.mxu0 %v1703
    %2612 = vmatpush.msra.mxu0 %v1699
    %2613 = vmatpush.msra.mxu0 %v1695
    %2614 = vmatpush.msra.mxu0 %v1691
    %2615 = vmatpush.msra.mxu0 %v1687
    %2616 = vmatpush.msra.mxu0 %v1683
    %2617 = vmatpush.msra.mxu0 %v1679
    %2618 = vmatpush.msra.mxu0 %v1675
    %2619 = vmatpush.msra.mxu0 %v1671
    %2620 = vmatpush.msra.mxu0 %v1667
    %2621 = vmatpush.msra.mxu0 %v1663
    %2622 = vmatpush.msra.mxu0 %v1659
    %2623 = vmatpush.msra.mxu0 %v1655
    %2624 = vmatpush.msra.mxu0 %v1651
    %2625 = vmatpush.msra.mxu0 %v1647
    %2626 = vmatmul.f32.gmra.mxu0 %v2608
    %v2627 = vpop.f32.mrf.mxu0
    %v2628 = vadd.f32 0.0, %v2627
    %2629 = vdwg.mxu0
    %2630 = vmatpush.msra.mxu0 %v1708
    %2631 = vmatpush.msra.mxu0 %v1704
    %2632 = vmatpush.msra.mxu0 %v1700
    %2633 = vmatpush.msra.mxu0 %v1696
    %2634 = vmatpush.msra.mxu0 %v1692
    %2635 = vmatpush.msra.mxu0 %v1688
    %2636 = vmatpush.msra.mxu0 %v1684
    %2637 = vmatpush.msra.mxu0 %v1680
    %2638 = vmatpush.msra.mxu0 %v1676
    %2639 = vmatpush.msra.mxu0 %v1672
    %2640 = vmatpush.msra.mxu0 %v1668
    %2641 = vmatpush.msra.mxu0 %v1664
    %2642 = vmatpush.msra.mxu0 %v1660
    %2643 = vmatpush.msra.mxu0 %v1656
    %2644 = vmatpush.msra.mxu0 %v1652
    %2645 = vmatpush.msra.mxu0 %v1648
    %2646 = vmatmul.f32.gmra.mxu0 %v2608
    %v2647 = vpop.f32.mrf.mxu0
    %v2648 = vadd.f32 0.0, %v2647
    %2649 = vdwg.mxu0
    %2650 = vmatpush.msra.mxu0 %v1709
    %2651 = vmatpush.msra.mxu0 %v1705
    %2652 = vmatpush.msra.mxu0 %v1701
    %2653 = vmatpush.msra.mxu0 %v1697
    %2654 = vmatpush.msra.mxu0 %v1693
    %2655 = vmatpush.msra.mxu0 %v1689
    %2656 = vmatpush.msra.mxu0 %v1685
    %2657 = vmatpush.msra.mxu0 %v1681
    %2658 = vmatpush.msra.mxu0 %v1677
    %2659 = vmatpush.msra.mxu0 %v1673
    %2660 = vmatpush.msra.mxu0 %v1669
    %2661 = vmatpush.msra.mxu0 %v1665
    %2662 = vmatpush.msra.mxu0 %v1661
    %2663 = vmatpush.msra.mxu0 %v1657
    %2664 = vmatpush.msra.mxu0 %v1653
    %2665 = vmatpush.msra.mxu0 %v1649
    %2666 = vmatmul.f32.gmra.mxu0 %v2608
    %v2667 = vpop.f32.mrf.mxu0
    %v2668 = vadd.f32 0.0, %v2667
    %2669 = vdwg.mxu0
    %2670 = vmatpush.msra.mxu0 %v1710
    %2671 = vmatpush.msra.mxu0 %v1706
    %2672 = vmatpush.msra.mxu0 %v1702
    %2673 = vmatpush.msra.mxu0 %v1698
    %2674 = vmatpush.msra.mxu0 %v1694
    %2675 = vmatpush.msra.mxu0 %v1690
    %2676 = vmatpush.msra.mxu0 %v1686
    %2677 = vmatpush.msra.mxu0 %v1682
    %2678 = vmatpush.msra.mxu0 %v1678
    %2679 = vmatpush.msra.mxu0 %v1674
    %2680 = vmatpush.msra.mxu0 %v1670
    %2681 = vmatpush.msra.mxu0 %v1666
    %2682 = vmatpush.msra.mxu0 %v1662
    %2683 = vmatpush.msra.mxu0 %v1658
    %2684 = vmatpush.msra.mxu0 %v1654
    %2685 = vmatpush.msra.mxu0 %v1650
    %2686 = vmatmul.f32.gmra.mxu0 %v2608
    %v2687 = vpop.f32.mrf.mxu0
    %v2688 = vadd.f32 0.0, %v2687
    %2689 = vdwg.mxu0
    %v2694 = vrot.slane %v2628, 6
    %v2695 = vrot.slane %v2648, 6
    %v2696 = vrot.slane %v2668, 6
    %v2697 = vrot.slane %v2688, 6
    %v2702 = vadd.f32 %v1742, %v2694
    %v2703 = vadd.f32 %v1765, %v2695
    %v2704 = vadd.f32 %v1788, %v2696
    %v2705 = vadd.f32 %v1811, %v2697
    %v2706 = vxor.u32 %v2702, 2147483648
    %v2707 = vmul.f32 %v2706, 1.442695
    %v2708 = vpow.pop %v2707
    %v2709 = vadd.f32 %v2708, 1.0
    %v2710 = vrcp.pop %v2709
    %v2711 = vmul.f32 %v2709, %v2710
    %v2712 = vsub.f32 1.0, %v2711
    %v2713 = vmul.f32 %v2710, %v2712
    %v2714 = vadd.f32 %v2710, %v2713
    %vm2715 = vweird.f32 %v2709
    %vm2716 = vweird.f32 %v2710
    %vm2717 = vmor %vm2715, %vm2716
    %v2718 = vsel %vm2717, %v2710, %v2714
    %v2719 = vand.u32 2147483647, %v2709
    %vm2720 = vcmp.eq.f32.partialorder %v2719, 8.507059e+37
    %v2721 = vand.u32 %v2709, 2147483648
    %v2722 = vor.u32 1.1754944e-38, %v2721
    %v2723 = vsel %vm2720, %v2722, %v2718
    %v2724 = vmul.f32 1.0, %v2723
    %v2725 = vxor.u32 %v2703, 2147483648
    %v2726 = vmul.f32 %v2725, 1.442695
    %v2727 = vpow.pop %v2726
    %v2728 = vadd.f32 %v2727, 1.0
    %v2729 = vrcp.pop %v2728
    %v2730 = vmul.f32 %v2728, %v2729
    %v2731 = vsub.f32 1.0, %v2730
    %v2732 = vmul.f32 %v2729, %v2731
    %v2733 = vadd.f32 %v2729, %v2732
    %vm2734 = vweird.f32 %v2728
    %vm2735 = vweird.f32 %v2729
    %vm2736 = vmor %vm2734, %vm2735
    %v2737 = vsel %vm2736, %v2729, %v2733
    %v2738 = vand.u32 2147483647, %v2728
    %vm2739 = vcmp.eq.f32.partialorder %v2738, 8.507059e+37
    %v2740 = vand.u32 %v2728, 2147483648
    %v2741 = vor.u32 1.1754944e-38, %v2740
    %v2742 = vsel %vm2739, %v2741, %v2737
    %v2743 = vmul.f32 1.0, %v2742
    %v2744 = vtanh.pop %v2704
    %v2745 = vxor.u32 %v2705, 2147483648
    %v2746 = vmul.f32 %v2745, 1.442695
    %v2747 = vpow.pop %v2746
    %v2748 = vadd.f32 %v2747, 1.0
    %v2749 = vrcp.pop %v2748
    %v2750 = vmul.f32 %v2748, %v2749
    %v2751 = vsub.f32 1.0, %v2750
    %v2752 = vmul.f32 %v2749, %v2751
    %v2753 = vadd.f32 %v2749, %v2752
    %vm2754 = vweird.f32 %v2748
    %vm2755 = vweird.f32 %v2749
    %vm2756 = vmor %vm2754, %vm2755
    %v2757 = vsel %vm2756, %v2749, %v2753
    %v2758 = vand.u32 2147483647, %v2748
    %vm2759 = vcmp.eq.f32.partialorder %v2758, 8.507059e+37
    %v2760 = vand.u32 %v2748, 2147483648
    %v2761 = vor.u32 1.1754944e-38, %v2760
    %v2762 = vsel %vm2759, %v2761, %v2757
    %v2763 = vmul.f32 1.0, %v2762
    %v2765 = vrot.slane %v2606, 6
    %v2767 = vmul.f32 %v2743, %v2765
    %v2768 = vmul.f32 %v2724, %v2744
    %v2769 = vadd.f32 %v2767, %v2768
    %v2770 = vtanh.pop %v2769
    %v2771 = vmul.f32 %v2763, %v2770
    %2772 = vst [vmem:[#allocation2 + $0x8] sm:$0xc] %v2771
    %v2774 = vrot.slane %v2771, 2
    %2776 = vmatpush.msra.mxu0 %v1707
    %2777 = vmatpush.msra.mxu0 %v1703
    %2778 = vmatpush.msra.mxu0 %v1699
    %2779 = vmatpush.msra.mxu0 %v1695
    %2780 = vmatpush.msra.mxu0 %v1691
    %2781 = vmatpush.msra.mxu0 %v1687
    %2782 = vmatpush.msra.mxu0 %v1683
    %2783 = vmatpush.msra.mxu0 %v1679
    %2784 = vmatpush.msra.mxu0 %v1675
    %2785 = vmatpush.msra.mxu0 %v1671
    %2786 = vmatpush.msra.mxu0 %v1667
    %2787 = vmatpush.msra.mxu0 %v1663
    %2788 = vmatpush.msra.mxu0 %v1659
    %2789 = vmatpush.msra.mxu0 %v1655
    %2790 = vmatpush.msra.mxu0 %v1651
    %2791 = vmatpush.msra.mxu0 %v1647
    %2792 = vmatmul.f32.gmra.mxu0 %v2774
    %v2793 = vpop.f32.mrf.mxu0
    %v2794 = vadd.f32 0.0, %v2793
    %2795 = vdwg.mxu0
    %2796 = vmatpush.msra.mxu0 %v1708
    %2797 = vmatpush.msra.mxu0 %v1704
    %2798 = vmatpush.msra.mxu0 %v1700
    %2799 = vmatpush.msra.mxu0 %v1696
    %2800 = vmatpush.msra.mxu0 %v1692
    %2801 = vmatpush.msra.mxu0 %v1688
    %2802 = vmatpush.msra.mxu0 %v1684
    %2803 = vmatpush.msra.mxu0 %v1680
    %2804 = vmatpush.msra.mxu0 %v1676
    %2805 = vmatpush.msra.mxu0 %v1672
    %2806 = vmatpush.msra.mxu0 %v1668
    %2807 = vmatpush.msra.mxu0 %v1664
    %2808 = vmatpush.msra.mxu0 %v1660
    %2809 = vmatpush.msra.mxu0 %v1656
    %2810 = vmatpush.msra.mxu0 %v1652
    %2811 = vmatpush.msra.mxu0 %v1648
    %2812 = vmatmul.f32.gmra.mxu0 %v2774
    %v2813 = vpop.f32.mrf.mxu0
    %v2814 = vadd.f32 0.0, %v2813
    %2815 = vdwg.mxu0
    %2816 = vmatpush.msra.mxu0 %v1709
    %2817 = vmatpush.msra.mxu0 %v1705
    %2818 = vmatpush.msra.mxu0 %v1701
    %2819 = vmatpush.msra.mxu0 %v1697
    %2820 = vmatpush.msra.mxu0 %v1693
    %2821 = vmatpush.msra.mxu0 %v1689
    %2822 = vmatpush.msra.mxu0 %v1685
    %2823 = vmatpush.msra.mxu0 %v1681
    %2824 = vmatpush.msra.mxu0 %v1677
    %2825 = vmatpush.msra.mxu0 %v1673
    %2826 = vmatpush.msra.mxu0 %v1669
    %2827 = vmatpush.msra.mxu0 %v1665
    %2828 = vmatpush.msra.mxu0 %v1661
    %2829 = vmatpush.msra.mxu0 %v1657
    %2830 = vmatpush.msra.mxu0 %v1653
    %2831 = vmatpush.msra.mxu0 %v1649
    %2832 = vmatmul.f32.gmra.mxu0 %v2774
    %v2833 = vpop.f32.mrf.mxu0
    %v2834 = vadd.f32 0.0, %v2833
    %2835 = vdwg.mxu0
    %2836 = vmatpush.msra.mxu0 %v1710
    %2837 = vmatpush.msra.mxu0 %v1706
    %2838 = vmatpush.msra.mxu0 %v1702
    %2839 = vmatpush.msra.mxu0 %v1698
    %2840 = vmatpush.msra.mxu0 %v1694
    %2841 = vmatpush.msra.mxu0 %v1690
    %2842 = vmatpush.msra.mxu0 %v1686
    %2843 = vmatpush.msra.mxu0 %v1682
    %2844 = vmatpush.msra.mxu0 %v1678
    %2845 = vmatpush.msra.mxu0 %v1674
    %2846 = vmatpush.msra.mxu0 %v1670
    %2847 = vmatpush.msra.mxu0 %v1666
    %2848 = vmatpush.msra.mxu0 %v1662
    %2849 = vmatpush.msra.mxu0 %v1658
    %2850 = vmatpush.msra.mxu0 %v1654
    %2851 = vmatpush.msra.mxu0 %v1650
    %2852 = vmatmul.f32.gmra.mxu0 %v2774
    %v2853 = vpop.f32.mrf.mxu0
    %v2854 = vadd.f32 0.0, %v2853
    %2855 = vdwg.mxu0
    %v2860 = vrot.slane %v2794, 4
    %v2861 = vrot.slane %v2814, 4
    %v2862 = vrot.slane %v2834, 4
    %v2863 = vrot.slane %v2854, 4
    %v2868 = vadd.f32 %v1742, %v2860
    %v2869 = vadd.f32 %v1765, %v2861
    %v2870 = vadd.f32 %v1788, %v2862
    %v2871 = vadd.f32 %v1811, %v2863
    %v2872 = vxor.u32 %v2868, 2147483648
    %v2873 = vmul.f32 %v2872, 1.442695
    %v2874 = vpow.pop %v2873
    %v2875 = vadd.f32 %v2874, 1.0
    %v2876 = vrcp.pop %v2875
    %v2877 = vmul.f32 %v2875, %v2876
    %v2878 = vsub.f32 1.0, %v2877
    %v2879 = vmul.f32 %v2876, %v2878
    %v2880 = vadd.f32 %v2876, %v2879
    %vm2881 = vweird.f32 %v2875
    %vm2882 = vweird.f32 %v2876
    %vm2883 = vmor %vm2881, %vm2882
    %v2884 = vsel %vm2883, %v2876, %v2880
    %v2885 = vand.u32 2147483647, %v2875
    %vm2886 = vcmp.eq.f32.partialorder %v2885, 8.507059e+37
    %v2887 = vand.u32 %v2875, 2147483648
    %v2888 = vor.u32 1.1754944e-38, %v2887
    %v2889 = vsel %vm2886, %v2888, %v2884
    %v2890 = vmul.f32 1.0, %v2889
    %v2891 = vxor.u32 %v2869, 2147483648
    %v2892 = vmul.f32 %v2891, 1.442695
    %v2893 = vpow.pop %v2892
    %v2894 = vadd.f32 %v2893, 1.0
    %v2895 = vrcp.pop %v2894
    %v2896 = vmul.f32 %v2894, %v2895
    %v2897 = vsub.f32 1.0, %v2896
    %v2898 = vmul.f32 %v2895, %v2897
    %v2899 = vadd.f32 %v2895, %v2898
    %vm2900 = vweird.f32 %v2894
    %vm2901 = vweird.f32 %v2895
    %vm2902 = vmor %vm2900, %vm2901
    %v2903 = vsel %vm2902, %v2895, %v2899
    %v2904 = vand.u32 2147483647, %v2894
    %vm2905 = vcmp.eq.f32.partialorder %v2904, 8.507059e+37
    %v2906 = vand.u32 %v2894, 2147483648
    %v2907 = vor.u32 1.1754944e-38, %v2906
    %v2908 = vsel %vm2905, %v2907, %v2903
    %v2909 = vmul.f32 1.0, %v2908
    %v2910 = vtanh.pop %v2870
    %v2911 = vxor.u32 %v2871, 2147483648
    %v2912 = vmul.f32 %v2911, 1.442695
    %v2913 = vpow.pop %v2912
    %v2914 = vadd.f32 %v2913, 1.0
    %v2915 = vrcp.pop %v2914
    %v2916 = vmul.f32 %v2914, %v2915
    %v2917 = vsub.f32 1.0, %v2916
    %v2918 = vmul.f32 %v2915, %v2917
    %v2919 = vadd.f32 %v2915, %v2918
    %vm2920 = vweird.f32 %v2914
    %vm2921 = vweird.f32 %v2915
    %vm2922 = vmor %vm2920, %vm2921
    %v2923 = vsel %vm2922, %v2915, %v2919
    %v2924 = vand.u32 2147483647, %v2914
    %vm2925 = vcmp.eq.f32.partialorder %v2924, 8.507059e+37
    %v2926 = vand.u32 %v2914, 2147483648
    %v2927 = vor.u32 1.1754944e-38, %v2926
    %v2928 = vsel %vm2925, %v2927, %v2923
    %v2929 = vmul.f32 1.0, %v2928
    %v2931 = vrot.slane %v2769, 6
    %v2933 = vmul.f32 %v2909, %v2931
    %v2934 = vmul.f32 %v2890, %v2910
    %v2935 = vadd.f32 %v2933, %v2934
    %v2936 = vtanh.pop %v2935
    %v2937 = vmul.f32 %v2929, %v2936
    %2938 = vst [vmem:[#allocation2 + $0x8] sm:$0x30] %v2937
    %v2940 = vrot.slane %v2937, 4
    %2942 = vmatpush.msra.mxu0 %v1707
    %2943 = vmatpush.msra.mxu0 %v1703
    %2944 = vmatpush.msra.mxu0 %v1699
    %2945 = vmatpush.msra.mxu0 %v1695
    %2946 = vmatpush.msra.mxu0 %v1691
    %2947 = vmatpush.msra.mxu0 %v1687
    %2948 = vmatpush.msra.mxu0 %v1683
    %2949 = vmatpush.msra.mxu0 %v1679
    %2950 = vmatpush.msra.mxu0 %v1675
    %2951 = vmatpush.msra.mxu0 %v1671
    %2952 = vmatpush.msra.mxu0 %v1667
    %2953 = vmatpush.msra.mxu0 %v1663
    %2954 = vmatpush.msra.mxu0 %v1659
    %2955 = vmatpush.msra.mxu0 %v1655
    %2956 = vmatpush.msra.mxu0 %v1651
    %2957 = vmatpush.msra.mxu0 %v1647
    %2958 = vmatmul.f32.gmra.mxu0 %v2940
    %v2959 = vpop.f32.mrf.mxu0
    %v2960 = vadd.f32 0.0, %v2959
    %2961 = vdwg.mxu0
    %2962 = vmatpush.msra.mxu0 %v1708
    %2963 = vmatpush.msra.mxu0 %v1704
    %2964 = vmatpush.msra.mxu0 %v1700
    %2965 = vmatpush.msra.mxu0 %v1696
    %2966 = vmatpush.msra.mxu0 %v1692
    %2967 = vmatpush.msra.mxu0 %v1688
    %2968 = vmatpush.msra.mxu0 %v1684
    %2969 = vmatpush.msra.mxu0 %v1680
    %2970 = vmatpush.msra.mxu0 %v1676
    %2971 = vmatpush.msra.mxu0 %v1672
    %2972 = vmatpush.msra.mxu0 %v1668
    %2973 = vmatpush.msra.mxu0 %v1664
    %2974 = vmatpush.msra.mxu0 %v1660
    %2975 = vmatpush.msra.mxu0 %v1656
    %2976 = vmatpush.msra.mxu0 %v1652
    %2977 = vmatpush.msra.mxu0 %v1648
    %2978 = vmatmul.f32.gmra.mxu0 %v2940
    %v2979 = vpop.f32.mrf.mxu0
    %v2980 = vadd.f32 0.0, %v2979
    %2981 = vdwg.mxu0
    %2982 = vmatpush.msra.mxu0 %v1709
    %2983 = vmatpush.msra.mxu0 %v1705
    %2984 = vmatpush.msra.mxu0 %v1701
    %2985 = vmatpush.msra.mxu0 %v1697
    %2986 = vmatpush.msra.mxu0 %v1693
    %2987 = vmatpush.msra.mxu0 %v1689
    %2988 = vmatpush.msra.mxu0 %v1685
    %2989 = vmatpush.msra.mxu0 %v1681
    %2990 = vmatpush.msra.mxu0 %v1677
    %2991 = vmatpush.msra.mxu0 %v1673
    %2992 = vmatpush.msra.mxu0 %v1669
    %2993 = vmatpush.msra.mxu0 %v1665
    %2994 = vmatpush.msra.mxu0 %v1661
    %2995 = vmatpush.msra.mxu0 %v1657
    %2996 = vmatpush.msra.mxu0 %v1653
    %2997 = vmatpush.msra.mxu0 %v1649
    %2998 = vmatmul.f32.gmra.mxu0 %v2940
    %v2999 = vpop.f32.mrf.mxu0
    %v3000 = vadd.f32 0.0, %v2999
    %3001 = vdwg.mxu0
    %3002 = vmatpush.msra.mxu0 %v1710
    %3003 = vmatpush.msra.mxu0 %v1706
    %3004 = vmatpush.msra.mxu0 %v1702
    %3005 = vmatpush.msra.mxu0 %v1698
    %3006 = vmatpush.msra.mxu0 %v1694
    %3007 = vmatpush.msra.mxu0 %v1690
    %3008 = vmatpush.msra.mxu0 %v1686
    %3009 = vmatpush.msra.mxu0 %v1682
    %3010 = vmatpush.msra.mxu0 %v1678
    %3011 = vmatpush.msra.mxu0 %v1674
    %3012 = vmatpush.msra.mxu0 %v1670
    %3013 = vmatpush.msra.mxu0 %v1666
    %3014 = vmatpush.msra.mxu0 %v1662
    %3015 = vmatpush.msra.mxu0 %v1658
    %3016 = vmatpush.msra.mxu0 %v1654
    %3017 = vmatpush.msra.mxu0 %v1650
    %3018 = vmatmul.f32.gmra.mxu0 %v2940
    %v3019 = vpop.f32.mrf.mxu0
    %v3020 = vadd.f32 0.0, %v3019
    %3021 = vdwg.mxu0
    %v3026 = vrot.slane %v2960, 2
    %v3027 = vrot.slane %v2980, 2
    %v3028 = vrot.slane %v3000, 2
    %v3029 = vrot.slane %v3020, 2
    %v3034 = vadd.f32 %v1742, %v3026
    %v3035 = vadd.f32 %v1765, %v3027
    %v3036 = vadd.f32 %v1788, %v3028
    %v3037 = vadd.f32 %v1811, %v3029
    %v3038 = vxor.u32 %v3034, 2147483648
    %v3039 = vmul.f32 %v3038, 1.442695
    %v3040 = vpow.pop %v3039
    %v3041 = vadd.f32 %v3040, 1.0
    %v3042 = vrcp.pop %v3041
    %v3043 = vmul.f32 %v3041, %v3042
    %v3044 = vsub.f32 1.0, %v3043
    %v3045 = vmul.f32 %v3042, %v3044
    %v3046 = vadd.f32 %v3042, %v3045
    %vm3047 = vweird.f32 %v3041
    %vm3048 = vweird.f32 %v3042
    %vm3049 = vmor %vm3047, %vm3048
    %v3050 = vsel %vm3049, %v3042, %v3046
    %v3051 = vand.u32 2147483647, %v3041
    %vm3052 = vcmp.eq.f32.partialorder %v3051, 8.507059e+37
    %v3053 = vand.u32 %v3041, 2147483648
    %v3054 = vor.u32 1.1754944e-38, %v3053
    %v3055 = vsel %vm3052, %v3054, %v3050
    %v3056 = vmul.f32 1.0, %v3055
    %v3057 = vxor.u32 %v3035, 2147483648
    %v3058 = vmul.f32 %v3057, 1.442695
    %v3059 = vpow.pop %v3058
    %v3060 = vadd.f32 %v3059, 1.0
    %v3061 = vrcp.pop %v3060
    %v3062 = vmul.f32 %v3060, %v3061
    %v3063 = vsub.f32 1.0, %v3062
    %v3064 = vmul.f32 %v3061, %v3063
    %v3065 = vadd.f32 %v3061, %v3064
    %vm3066 = vweird.f32 %v3060
    %vm3067 = vweird.f32 %v3061
    %vm3068 = vmor %vm3066, %vm3067
    %v3069 = vsel %vm3068, %v3061, %v3065
    %v3070 = vand.u32 2147483647, %v3060
    %vm3071 = vcmp.eq.f32.partialorder %v3070, 8.507059e+37
    %v3072 = vand.u32 %v3060, 2147483648
    %v3073 = vor.u32 1.1754944e-38, %v3072
    %v3074 = vsel %vm3071, %v3073, %v3069
    %v3075 = vmul.f32 1.0, %v3074
    %v3076 = vtanh.pop %v3036
    %v3077 = vxor.u32 %v3037, 2147483648
    %v3078 = vmul.f32 %v3077, 1.442695
    %v3079 = vpow.pop %v3078
    %v3080 = vadd.f32 %v3079, 1.0
    %v3081 = vrcp.pop %v3080
    %v3082 = vmul.f32 %v3080, %v3081
    %v3083 = vsub.f32 1.0, %v3082
    %v3084 = vmul.f32 %v3081, %v3083
    %v3085 = vadd.f32 %v3081, %v3084
    %vm3086 = vweird.f32 %v3080
    %vm3087 = vweird.f32 %v3081
    %vm3088 = vmor %vm3086, %vm3087
    %v3089 = vsel %vm3088, %v3081, %v3085
    %v3090 = vand.u32 2147483647, %v3080
    %vm3091 = vcmp.eq.f32.partialorder %v3090, 8.507059e+37
    %v3092 = vand.u32 %v3080, 2147483648
    %v3093 = vor.u32 1.1754944e-38, %v3092
    %v3094 = vsel %vm3091, %v3093, %v3089
    %v3095 = vmul.f32 1.0, %v3094
    %v3097 = vrot.slane %v2935, 6
    %v3099 = vmul.f32 %v3075, %v3097
    %v3100 = vmul.f32 %v3056, %v3076
    %v3101 = vadd.f32 %v3099, %v3100
    %v3102 = vtanh.pop %v3101
    %v3103 = vmul.f32 %v3095, %v3102
    %3104 = vst [vmem:[#allocation2 + $0x8] sm:$0xc0] %v3103
    %v3105 = vld [vmem:[#allocation2] sm:$0xff]
    %v3106 = vld [vmem:[#allocation2 + $0x8] sm:$0xff]
    %v3107 = vld [vmem:[%s7] sm:$0xff]
    %v3108 = vld [vmem:[%s7 + $0x8] sm:$0xff]
    %v3109 = vld [vmem:[%s7 + $0x10] sm:$0xff]
    %v3110 = vld [vmem:[%s7 + $0x18] sm:$0xff]
    %v3111 = vld [vmem:[%s7 + $0x20] sm:$0xff]
    %v3112 = vld [vmem:[%s7 + $0x28] sm:$0xff]
    %v3113 = vld [vmem:[%s7 + $0x30] sm:$0xff]
    %v3114 = vld [vmem:[%s7 + $0x38] sm:$0xff]
    %v3115 = vld [vmem:[%s7 + $0x40] sm:$0xff]
    %v3116 = vld [vmem:[%s7 + $0x48] sm:$0xff]
    %v3117 = vld [vmem:[%s7 + $0x50] sm:$0xff]
    %v3118 = vld [vmem:[%s7 + $0x58] sm:$0xff]
    %v3119 = vld [vmem:[%s7 + $0x60] sm:$0xff]
    %v3120 = vld [vmem:[%s7 + $0x68] sm:$0xff]
    %v3121 = vld [vmem:[%s7 + $0x70] sm:$0xff]
    %v3122 = vld [vmem:[%s7 + $0x78] sm:$0xff]
    %v3123 = vld [vmem:[%s8] sm:$0x1]
    %v3125 = vperm.slane %v3123, 0
    %3127 = vmatpush.msra.mxu0 %v3122
    %3128 = vmatpush.msra.mxu0 %v3121
    %3129 = vmatpush.msra.mxu0 %v3120
    %3130 = vmatpush.msra.mxu0 %v3119
    %3131 = vmatpush.msra.mxu0 %v3118
    %3132 = vmatpush.msra.mxu0 %v3117
    %3133 = vmatpush.msra.mxu0 %v3116
    %3134 = vmatpush.msra.mxu0 %v3115
    %3135 = vmatpush.msra.mxu0 %v3114
    %3136 = vmatpush.msra.mxu0 %v3113
    %3137 = vmatpush.msra.mxu0 %v3112
    %3138 = vmatpush.msra.mxu0 %v3111
    %3139 = vmatpush.msra.mxu0 %v3110
    %3140 = vmatpush.msra.mxu0 %v3109
    %3141 = vmatpush.msra.mxu0 %v3108
    %3142 = vmatpush.msra.mxu0 %v3107
    %3143 = vmatmul.f32.gmra.mxu0 %v3105
    %v3144 = vpop.f32.mrf.mxu0
    %v3145 = vadd.f32 %v3125, %v3144
    %3146 = vmatmul.f32.gmra.mxu0 %v3106
    %v3147 = vpop.f32.mrf.mxu0
    %v3148 = vadd.f32 %v3125, %v3147
    %3149 = vdwg.mxu0
    %v3150 = vld [vmem:[%s9] sm:$0xff]
    %v3151 = vld [vmem:[%s9 + $0x8] sm:$0xff]
    %v3152 = vld [vmem:[%s9 + $0x10] sm:$0xff]
    %v3153 = vld [vmem:[%s9 + $0x18] sm:$0xff]
    %v3154 = vld [vmem:[%s9 + $0x20] sm:$0xff]
    %v3155 = vld [vmem:[%s9 + $0x28] sm:$0xff]
    %v3156 = vld [vmem:[%s9 + $0x30] sm:$0xff]
    %v3157 = vld [vmem:[%s9 + $0x38] sm:$0xff]
    %v3158 = vld [vmem:[%s9 + $0x40] sm:$0xff]
    %v3159 = vld [vmem:[%s9 + $0x48] sm:$0xff]
    %v3160 = vld [vmem:[%s9 + $0x50] sm:$0xf]
    %v3161 = vld [vmem:[%s10] sm:$0x1]
    %v3163 = vperm.slane %v3161, 0
    %vm3165 = vcmask 687104
    %v3167 = vsel %vm3165, %v3145, 0
    %v3170 = vsel %vm3165, %v3148, 0
    %vm3172 = vcmask 1043456
    %v3174 = vsel %vm3172, %v3160, 0
    %3176 = vmatpush.msra.mxu0 0.0
    %3177 = vmatpush.msra.mxu0 0.0
    %3178 = vmatpush.msra.mxu0 0.0
    %3179 = vmatpush.msra.mxu0 0.0
    %3180 = vmatpush.msra.mxu0 0.0
    %3181 = vmatpush.msra.mxu0 %v3174
    %3182 = vmatpush.msra.mxu0 %v3159
    %3183 = vmatpush.msra.mxu0 %v3158
    %3184 = vmatpush.msra.mxu0 %v3157
    %3185 = vmatpush.msra.mxu0 %v3156
    %3186 = vmatpush.msra.mxu0 %v3155
    %3187 = vmatpush.msra.mxu0 %v3154
    %3188 = vmatpush.msra.mxu0 %v3153
    %3189 = vmatpush.msra.mxu0 %v3152
    %3190 = vmatpush.msra.mxu0 %v3151
    %3191 = vmatpush.msra.mxu0 %v3150
    %3192 = vmatmul.f32.gmra.mxu0 %v3167
    %v3193 = vpop.f32.mrf.mxu0
    %v3194 = vadd.f32 %v3163, %v3193
    %3195 = vmatmul.f32.gmra.mxu0 %v3170
    %v3196 = vpop.f32.mrf.mxu0
    %v3197 = vadd.f32 %v3163, %v3196
    %3198 = vdwg.mxu0
    %3199 = vst [vmem:[%s11] sm:$0xff] %v3194
    %3200 = vst [vmem:[%s11 + $0x8] sm:$0xff] %v3197
    // Predicated region
    $region58: #{hand_lstm_forward.1} parent=1 // pred_check
      _
    $region59: #{hand_lstm_forward.1} parent=1 // pred_check_branch
      %3202 = sbr.rel (0) target = $region61
    $region60: #{hand_lstm_forward.1} parent=1 // pred_region
      _
    $region61: #{hand_lstm_forward.1} parent=1 // pred_fallthru
      _
    // Predicated region
    $region62: #{hand_lstm_forward.1} parent=1 // pred_check
      _
    $region63: #{hand_lstm_forward.1} parent=1 // pred_check_branch
      %3204 = sbr.rel (0) target = $region65
    $region64: #{hand_lstm_forward.1} parent=1 // pred_region
      _
    $region65: #{hand_lstm_forward.1} parent=1 // pred_fallthru
      _
    %3205 = vsyncpa [#allocation4], 1
    %3206 = vsyncpa [#allocation6], 1

</llo_original>
